<compile_context>
chip_gen: v6e
topology: v6e:2x2x1
jax: 0.10.0
libtpu: 0.0.40
codegen_flags: <defaults>
</compile_context>

<pallas_src>
import functools
from itertools import groupby

import numpy as np
import jax
import jax.numpy as jnp
from jax import lax
from jax.experimental import pallas as pl
from jax.experimental.pallas import tpu as pltpu


# ----------------------------------------------------------------------------
# Channel-splitting logic (pure python, same as the PyTorch reference).
# ----------------------------------------------------------------------------
def divide_feature_legacy(in_feature, out_features, min_unit=8):
    assert in_feature % min_unit == 0, (
        f'in_feature ({in_feature}) must be divisible by min_unit ({min_unit})')
    units = in_feature // min_unit
    indices = np.argsort(out_features)
    out_features_sorted = np.array(out_features)[indices]
    out_feat_groups = [(k, indices[list(g)]) for k, g in
                       groupby(range(len(indices)), lambda i: out_features_sorted[i])]
    out_feat_groups.sort(key=lambda x: x[0] * len(x[1]), reverse=True)
    units_feat_ratio = float(units) / sum(out_features)
    remaining_units = units
    out_group_units = []
    for i, out_feat_group in enumerate(out_feat_groups):
        if i < len(out_feat_groups) - 1:
            curr_out_feat_size = out_feat_group[0] * len(out_feat_group[1])
            curr_units = max(curr_out_feat_size * units_feat_ratio, 1)
            curr_units = curr_units // len(out_feat_group[1]) * len(out_feat_group[1])
            out_group_units.append(curr_units)
            remaining_units -= curr_units
        else:
            out_group_units.append(remaining_units)
    divided_in_features = np.zeros(len(out_features), dtype=int)
    for i, out_feat_group in enumerate(out_feat_groups):
        for j in range(len(out_feat_group[1])):
            divided_in_features[out_feat_group[1][j]] = (
                out_group_units[i] // len(out_feat_group[1]) * min_unit)
    return divided_in_features


def _round_up(x, m):
    return ((x + m - 1) // m) * m


def _padded_vmem_bytes(shape, dtype):
    """VMEM footprint of one buffer, including lane(128)/sublane padding."""
    itemsize = jnp.dtype(dtype).itemsize
    pack = max(1, 4 // itemsize)            # sublane packing factor (bf16 -> 2)
    dims = [int(d) for d in shape]
    dims[-1] = _round_up(dims[-1], 128)
    if len(dims) >= 2:
        dims[-2] = _round_up(dims[-2], 8 * pack)
    n = 1
    for d in dims:
        n *= d
    return n * itemsize


def _tpu_vmem_class():
    """'big' = 128 MiB VMEM parts (v4/v5/v6); 'small' = v7x (64 MiB) / unknown."""
    try:
        kind = jax.devices()[0].device_kind.lower()
    except Exception:
        kind = ""
    if any(tag in kind for tag in ("v4", "v5", "v6")):
        return "big"
    return "small"


def _pick_row_tile(h_out, w_out, max_rows):
    """Largest divisor TH of h_out with M = TH*w_out under the SSA-accumulator
    register budget while keeping the output store lane-dense
    (M % 128 == 0, or RT == 1 so the block is the full spatial extent)."""
    best = None
    for th in range(1, h_out + 1):
        if h_out % th:
            continue
        m = th * w_out
        if (h_out // th) > 1 and m % 128:
            continue
        if m <= max_rows and (best is None or m > best[1]):
            best = (th, m)
    if best is None:
        # No legal tile under the register budget: fall back to the smallest
        # legal tile (the SSA accumulator may spill to VMEM; still correct).
        cands = [(th, th * w_out) for th in range(1, h_out + 1)
                 if h_out % th == 0
                 and ((h_out // th) == 1 or (th * w_out) % 128 == 0)]
        best = min(cands, key=lambda p: p[1])
    return best[0]


# ----------------------------------------------------------------------------
# Fused multi-split conv2d Pallas kernel.
#   grid = (N, row_tiles)  with semantics ("parallel", "arbitrary")
#   x_ref : (1, H, W, Cin)           unpadded input block (bf16)
#   w_ref : (KH*KW, Cin, Cout_pad)   block-diagonal fused weight (bf16)
#   b_ref : (1, Cout_pad)            fused bias (f32)
#   out_refs[i] : (1, out_nc_i, TH*W_out)  per-split transposed output tile
#   xp_ref: (Hp, Wp, Cin)            VMEM scratch: zero-padded image
# ----------------------------------------------------------------------------
def _conv2d_multi_kernel(x_ref, w_ref, b_ref, *rest, H, W, W_out, KH, KW,
                         stride, dilation, padding, cin, th,
                         split_offsets, split_sizes):
    n_splits = len(split_sizes)
    out_refs = rest[:n_splits]
    xp_ref = rest[n_splits]
    t = pl.program_id(1)

    # Fill the zero-padded image scratch once per batch element.  This relies
    # on the row-tile axis being "arbitrary" (iterated in order on one core
    # for each "parallel" batch index) — do NOT flip it to "parallel" without
    # reworking this fill.
    @pl.when(t == 0)
    def _fill_padded():
        Wp = W + 2 * padding
        if padding > 0:
            # Zero only the border strips; the interior is overwritten below.
            zrow = jnp.zeros((padding, Wp, cin), xp_ref.dtype)
            xp_ref[pl.ds(0, padding)] = zrow
            xp_ref[pl.ds(H + padding, padding)] = zrow
            zcol = jnp.zeros((H, padding, cin), xp_ref.dtype)
            xp_ref[pl.ds(padding, H), pl.ds(0, padding), :] = zcol
            xp_ref[pl.ds(padding, H), pl.ds(W + padding, padding), :] = zcol
        xp_ref[pl.ds(padding, H), pl.ds(padding, W), :] = x_ref[0]

    def ds(start, size):
        return pl.ds(start, size) if stride == 1 else pl.ds(start, size, stride)

    m = th * W_out
    row0 = t * (th * stride)      # first padded input row used by this tile

    # Implicit im2col: KH*KW shifted (m, Cin) x (Cin, Cout_pad) MXU matmuls,
    # accumulated in SSA registers (no VMEM accumulator round trips; lets
    # Mosaic use the v7x MRB in-place accumulate).
    # NOTE: the (th, W_out, cin) -> (m, cin) reshape is free when W_out is a
    # multiple of the bf16 sublane packing and stride == 1; otherwise it is a
    # VMEM-local relayout (no HBM traffic).
    acc = None
    for kh in range(KH):
        for kw in range(KW):
            piece = xp_ref[ds(row0 + kh * dilation, th),
                           ds(kw * dilation, W_out), :]        # (th, W_out, cin)
            contrib = jnp.dot(piece.reshape(m, cin), w_ref[kh * KW + kw],
                              preferred_element_type=jnp.float32)
            acc = contrib if acc is None else acc + contrib

    acc = acc + b_ref[...]                                     # (m, Cout_pad) f32

    # One XLU transpose per tile so every split is stored with the spatial
    # extent on the lane dimension (lane-dense stores, no Cout padding in HBM,
    # and no per-split slice/transpose pass in the wrapper).
    acc_t = acc.T                                              # (Cout_pad, m)
    for i in range(n_splits):
        off = split_offsets[i]
        sz = split_sizes[i]
        out_refs[i][0] = acc_t[off:off + sz, :].astype(out_refs[i].dtype)


def conv2d_multi_fused(x_nhwc, w3d, bias, split_sizes, *, kernel_size, stride,
                       padding, dilation, out_dtype=jnp.float32):
    """Fused multi-split conv2d.

    x_nhwc : (N, H, W, Cin) bf16
    w3d    : (KH*KW, Cin, Cout_pad) bf16 block-diagonal fused weight
    bias   : (1, Cout_pad) f32 fused bias
    Returns ([per-split (N, out_nc_i, H_out, W_out) arrays], (H_out, W_out)).
    """
    N, H, W, Cin = map(int, x_nhwc.shape)
    KH = KW = int(kernel_size)
    taps, cin_w, Cout_pad = map(int, w3d.shape)
    assert taps == KH * KW and cin_w == Cin
    Hp, Wp = H + 2 * padding, W + 2 * padding
    H_out = (Hp - dilation * (KH - 1) - 1) // stride + 1
    W_out = (Wp - dilation * (KW - 1) - 1) // stride + 1
    assert H_out > 0 and W_out > 0

    split_sizes = tuple(int(s) for s in split_sizes)
    split_offsets = tuple(
        int(o) for o in np.concatenate([[0], np.cumsum(split_sizes)[:-1]]))

    # --- Generation-gated budgets -------------------------------------------
    vmem_class = _tpu_vmem_class()
    vmem_budget = (96 << 20) if vmem_class == "big" else (40 << 20)
    # SSA accumulator register budget: ~32 f32 vregs on v7x/unknown, 2x on the
    # 128-MiB-VMEM parts (any spill is VMEM-local, and larger tiles amortize
    # the ~0.35us/grid-step overhead there).
    acc_elem_budget = 65536 if vmem_class == "big" else 32768
    rows_budget = max(128, acc_elem_budget // Cout_pad)

    TH = _pick_row_tile(H_out, W_out, rows_budget)
    RT = H_out // TH
    M = TH * W_out

    # --- VMEM footprint with real lane/sublane padding ----------------------
    x_dt = x_nhwc.dtype
    est = (2 * _padded_vmem_bytes((1, H, W, Cin), x_dt)             # x, 2 bufs
           + 2 * _padded_vmem_bytes((KH * KW, Cin, Cout_pad), w3d.dtype)
           + 2 * _padded_vmem_bytes((1, Cout_pad), bias.dtype)
           + sum(2 * _padded_vmem_bytes((1, sz, M), out_dtype)
                 for sz in split_sizes)
           + _padded_vmem_bytes((Hp, Wp, Cin), x_dt)                # padded img
           + 3 * M * Cout_pad * 4)                                  # SSA acc/xpose
    if est > vmem_budget:
        # TODO(synk): halo'd row-tiled input DMA bounds input VMEM to
        # O((TH*stride + KH - 1) rows) instead of the whole image.
        raise NotImplementedError(
            f"fused conv VMEM footprint {est / 2**20:.1f} MiB exceeds the "
            f"{vmem_budget / 2**20:.0f} MiB budget for this TPU generation")
    vmem_limit = int(min(vmem_budget, max(16 << 20, est + (4 << 20))))

    Kd = KH * KW * Cin
    flops = int(2 * N * H_out * W_out * Kd * Cout_pad)
    bytes_accessed = int(
        x_nhwc.size * x_nhwc.dtype.itemsize
        + w3d.size * w3d.dtype.itemsize
        + bias.size * bias.dtype.itemsize
        + sum(N * sz * H_out * W_out * jnp.dtype(out_dtype).itemsize
              for sz in split_sizes))

    kern = functools.partial(
        _conv2d_multi_kernel, H=H, W=W, W_out=W_out, KH=KH, KW=KW,
        stride=stride, dilation=dilation, padding=padding, cin=Cin, th=TH,
        split_offsets=split_offsets, split_sizes=split_sizes)

    out_shape = tuple(jax.ShapeDtypeStruct((N, sz, H_out * W_out), out_dtype)
                      for sz in split_sizes)
    out_specs = tuple(pl.BlockSpec((1, sz, M), lambda n, t: (n, 0, t))
                      for sz in split_sizes)

    outs = pl.pallas_call(
        kern,
        out_shape=out_shape,
        grid=(N, RT),
        in_specs=[
            pl.BlockSpec((1, H, W, Cin), lambda n, t: (n, 0, 0, 0)),
            # Grid-invariant operands (never re-DMA'd; TODO(synk): single-buffer
            # them with pipeline_mode=pl.Buffered(1) when universally available).
            pl.BlockSpec((KH * KW, Cin, Cout_pad), lambda n, t: (0, 0, 0)),
            pl.BlockSpec((1, Cout_pad), lambda n, t: (0, 0)),
        ],
        out_specs=out_specs,
        scratch_shapes=[pltpu.VMEM((Hp, Wp, Cin), x_dt)],   # zero-padded image
        compiler_params=pltpu.CompilerParams(
            dimension_semantics=("parallel", "arbitrary"),
            vmem_limit_bytes=vmem_limit),
        cost_estimate=pl.CostEstimate(flops=flops, transcendentals=0,
                                      bytes_accessed=bytes_accessed),
    )(x_nhwc, w3d, bias)

    outs = [o.reshape(N, sz, H_out, W_out) for o, sz in zip(outs, split_sizes)]
    return outs, (H_out, W_out)


# ----------------------------------------------------------------------------
# Conv2dMulti wrapper: parameter setup + block-diagonal weight fusion.
# ----------------------------------------------------------------------------
class Conv2dMultiPallas:
    """JAX/Pallas port of Conv2dMulti: the per-split Conv2d's are fused into a
    single block-diagonal conv kernel; the forward returns a list of NCHW
    arrays (one per entry of out_channels), matching the PyTorch module."""

    def __init__(self, in_channels, out_channels, kernel_size, stride=1,
                 padding=0, dilation=1, groups=1, bias=True,
                 padding_mode='zeros', min_unit=8, key=None):
        assert groups == 1, "only groups=1 implemented"
        assert padding_mode == 'zeros', "only padding_mode='zeros' implemented"
        self.in_channels = in_channels
        self.out_channels = [int(c) for c in out_channels]
        self.kernel_size = kernel_size
        self.stride = stride
        self.padding = padding
        self.dilation = dilation

        self._ranges = [0]
        in_nc_parts = divide_feature_legacy(in_channels, out_channels, min_unit)
        key = jax.random.PRNGKey(0) if key is None else key

        KH = KW = kernel_size
        Cin = in_channels
        Cout_total = int(sum(self.out_channels))
        # Lane-dense fused matmul width; used only inside the kernel, never
        # written back to HBM (outputs are stored per split at exact width).
        Cout_pad = _round_up(Cout_total, 128)

        w3d = np.zeros((KH * KW, Cin, Cout_pad), np.float32)
        bias_full = np.zeros((1, Cout_pad), np.float32)
        self.split_weights_hwio = []   # per-split f32 HWIO (for reference use)
        self.split_biases = []

        coff = 0
        for i, out_nc in enumerate(self.out_channels):
            in_nc = int(in_nc_parts[i])
            r0 = self._ranges[-1]
            self._ranges.append(r0 + in_nc)
            key, kw_, kb_ = jax.random.split(key, 3)
            fan_in = in_nc * KH * KW
            bound = 1.0 / np.sqrt(fan_in)
            w_oihw = jax.random.uniform(kw_, (out_nc, in_nc, KH, KW),
                                        jnp.float32, -bound, bound)
            b = (jax.random.uniform(kb_, (out_nc,), jnp.float32, -bound, bound)
                 if bias else jnp.zeros((out_nc,), jnp.float32))
            w_hwio = jnp.transpose(w_oihw, (2, 3, 1, 0))   # (KH, KW, in, out)
            self.split_weights_hwio.append(w_hwio)
            self.split_biases.append(b)

            w_np = np.asarray(w_hwio, np.float32)
            for kh in range(KH):
                for kwi in range(KW):
                    w3d[kh * KW + kwi, r0:r0 + in_nc, coff:coff + out_nc] = w_np[kh, kwi]
            bias_full[0, coff:coff + out_nc] = np.asarray(b)
            coff += out_nc

        self.cout_total = Cout_total
        self.cout_pad = Cout_pad
        # bf16 operands (MXU-native on v5e/v6e/v7x; v7x has no int MXU path so
        # bf16 is the right packing), f32 accumulation inside the kernel.
        self.w3d = jnp.asarray(w3d, jnp.bfloat16)
        self.bias_full = jnp.asarray(bias_full, jnp.float32)

    def _run(self, x_nhwc_bf16):
        outs, _ = conv2d_multi_fused(
            x_nhwc_bf16, self.w3d, self.bias_full, self.out_channels,
            kernel_size=self.kernel_size, stride=self.stride,
            padding=self.padding, dilation=self.dilation)
        return outs

    def __call__(self, x_nchw):
        # Module contract is NCHW: one fused transpose+cast pass to bf16 NHWC
        # (the cheapest input path given NCHW in HBM; the kernel itself never
        # pads Cout nor re-transposes the outputs).
        x_nhwc = jnp.transpose(x_nchw, (0, 2, 3, 1)).astype(jnp.bfloat16)
        return self._run(x_nhwc)

    def call_nhwc(self, x_nhwc):
        # Producers that already keep NHWC activations skip the layout pass.
        return self._run(x_nhwc.astype(jnp.bfloat16))


def _ref_conv_nchw(x_nchw, w_hwio, b, stride, padding, dilation):
    w_oihw = jnp.transpose(w_hwio, (3, 2, 0, 1))
    out = lax.conv_general_dilated(
        x_nchw, w_oihw, (stride, stride),
        [(padding, padding), (padding, padding)],
        rhs_dilation=(dilation, dilation),
        dimension_numbers=('NCHW', 'OIHW', 'NCHW'))
    return out + b[None, :, None, None]


if __name__ == "__main__":
    N, Cin, H, W = 2, 32, 16, 16
    out_channels = [8, 16]
    kernel_size, stride, padding, dilation = 3, 1, 1, 1

    key = jax.random.PRNGKey(0)
    kx, kparams = jax.random.split(key)
    x = jax.random.normal(kx, (N, Cin, H, W), jnp.float32)   # PyTorch-style NCHW

    mod = Conv2dMultiPallas(Cin, out_channels, kernel_size, stride=stride,
                            padding=padding, dilation=dilation, bias=True,
                            key=kparams)

    outs = mod(x)
    outs = [jax.block_until_ready(o) for o in outs]

    # Reference: per-split conv on the same bf16-rounded operands, f32 math.
    x_bf = x.astype(jnp.bfloat16).astype(jnp.float32)
    for i, o in enumerate(outs):
        xi = x_bf[:, mod._ranges[i]:mod._ranges[i + 1]]
        wi = mod.split_weights_hwio[i].astype(jnp.bfloat16).astype(jnp.float32)
        ref = _ref_conv_nchw(xi, wi, mod.split_biases[i],
                             stride, padding, dilation)
        assert o.shape == (N, out_channels[i], H, W), o.shape
        np.testing.assert_allclose(np.asarray(o), np.asarray(ref),
                                   rtol=1e-3, atol=1e-3)

    print("KERNEL_OK")
</pallas_src>

<mosaic_0001>
module attributes {stable_mosaic.version = 11 : i64} {
  func.func @_conv2d_multi_kernel(%arg0: i32, %arg1: i32, %arg2: memref<1x16x16x32xbf16, #tpu.memory_space<vmem>>, %arg3: memref<9x32x128xbf16, #tpu.memory_space<vmem>>, %arg4: memref<1x128xf32, #tpu.memory_space<vmem>>, %arg5: memref<1x8x256xf32, #tpu.memory_space<vmem>>, %arg6: memref<1x16x256xf32, #tpu.memory_space<vmem>>, %arg7: memref<18x18x32xbf16, #tpu.memory_space<vmem>>) attributes {dimension_semantics = [#tpu.dimension_semantics<parallel>, #tpu.dimension_semantics<arbitrary>], iteration_bounds = array<i64: 2, 1>, scalar_prefetch = 0 : i64, scratch_operands = 1 : i64, tpu.core_type = #tpu.core_type<tc>, window_params = [{transform_indices = @transform_0, window_bounds = array<i64: 1, 16, 16, 32>}, {pipeline_mode = #tpu.pipeline_mode<synchronous>, transform_indices = @transform_1, window_bounds = array<i64: 9, 32, 128>}, {pipeline_mode = #tpu.pipeline_mode<synchronous>, transform_indices = @transform_2, window_bounds = array<i64: 1, 128>}, {transform_indices = @transform_3, window_bounds = array<i64: 1, 8, 256>}, {transform_indices = @transform_4, window_bounds = array<i64: 1, 16, 256>}]} {
    %c0_i32 = arith.constant 0 : i32
    %0 = arith.cmpi eq, %arg1, %c0_i32 : i32
    %1 = arith.extui %0 : i1 to i32
    %c0_i32_0 = arith.constant 0 : i32
    %2 = arith.cmpi ne, %1, %c0_i32_0 : i32
    scf.if %2 {
      %cst_60 = arith.constant 0.000000e+00 : bf16
      %87 = vector.broadcast %cst_60 : bf16 to vector<1x18x32xbf16>
      %c0_61 = arith.constant 0 : index
      %c0_62 = arith.constant 0 : index
      %c0_63 = arith.constant 0 : index
      %88 = vector.load %arg7[%c0_61, %c0_62, %c0_63] : memref<18x18x32xbf16, #tpu.memory_space<vmem>>, vector<1x18x32xbf16>
      tpu.vector_store %arg7[%c0_61, %c0_62, %c0_63], %87 {strides = array<i32>} : memref<18x18x32xbf16, #tpu.memory_space<vmem>>, vector<1x18x32xbf16>,
      %c17 = arith.constant 17 : index
      %c0_64 = arith.constant 0 : index
      %c0_65 = arith.constant 0 : index
      %89 = vector.load %arg7[%c17, %c0_64, %c0_65] : memref<18x18x32xbf16, #tpu.memory_space<vmem>>, vector<1x18x32xbf16>
      tpu.vector_store %arg7[%c17, %c0_64, %c0_65], %87 {strides = array<i32>} : memref<18x18x32xbf16, #tpu.memory_space<vmem>>, vector<1x18x32xbf16>,
      %cst_66 = arith.constant 0.000000e+00 : bf16
      %90 = vector.broadcast %cst_66 : bf16 to vector<16x1x32xbf16>
      %c1_67 = arith.constant 1 : index
      %c0_68 = arith.constant 0 : index
      %c0_69 = arith.constant 0 : index
      %91 = vector.load %arg7[%c1_67, %c0_68, %c0_69] : memref<18x18x32xbf16, #tpu.memory_space<vmem>>, vector<16x1x32xbf16>
      tpu.vector_store %arg7[%c1_67, %c0_68, %c0_69], %90 {strides = array<i32>} : memref<18x18x32xbf16, #tpu.memory_space<vmem>>, vector<16x1x32xbf16>,
      %c1_70 = arith.constant 1 : index
      %c17_71 = arith.constant 17 : index
      %c0_72 = arith.constant 0 : index
      %92 = vector.load %arg7[%c1_70, %c17_71, %c0_72] : memref<18x18x32xbf16, #tpu.memory_space<vmem>>, vector<16x1x32xbf16>
      tpu.vector_store %arg7[%c1_70, %c17_71, %c0_72], %90 {strides = array<i32>} : memref<18x18x32xbf16, #tpu.memory_space<vmem>>, vector<16x1x32xbf16>,
      %c0_73 = arith.constant 0 : index
      %c0_74 = arith.constant 0 : index
      %c0_75 = arith.constant 0 : index
      %c0_76 = arith.constant 0 : index
      %93 = vector.load %arg2[%c0_73, %c0_74, %c0_75, %c0_76] : memref<1x16x16x32xbf16, #tpu.memory_space<vmem>>, vector<1x16x16x32xbf16>
      %94 = vector.shape_cast %93 : vector<1x16x16x32xbf16> to vector<16x16x32xbf16>
      %c1_77 = arith.constant 1 : index
      %c1_78 = arith.constant 1 : index
      %c0_79 = arith.constant 0 : index
      %95 = vector.load %arg7[%c1_77, %c1_78, %c0_79] : memref<18x18x32xbf16, #tpu.memory_space<vmem>>, vector<16x16x32xbf16>
      tpu.vector_store %arg7[%c1_77, %c1_78, %c0_79], %94 {strides = array<i32>} : memref<18x18x32xbf16, #tpu.memory_space<vmem>>, vector<16x16x32xbf16>,
    } else {
    }
    %c16_i32 = arith.constant 16 : i32
    %3 = arith.muli %arg1, %c16_i32 : i32
    %c0_i32_1 = arith.constant 0 : i32
    %4 = arith.addi %3, %c0_i32_1 : i32
    %5 = arith.index_cast %4 : i32 to index
    %c0 = arith.constant 0 : index
    %c0_2 = arith.constant 0 : index
    %6 = vector.load %arg7[%5, %c0, %c0_2] : memref<18x18x32xbf16, #tpu.memory_space<vmem>>, vector<16x16x32xbf16>
    %7 = vector.shape_cast %6 : vector<16x16x32xbf16> to vector<256x32xbf16>
    %c0_3 = arith.constant 0 : index
    %c0_4 = arith.constant 0 : index
    %c0_5 = arith.constant 0 : index
    %8 = vector.load %arg3[%c0_3, %c0_4, %c0_5] : memref<9x32x128xbf16, #tpu.memory_space<vmem>>, vector<1x32x128xbf16>
    %9 = vector.shape_cast %8 : vector<1x32x128xbf16> to vector<32x128xbf16>
    %cst = arith.constant dense<0.000000e+00> : vector<256x128xf32>
    %10 = tpu.matmul %7, %9, %cst {dimension_numbers = #tpu.dot_dimension_numbers<[1], [0], [0], [1], [0, 0, 1, 1], [], []>} : vector<256x32xbf16>, vector<32x128xbf16>, vector<256x128xf32> -> vector<256x128xf32>
    %c0_i32_6 = arith.constant 0 : i32
    %11 = arith.addi %3, %c0_i32_6 : i32
    %12 = arith.index_cast %11 : i32 to index
    %c1 = arith.constant 1 : index
    %c0_7 = arith.constant 0 : index
    %13 = vector.load %arg7[%12, %c1, %c0_7] : memref<18x18x32xbf16, #tpu.memory_space<vmem>>, vector<16x16x32xbf16>
    %14 = vector.shape_cast %13 : vector<16x16x32xbf16> to vector<256x32xbf16>
    %c1_8 = arith.constant 1 : index
    %c0_9 = arith.constant 0 : index
    %c0_10 = arith.constant 0 : index
    %15 = vector.load %arg3[%c1_8, %c0_9, %c0_10] : memref<9x32x128xbf16, #tpu.memory_space<vmem>>, vector<1x32x128xbf16>
    %16 = vector.shape_cast %15 : vector<1x32x128xbf16> to vector<32x128xbf16>
    %cst_11 = arith.constant dense<0.000000e+00> : vector<256x128xf32>
    %17 = tpu.matmul %14, %16, %cst_11 {dimension_numbers = #tpu.dot_dimension_numbers<[1], [0], [0], [1], [0, 0, 1, 1], [], []>} : vector<256x32xbf16>, vector<32x128xbf16>, vector<256x128xf32> -> vector<256x128xf32>
    %18 = arith.addf %10, %17 : vector<256x128xf32>
    %c0_i32_12 = arith.constant 0 : i32
    %19 = arith.addi %3, %c0_i32_12 : i32
    %20 = arith.index_cast %19 : i32 to index
    %c2 = arith.constant 2 : index
    %c0_13 = arith.constant 0 : index
    %21 = vector.load %arg7[%20, %c2, %c0_13] : memref<18x18x32xbf16, #tpu.memory_space<vmem>>, vector<16x16x32xbf16>
    %22 = vector.shape_cast %21 : vector<16x16x32xbf16> to vector<256x32xbf16>
    %c2_14 = arith.constant 2 : index
    %c0_15 = arith.constant 0 : index
    %c0_16 = arith.constant 0 : index
    %23 = vector.load %arg3[%c2_14, %c0_15, %c0_16] : memref<9x32x128xbf16, #tpu.memory_space<vmem>>, vector<1x32x128xbf16>
    %24 = vector.shape_cast %23 : vector<1x32x128xbf16> to vector<32x128xbf16>
    %cst_17 = arith.constant dense<0.000000e+00> : vector<256x128xf32>
    %25 = tpu.matmul %22, %24, %cst_17 {dimension_numbers = #tpu.dot_dimension_numbers<[1], [0], [0], [1], [0, 0, 1, 1], [], []>} : vector<256x32xbf16>, vector<32x128xbf16>, vector<256x128xf32> -> vector<256x128xf32>
    %26 = arith.addf %18, %25 : vector<256x128xf32>
    %c1_i32 = arith.constant 1 : i32
    %27 = arith.addi %3, %c1_i32 : i32
    %28 = arith.index_cast %27 : i32 to index
    %c0_18 = arith.constant 0 : index
    %c0_19 = arith.constant 0 : index
    %29 = vector.load %arg7[%28, %c0_18, %c0_19] : memref<18x18x32xbf16, #tpu.memory_space<vmem>>, vector<16x16x32xbf16>
    %30 = vector.shape_cast %29 : vector<16x16x32xbf16> to vector<256x32xbf16>
    %c3 = arith.constant 3 : index
    %c0_20 = arith.constant 0 : index
    %c0_21 = arith.constant 0 : index
    %31 = vector.load %arg3[%c3, %c0_20, %c0_21] : memref<9x32x128xbf16, #tpu.memory_space<vmem>>, vector<1x32x128xbf16>
    %32 = vector.shape_cast %31 : vector<1x32x128xbf16> to vector<32x128xbf16>
    %cst_22 = arith.constant dense<0.000000e+00> : vector<256x128xf32>
    %33 = tpu.matmul %30, %32, %cst_22 {dimension_numbers = #tpu.dot_dimension_numbers<[1], [0], [0], [1], [0, 0, 1, 1], [], []>} : vector<256x32xbf16>, vector<32x128xbf16>, vector<256x128xf32> -> vector<256x128xf32>
    %34 = arith.addf %26, %33 : vector<256x128xf32>
    %c1_i32_23 = arith.constant 1 : i32
    %35 = arith.addi %3, %c1_i32_23 : i32
    %36 = arith.index_cast %35 : i32 to index
    %c1_24 = arith.constant 1 : index
    %c0_25 = arith.constant 0 : index
    %37 = vector.load %arg7[%36, %c1_24, %c0_25] : memref<18x18x32xbf16, #tpu.memory_space<vmem>>, vector<16x16x32xbf16>
    %38 = vector.shape_cast %37 : vector<16x16x32xbf16> to vector<256x32xbf16>
    %c4 = arith.constant 4 : index
    %c0_26 = arith.constant 0 : index
    %c0_27 = arith.constant 0 : index
    %39 = vector.load %arg3[%c4, %c0_26, %c0_27] : memref<9x32x128xbf16, #tpu.memory_space<vmem>>, vector<1x32x128xbf16>
    %40 = vector.shape_cast %39 : vector<1x32x128xbf16> to vector<32x128xbf16>
    %cst_28 = arith.constant dense<0.000000e+00> : vector<256x128xf32>
    %41 = tpu.matmul %38, %40, %cst_28 {dimension_numbers = #tpu.dot_dimension_numbers<[1], [0], [0], [1], [0, 0, 1, 1], [], []>} : vector<256x32xbf16>, vector<32x128xbf16>, vector<256x128xf32> -> vector<256x128xf32>
    %42 = arith.addf %34, %41 : vector<256x128xf32>
    %c1_i32_29 = arith.constant 1 : i32
    %43 = arith.addi %3, %c1_i32_29 : i32
    %44 = arith.index_cast %43 : i32 to index
    %c2_30 = arith.constant 2 : index
    %c0_31 = arith.constant 0 : index
    %45 = vector.load %arg7[%44, %c2_30, %c0_31] : memref<18x18x32xbf16, #tpu.memory_space<vmem>>, vector<16x16x32xbf16>
    %46 = vector.shape_cast %45 : vector<16x16x32xbf16> to vector<256x32xbf16>
    %c5 = arith.constant 5 : index
    %c0_32 = arith.constant 0 : index
    %c0_33 = arith.constant 0 : index
    %47 = vector.load %arg3[%c5, %c0_32, %c0_33] : memref<9x32x128xbf16, #tpu.memory_space<vmem>>, vector<1x32x128xbf16>
    %48 = vector.shape_cast %47 : vector<1x32x128xbf16> to vector<32x128xbf16>
    %cst_34 = arith.constant dense<0.000000e+00> : vector<256x128xf32>
    %49 = tpu.matmul %46, %48, %cst_34 {dimension_numbers = #tpu.dot_dimension_numbers<[1], [0], [0], [1], [0, 0, 1, 1], [], []>} : vector<256x32xbf16>, vector<32x128xbf16>, vector<256x128xf32> -> vector<256x128xf32>
    %50 = arith.addf %42, %49 : vector<256x128xf32>
    %c2_i32 = arith.constant 2 : i32
    %51 = arith.addi %3, %c2_i32 : i32
    %52 = arith.index_cast %51 : i32 to index
    %c0_35 = arith.constant 0 : index
    %c0_36 = arith.constant 0 : index
    %53 = vector.load %arg7[%52, %c0_35, %c0_36] : memref<18x18x32xbf16, #tpu.memory_space<vmem>>, vector<16x16x32xbf16>
    %54 = vector.shape_cast %53 : vector<16x16x32xbf16> to vector<256x32xbf16>
    %c6 = arith.constant 6 : index
    %c0_37 = arith.constant 0 : index
    %c0_38 = arith.constant 0 : index
    %55 = vector.load %arg3[%c6, %c0_37, %c0_38] : memref<9x32x128xbf16, #tpu.memory_space<vmem>>, vector<1x32x128xbf16>
    %56 = vector.shape_cast %55 : vector<1x32x128xbf16> to vector<32x128xbf16>
    %cst_39 = arith.constant dense<0.000000e+00> : vector<256x128xf32>
    %57 = tpu.matmul %54, %56, %cst_39 {dimension_numbers = #tpu.dot_dimension_numbers<[1], [0], [0], [1], [0, 0, 1, 1], [], []>} : vector<256x32xbf16>, vector<32x128xbf16>, vector<256x128xf32> -> vector<256x128xf32>
    %58 = arith.addf %50, %57 : vector<256x128xf32>
    %c2_i32_40 = arith.constant 2 : i32
    %59 = arith.addi %3, %c2_i32_40 : i32
    %60 = arith.index_cast %59 : i32 to index
    %c1_41 = arith.constant 1 : index
    %c0_42 = arith.constant 0 : index
    %61 = vector.load %arg7[%60, %c1_41, %c0_42] : memref<18x18x32xbf16, #tpu.memory_space<vmem>>, vector<16x16x32xbf16>
    %62 = vector.shape_cast %61 : vector<16x16x32xbf16> to vector<256x32xbf16>
    %c7 = arith.constant 7 : index
    %c0_43 = arith.constant 0 : index
    %c0_44 = arith.constant 0 : index
    %63 = vector.load %arg3[%c7, %c0_43, %c0_44] : memref<9x32x128xbf16, #tpu.memory_space<vmem>>, vector<1x32x128xbf16>
    %64 = vector.shape_cast %63 : vector<1x32x128xbf16> to vector<32x128xbf16>
    %cst_45 = arith.constant dense<0.000000e+00> : vector<256x128xf32>
    %65 = tpu.matmul %62, %64, %cst_45 {dimension_numbers = #tpu.dot_dimension_numbers<[1], [0], [0], [1], [0, 0, 1, 1], [], []>} : vector<256x32xbf16>, vector<32x128xbf16>, vector<256x128xf32> -> vector<256x128xf32>
    %66 = arith.addf %58, %65 : vector<256x128xf32>
    %c2_i32_46 = arith.constant 2 : i32
    %67 = arith.addi %3, %c2_i32_46 : i32
    %68 = arith.index_cast %67 : i32 to index
    %c2_47 = arith.constant 2 : index
    %c0_48 = arith.constant 0 : index
    %69 = vector.load %arg7[%68, %c2_47, %c0_48] : memref<18x18x32xbf16, #tpu.memory_space<vmem>>, vector<16x16x32xbf16>
    %70 = vector.shape_cast %69 : vector<16x16x32xbf16> to vector<256x32xbf16>
    %c8 = arith.constant 8 : index
    %c0_49 = arith.constant 0 : index
    %c0_50 = arith.constant 0 : index
    %71 = vector.load %arg3[%c8, %c0_49, %c0_50] : memref<9x32x128xbf16, #tpu.memory_space<vmem>>, vector<1x32x128xbf16>
    %72 = vector.shape_cast %71 : vector<1x32x128xbf16> to vector<32x128xbf16>
    %cst_51 = arith.constant dense<0.000000e+00> : vector<256x128xf32>
    %73 = tpu.matmul %70, %72, %cst_51 {dimension_numbers = #tpu.dot_dimension_numbers<[1], [0], [0], [1], [0, 0, 1, 1], [], []>} : vector<256x32xbf16>, vector<32x128xbf16>, vector<256x128xf32> -> vector<256x128xf32>
    %74 = arith.addf %66, %73 : vector<256x128xf32>
    %c0_52 = arith.constant 0 : index
    %c0_53 = arith.constant 0 : index
    %75 = vector.load %arg4[%c0_52, %c0_53] : memref<1x128xf32, #tpu.memory_space<vmem>>, vector<1x128xf32>
    %76 = vector.broadcast %75 : vector<1x128xf32> to vector<256x128xf32>
    %77 = arith.addf %74, %76 : vector<256x128xf32>
    %78 = tpu.transpose %77, [1, 0] : vector<256x128xf32> -> vector<128x256xf32>
    %79 = vector.extract_strided_slice %78 {offsets = [0, 0], sizes = [8, 256], strides = [1, 1]} : vector<128x256xf32> to vector<8x256xf32>
    %c0_54 = arith.constant 0 : index
    %c0_55 = arith.constant 0 : index
    %c0_56 = arith.constant 0 : index
    %80 = vector.load %arg5[%c0_54, %c0_55, %c0_56] : memref<1x8x256xf32, #tpu.memory_space<vmem>>, vector<1x8x256xf32>
    %81 = vector.shape_cast %80 : vector<1x8x256xf32> to vector<8x256xf32>
    %82 = vector.shape_cast %79 : vector<8x256xf32> to vector<1x8x256xf32>
    tpu.vector_store %arg5[%c0_54, %c0_55, %c0_56], %82 {strides = array<i32>} : memref<1x8x256xf32, #tpu.memory_space<vmem>>, vector<1x8x256xf32>,
    %83 = vector.extract_strided_slice %78 {offsets = [8, 0], sizes = [16, 256], strides = [1, 1]} : vector<128x256xf32> to vector<16x256xf32>
    %c0_57 = arith.constant 0 : index
    %c0_58 = arith.constant 0 : index
    %c0_59 = arith.constant 0 : index
    %84 = vector.load %arg6[%c0_57, %c0_58, %c0_59] : memref<1x16x256xf32, #tpu.memory_space<vmem>>, vector<1x16x256xf32>
    %85 = vector.shape_cast %84 : vector<1x16x256xf32> to vector<16x256xf32>
    %86 = vector.shape_cast %83 : vector<16x256xf32> to vector<1x16x256xf32>
    tpu.vector_store %arg6[%c0_57, %c0_58, %c0_59], %86 {strides = array<i32>} : memref<1x16x256xf32, #tpu.memory_space<vmem>>, vector<1x16x256xf32>,
    return
  }
  func.func @transform_0(%arg0: i32, %arg1: i32) -> (i32, i32, i32, i32) {
    %c0_i32 = arith.constant 0 : i32
    %c0_i32_0 = arith.constant 0 : i32
    %c0_i32_1 = arith.constant 0 : i32
    %c0_i32_2 = arith.constant 0 : i32
    return %arg0, %c0_i32, %c0_i32_0, %c0_i32_1 : i32, i32, i32, i32
  }
  func.func @transform_1(%arg0: i32, %arg1: i32) -> (i32, i32, i32) {
    %c0_i32 = arith.constant 0 : i32
    %c0_i32_0 = arith.constant 0 : i32
    %c0_i32_1 = arith.constant 0 : i32
    %c0_i32_2 = arith.constant 0 : i32
    return %c0_i32, %c0_i32_0, %c0_i32_1 : i32, i32, i32
  }
  func.func @transform_2(%arg0: i32, %arg1: i32) -> (i32, i32) {
    %c0_i32 = arith.constant 0 : i32
    %c0_i32_0 = arith.constant 0 : i32
    %c0_i32_1 = arith.constant 0 : i32
    return %c0_i32, %c0_i32_0 : i32, i32
  }
  func.func @transform_3(%arg0: i32, %arg1: i32) -> (i32, i32, i32) {
    %c0_i32 = arith.constant 0 : i32
    %c0_i32_0 = arith.constant 0 : i32
    return %arg0, %c0_i32, %arg1 : i32, i32, i32
  }
  func.func @transform_4(%arg0: i32, %arg1: i32) -> (i32, i32, i32) {
    %c0_i32 = arith.constant 0 : i32
    %c0_i32_0 = arith.constant 0 : i32
    return %arg0, %c0_i32, %arg1 : i32, i32, i32
  }
}

</mosaic_0001>

<llo_original>
// kernel: tpu_custom_call.1
$region0: #{tpu_custom_call.1}
  #allocation0 [shape = 'u32[]', space=smem, size = 0x4, offset = 0x4, fixed_abs, tag = 'smem constant byte address 0x4 - core index']
  #allocation1 [shape = 'u32[144,128]{1,0:T(1,128)}', space=vmem, size = 0x12000, scoped, tag = 'internal scratch']
  #allocation2 [shape = 'bf16[18,18,32]{2,1,0:T(8,128)(2,1)}', space=vmem, size = 0x1b000, scoped, tag = 'scratch operand']
  %s0 = inlined_call_operand.hbm [shape: bf16[2,16,16,32], index: 0, kind: input, shape index: {}]
  %s1 = inlined_call_operand.hbm [shape: bf16[9,32,128], index: 1, kind: input, shape index: {}]
  %s2 = inlined_call_operand.vmem [shape: f32[1,128], index: 2, kind: input, shape index: {}]
  %s3 = inlined_call_operand.hbm [shape: f32[2,8,256], index: 3, kind: output, shape index: {0}]
  %s4 = inlined_call_operand.hbm [shape: f32[2,16,256], index: 4, kind: output, shape index: {1}]
  %5 = xla_tuple %s3, %s4
  %s6 = sld [smem:[#allocation0]]
  $region65: #{tpu_custom_call.1} parent=0
    _
  %s8 = ssub.s32 1, %s6
  %s9 = scalar_select 0, %s8, %s6
  $region1: #{tpu_custom_call.1} parent=0
    #allocation3 [shape = 'u8[131072]{0}', space=vmem, size = 0x20000, scoped, tag = 'input window, operand 0']
    #allocation4 [shape = 's32[2]{0}', space=sflag, size = 0x8, scoped, tag = 'scoped memory for tpu_custom_call.1']
    #allocation5 [shape = 's32[2]{0}', space=sflag, size = 0x8, scoped, tag = 'scoped memory for tpu_custom_call.1']
    #allocation6 [shape = 'u8[73728]{0}', space=vmem, size = 0x12000, scoped, tag = 'input window, operand 1, single buffered']
    #allocation7 [shape = 's32[1]{0}', space=sflag, size = 0x4, scoped, tag = 'scoped memory for tpu_custom_call.1']
    #allocation8 [shape = 'u8[16384]{0}', space=vmem, size = 0x4000, scoped, tag = 'output window, operand 0']
    #allocation9 [shape = 'u8[32768]{0}', space=vmem, size = 0x8000, scoped, tag = 'output window, operand 1']
    #allocation10 [shape = 's32[2]{0}', space=sflag, size = 0x8, scoped, tag = 'scoped memory for tpu_custom_call.1']
    %10 = vsyncpa [#allocation4], 0
    %s11 = scalar_lea.sflag [#allocation4], 1
    %12 = vsyncpa %s11, 0
    %13 = vsyncpa [#allocation7], 0
    %14 = vsyncpa [#allocation5], 0
    %s15 = scalar_lea.sflag [#allocation5], 1
    %16 = vsyncpa %s15, 0
    %17 = vsyncpa [#allocation10], 0
    %s18 = scalar_lea.sflag [#allocation10], 1
    %19 = vsyncpa %s18, 0
    loop: start=0, step=1, limit=4
    $region2: #{tpu_custom_call.1} parent=1 // loop_pre_header
      _
    $region3: #{tpu_custom_call.1} parent=1 // loop_header
      %s21 = sphi 0, %s25
      %p22 = scmp.ge.s32.totalorder %s21, 4
      %s28 = sphi 0, %s40
      %s29 = sphi 0, %s36
      %s30 = sphi 0, %s28
      %s31 = sphi 0, %s29
      %s32 = sphi 0, %s30
      %s33 = sphi 0, %s31
      %s43 = sphi 0, %s45
      %s46 = sphi 0, %s43
      %s47 = sphi 0, %s46
      %s63 = sphi 0, %s47
      %s67 = sphi 0, %s67
      %s69 = sphi 0, %s67
      %s70 = sphi 0, %s69
      %s84 = sphi 0, %s70
      %s88 = sphi 0, %s88
      %s90 = sphi 0, %s88
      %s91 = sphi 0, %s90
      %s105 = sphi 0, %s91
      %s113 = sphi 0, %s115
      %s116 = sphi 0, %s113
      %s117 = sphi 0, %s116
      %s133 = sphi 0, %s117
      %s141 = sphi 0, %s143
      %s144 = sphi 0, %s141
      %s145 = sphi 0, %s144
      %s161 = sphi 0, %s145
    $region4: #{tpu_custom_call.1} parent=1 // loop_header_branch
      %24 = sbr.rel (%p22) target = $region8
    $region5: #{tpu_custom_call.1} parent=1 // loop_body
      %s26 = ssub.s32 %s21, 1
      %s27 = ssub.s32 %s21, 2
      %s34 = sadd.s32 1, %s29
      %p35 = scmp.ge.s32.totalorder %s34, 1
      %s36 = scalar_select %p35, 0, %s34
      %s37 = sadd.s32 1, %s28
      %s38 = scalar_select %p35, %s37, %s28
      %p39 = scmp.ge.s32.totalorder %s38, 2
      %s40 = scalar_select %p39, 0, %s38
      %s41 = ssub.s32 %s28, %s40
      %p42 = scmp.eq.s32.totalorder %s41, 0
      %s44 = sadd.s32 %s43, 1
      %s45 = scalar_select %p42, %s43, %s44
      %p48 = pneg %p42
      %p49 = scmp.eq.s32.totalorder %s21, 1
      %p50 = por %p48, %p49
      %p51 = scmp.ne.s32.totalorder %s43, %s46
      %p52 = scmp.eq.s32.totalorder %s21, 0
      %p53 = por %p51, %p52
      %p54 = scmp.ne.s32.totalorder %s43, %s46
      %p55 = scmp.eq.s32.totalorder %s26, 1
      %p56 = por %p54, %p55
      %p57 = scmp.ne.s32.totalorder %s46, %s47
      %p58 = scmp.eq.s32.totalorder %s26, 0
      %p59 = por %p57, %p58
      %p60 = scmp.ne.s32.totalorder %s46, %s47
      %p61 = scmp.eq.s32.totalorder %s27, 1
      %p62 = por %p60, %p61
      %p64 = scmp.ne.s32.totalorder %s47, %s63
      %p65 = scmp.eq.s32.totalorder %s27, 0
      %p66 = por %p64, %p65
      %s68 = sadd.s32 %s67, 1
      %p71 = scmp.eq.s32.totalorder %s21, 1
      %p72 = scmp.ne.s32.totalorder %s67, %s69
      %p73 = scmp.eq.s32.totalorder %s21, 0
      %p74 = por %p72, %p73
      %p75 = scmp.ne.s32.totalorder %s67, %s69
      %p76 = scmp.eq.s32.totalorder %s26, 1
      %p77 = por %p75, %p76
      %p78 = scmp.ne.s32.totalorder %s69, %s70
      %p79 = scmp.eq.s32.totalorder %s26, 0
      %p80 = por %p78, %p79
      %p81 = scmp.ne.s32.totalorder %s69, %s70
      %p82 = scmp.eq.s32.totalorder %s27, 1
      %p83 = por %p81, %p82
      %p85 = scmp.ne.s32.totalorder %s70, %s84
      %p86 = scmp.eq.s32.totalorder %s27, 0
      %p87 = por %p85, %p86
      %s89 = sadd.s32 %s88, 1
      %p92 = scmp.eq.s32.totalorder %s21, 1
      %p93 = scmp.ne.s32.totalorder %s88, %s90
      %p94 = scmp.eq.s32.totalorder %s21, 0
      %p95 = por %p93, %p94
      %p96 = scmp.ne.s32.totalorder %s88, %s90
      %p97 = scmp.eq.s32.totalorder %s26, 1
      %p98 = por %p96, %p97
      %p99 = scmp.ne.s32.totalorder %s90, %s91
      %p100 = scmp.eq.s32.totalorder %s26, 0
      %p101 = por %p99, %p100
      %p102 = scmp.ne.s32.totalorder %s90, %s91
      %p103 = scmp.eq.s32.totalorder %s27, 1
      %p104 = por %p102, %p103
      %p106 = scmp.ne.s32.totalorder %s91, %s105
      %p107 = scmp.eq.s32.totalorder %s27, 0
      %p108 = por %p106, %p107
      %s109 = ssub.s32 %s28, %s40
      %s110 = ssub.s32 %s29, %s36
      %s111 = sor.u32 %s109, %s110
      %p112 = scmp.eq.s32.totalorder %s111, 0
      %s114 = sadd.s32 %s113, 1
      %s115 = scalar_select %p112, %s113, %s114
      %p118 = pneg %p112
      %p119 = scmp.eq.s32.totalorder %s21, 1
      %p120 = por %p118, %p119
      %p121 = scmp.ne.s32.totalorder %s113, %s116
      %p122 = scmp.eq.s32.totalorder %s21, 0
      %p123 = por %p121, %p122
      %p124 = scmp.ne.s32.totalorder %s113, %s116
      %p125 = scmp.eq.s32.totalorder %s26, 1
      %p126 = por %p124, %p125
      %p127 = scmp.ne.s32.totalorder %s116, %s117
      %p128 = scmp.eq.s32.totalorder %s26, 0
      %p129 = por %p127, %p128
      %p130 = scmp.ne.s32.totalorder %s116, %s117
      %p131 = scmp.eq.s32.totalorder %s27, 1
      %p132 = por %p130, %p131
      %p134 = scmp.ne.s32.totalorder %s117, %s133
      %p135 = scmp.eq.s32.totalorder %s27, 0
      %p136 = por %p134, %p135
      %s137 = ssub.s32 %s28, %s40
      %s138 = ssub.s32 %s29, %s36
      %s139 = sor.u32 %s137, %s138
      %p140 = scmp.eq.s32.totalorder %s139, 0
      %s142 = sadd.s32 %s141, 1
      %s143 = scalar_select %p140, %s141, %s142
      %p146 = pneg %p140
      %p147 = scmp.eq.s32.totalorder %s21, 1
      %p148 = por %p146, %p147
      %p149 = scmp.ne.s32.totalorder %s141, %s144
      %p150 = scmp.eq.s32.totalorder %s21, 0
      %p151 = por %p149, %p150
      %p152 = scmp.ne.s32.totalorder %s141, %s144
      %p153 = scmp.eq.s32.totalorder %s26, 1
      %p154 = por %p152, %p153
      %p155 = scmp.ne.s32.totalorder %s144, %s145
      %p156 = scmp.eq.s32.totalorder %s26, 0
      %p157 = por %p155, %p156
      %p158 = scmp.ne.s32.totalorder %s144, %s145
      %p159 = scmp.eq.s32.totalorder %s27, 1
      %p160 = por %p158, %p159
      %p162 = scmp.ne.s32.totalorder %s145, %s161
      %p163 = scmp.eq.s32.totalorder %s27, 0
      %p164 = por %p162, %p163
      %p165 = scmp.le.s32.totalorder 1, %s21
      %p166 = scmp.lt.s32.totalorder %s21, 3
      %p167 = pnand %p165, %p166
      %p168 = pneg %p167
      // Predicated region
      $region9: #{tpu_custom_call.1} parent=5 // pred_check
        _
      $region10: #{tpu_custom_call.1} parent=5 // pred_check_branch
        %170 = sbr.rel (%p167) target = $region12
      $region11: #{tpu_custom_call.1} parent=5 // pred_region
        %s171 = ssub.s32 %s21, 1
        // Predicated region
        $region13: #{tpu_custom_call.1} parent=11 // pred_check
          %p172 = pneg %p80
        $region14: #{tpu_custom_call.1} parent=11 // pred_check_branch
          %174 = sbr.rel (%p172) target = $region16
        $region15: #{tpu_custom_call.1} parent=11 // pred_region
          %s176 = ssub.s32 2304, 2304
          %177 = vsyncadd [#allocation7], %s176
          %s178 = sshll.u32 [#allocation6], 4
          %s179 = int_to_ptr.vmem [resolvable:$true] %s178
          %184 = dma.hbm_to_vmem [thread:$0]  %s1, 2304, %s179, [#allocation7], 64, 64, 4
        $region16: #{tpu_custom_call.1} parent=11 // pred_fallthru
          _
        // Predicated region
        $region17: #{tpu_custom_call.1} parent=11 // pred_check
          %p185 = pneg %p101
        $region18: #{tpu_custom_call.1} parent=11 // pred_check_branch
          %187 = sbr.rel (%p185) target = $region20
        $region19: #{tpu_custom_call.1} parent=11 // pred_region
          _
        $region20: #{tpu_custom_call.1} parent=11 // pred_fallthru
          _
      $region12: #{tpu_custom_call.1} parent=5 // pred_fallthru
        _
      %p188 = scmp.lt.s32.totalorder %s21, 2
      // Predicated region
      $region21: #{tpu_custom_call.1} parent=5 // pred_check
        %p189 = pneg %p188
      $region22: #{tpu_custom_call.1} parent=5 // pred_check_branch
        %191 = sbr.rel (%p189) target = $region24
      $region23: #{tpu_custom_call.1} parent=5 // pred_region
        // Predicated region
        $region25: #{tpu_custom_call.1} parent=23 // pred_check
          %p192 = pneg %p53
        $region26: #{tpu_custom_call.1} parent=23 // pred_check_branch
          %194 = sbr.rel (%p192) target = $region28
        $region27: #{tpu_custom_call.1} parent=23 // pred_region
          %s195 = sand.u32 %s43, 1
          %s196 = scalar_lea.sflag [#allocation4], %s195
          %s197 = sand.u32 %s43, 1
          %s198 = smul.addr %s197, 128
          %s199 = scalar_lea.vmem [#allocation3], %s198
          %s201 = ssub.s32 2048, 2048
          %202 = vsyncadd %s196, %s201
          %s203 = smul.addr %s28, 32
          %s204 = smul.addr %s203, 64
          %s205 = scalar_lea.hbm %s0, %s204
          %s206 = sshll.u32 %s199, 4
          %s207 = int_to_ptr.vmem [resolvable:$true] %s206
          %212 = dma.hbm_to_vmem [thread:$0]  %s205, 2048, %s207, %s196, 64, 64, 4
        $region28: #{tpu_custom_call.1} parent=23 // pred_fallthru
          _
      $region24: #{tpu_custom_call.1} parent=5 // pred_fallthru
        _
      %p213 = scmp.le.s32.totalorder 1, %s21
      %p214 = scmp.lt.s32.totalorder %s21, 3
      %p215 = pnand %p213, %p214
      %p216 = pneg %p215
      // Predicated region
      $region29: #{tpu_custom_call.1} parent=5 // pred_check
        _
      $region30: #{tpu_custom_call.1} parent=5 // pred_check_branch
        %218 = sbr.rel (%p215) target = $region32
      $region31: #{tpu_custom_call.1} parent=5 // pred_region
        %s219 = ssub.s32 %s21, 1
        %s220 = sand.u32 %s46, 1
        %s221 = scalar_lea.sflag [#allocation4], %s220
        %s222 = sand.u32 %s46, 1
        %s223 = smul.addr %s222, 128
        %s224 = scalar_lea.vmem [#allocation3], %s223
        // Predicated region
        $region33: #{tpu_custom_call.1} parent=31 // pred_check
          %p225 = pneg %p59
        $region34: #{tpu_custom_call.1} parent=31 // pred_check_branch
          %227 = sbr.rel (%p225) target = $region36
        $region35: #{tpu_custom_call.1} parent=31 // pred_region
          %228 = dma.done %s221, 2048
        $region36: #{tpu_custom_call.1} parent=31 // pred_fallthru
          _
        // Predicated region
        $region37: #{tpu_custom_call.1} parent=31 // pred_check
          %p229 = pneg %p80
        $region38: #{tpu_custom_call.1} parent=31 // pred_check_branch
          %231 = sbr.rel (%p229) target = $region40
        $region39: #{tpu_custom_call.1} parent=31 // pred_region
          %232 = dma.done [#allocation7], 2304
        $region40: #{tpu_custom_call.1} parent=31 // pred_fallthru
          _
        %s233 = sand.u32 %s46, 1
        %s234 = scalar_lea.sflag [#allocation4], %s233
        %s235 = sand.u32 %s46, 1
        %s236 = smul.addr %s235, 128
        %s237 = scalar_lea.vmem [#allocation3], %s236
        %p238 = pneg %p59
        %p239 = pneg %p56
        %p240 = pneg %p80
        %p241 = pneg %p77
        %p242 = pneg %p101
        %p243 = pneg %p98
        %p244 = pneg %p129
        %p245 = pneg %p126
        %s246 = sand.u32 %s116, 1
        %s247 = scalar_lea.sflag [#allocation5], %s246
        %s248 = sand.u32 %s116, 1
        %s249 = smul.addr %s248, 16
        %s250 = scalar_lea.vmem [#allocation8], %s249
        %p251 = pneg %p157
        %p252 = pneg %p154
        %s253 = sand.u32 %s144, 1
        %s254 = scalar_lea.sflag [#allocation10], %s253
        %s255 = sand.u32 %s144, 1
        %s256 = smul.addr %s255, 32
        %s257 = scalar_lea.vmem [#allocation9], %s256
        %s258 = smul.u32 2, %s31
        %s259 = smul.u32 2, %s31
        %p261 = scmp.eq.s32.totalorder %s31, 0
        // Predicated region
        $region41: #{tpu_custom_call.1} parent=31 // pred_check
          %p262 = pneg %p261
        $region42: #{tpu_custom_call.1} parent=31 // pred_check_branch
          %264 = sbr.rel (%p262) target = $region44
        $region43: #{tpu_custom_call.1} parent=31 // pred_region
          %vm265 = vcmask 257024
          %266 = vst.msk [vmem:[#allocation2] sm:$0xf] %vm265, 0
          %267 = vst.msk [vmem:[#allocation2 + $0x4] sm:$0xf] %vm265, 0
          %vm268 = vcmask 253952
          %269 = vst.msk [vmem:[#allocation2 + $0x8] sm:$0x1] %vm268, 0
          %s270 = scalar_lea.vmem [#allocation2], 204
          %271 = vst.msk [vmem:[%s270] sm:$0xf] %vm265, 0
          %272 = vst.msk [vmem:[%s270 + $0x4] sm:$0xf] %vm265, 0
          %273 = vst.msk [vmem:[%s270 + $0x8] sm:$0x1] %vm268, 0
          %s274 = scalar_lea.vmem [#allocation2], 12
          %vm275 = vcmask 253952
          %vm276 = vsmask.f32 256
          %vm277 = vmand %vm275, %vm276
          %v278 = vld [vmem:[%s274] sm:$0x1]
          %v279 = vsel %vm277, 0, %v278
          %280 = vst [vmem:[%s274] sm:$0x1] %v279
          %v281 = vld [vmem:[%s274 + $0xc] sm:$0x1]
          %v282 = vsel %vm277, 0, %v281
          %283 = vst [vmem:[%s274 + $0xc] sm:$0x1] %v282
          %v284 = vld [vmem:[%s274 + $0x18] sm:$0x1]
          %v285 = vsel %vm277, 0, %v284
          %286 = vst [vmem:[%s274 + $0x18] sm:$0x1] %v285
          %v287 = vld [vmem:[%s274 + $0x24] sm:$0x1]
          %v288 = vsel %vm277, 0, %v287
          %289 = vst [vmem:[%s274 + $0x24] sm:$0x1] %v288
          %v290 = vld [vmem:[%s274 + $0x30] sm:$0x1]
          %v291 = vsel %vm277, 0, %v290
          %292 = vst [vmem:[%s274 + $0x30] sm:$0x1] %v291
          %v293 = vld [vmem:[%s274 + $0x3c] sm:$0x1]
          %v294 = vsel %vm277, 0, %v293
          %295 = vst [vmem:[%s274 + $0x3c] sm:$0x1] %v294
          %v296 = vld [vmem:[%s274 + $0x48] sm:$0x1]
          %v297 = vsel %vm277, 0, %v296
          %298 = vst [vmem:[%s274 + $0x48] sm:$0x1] %v297
          %v299 = vld [vmem:[%s274 + $0x54] sm:$0x1]
          %v300 = vsel %vm277, 0, %v299
          %301 = vst [vmem:[%s274 + $0x54] sm:$0x1] %v300
          %v302 = vld [vmem:[%s274 + $0x60] sm:$0x1]
          %v303 = vsel %vm277, 0, %v302
          %304 = vst [vmem:[%s274 + $0x60] sm:$0x1] %v303
          %v305 = vld [vmem:[%s274 + $0x6c] sm:$0x1]
          %v306 = vsel %vm277, 0, %v305
          %307 = vst [vmem:[%s274 + $0x6c] sm:$0x1] %v306
          %v308 = vld [vmem:[%s274 + $0x78] sm:$0x1]
          %v309 = vsel %vm277, 0, %v308
          %310 = vst [vmem:[%s274 + $0x78] sm:$0x1] %v309
          %v311 = vld [vmem:[%s274 + $0x84] sm:$0x1]
          %v312 = vsel %vm277, 0, %v311
          %313 = vst [vmem:[%s274 + $0x84] sm:$0x1] %v312
          %v314 = vld [vmem:[%s274 + $0x90] sm:$0x1]
          %v315 = vsel %vm277, 0, %v314
          %316 = vst [vmem:[%s274 + $0x90] sm:$0x1] %v315
          %v317 = vld [vmem:[%s274 + $0x9c] sm:$0x1]
          %v318 = vsel %vm277, 0, %v317
          %319 = vst [vmem:[%s274 + $0x9c] sm:$0x1] %v318
          %v320 = vld [vmem:[%s274 + $0xa8] sm:$0x1]
          %v321 = vsel %vm277, 0, %v320
          %322 = vst [vmem:[%s274 + $0xa8] sm:$0x1] %v321
          %v323 = vld [vmem:[%s274 + $0xb4] sm:$0x1]
          %v324 = vsel %vm277, 0, %v323
          %325 = vst [vmem:[%s274 + $0xb4] sm:$0x1] %v324
          %vm326 = vsmask.f32 7938
          %vm327 = vmand %vm275, %vm326
          %v328 = vld [vmem:[%s274 + $0x8] sm:$0x1]
          %v329 = vsel %vm327, 0, %v328
          %330 = vst [vmem:[%s274 + $0x8] sm:$0x1] %v329
          %v331 = vld [vmem:[%s274 + $0x14] sm:$0x1]
          %v332 = vsel %vm327, 0, %v331
          %333 = vst [vmem:[%s274 + $0x14] sm:$0x1] %v332
          %v334 = vld [vmem:[%s274 + $0x20] sm:$0x1]
          %v335 = vsel %vm327, 0, %v334
          %336 = vst [vmem:[%s274 + $0x20] sm:$0x1] %v335
          %v337 = vld [vmem:[%s274 + $0x2c] sm:$0x1]
          %v338 = vsel %vm327, 0, %v337
          %339 = vst [vmem:[%s274 + $0x2c] sm:$0x1] %v338
          %v340 = vld [vmem:[%s274 + $0x38] sm:$0x1]
          %v341 = vsel %vm327, 0, %v340
          %342 = vst [vmem:[%s274 + $0x38] sm:$0x1] %v341
          %v343 = vld [vmem:[%s274 + $0x44] sm:$0x1]
          %v344 = vsel %vm327, 0, %v343
          %345 = vst [vmem:[%s274 + $0x44] sm:$0x1] %v344
          %v346 = vld [vmem:[%s274 + $0x50] sm:$0x1]
          %v347 = vsel %vm327, 0, %v346
          %348 = vst [vmem:[%s274 + $0x50] sm:$0x1] %v347
          %v349 = vld [vmem:[%s274 + $0x5c] sm:$0x1]
          %v350 = vsel %vm327, 0, %v349
          %351 = vst [vmem:[%s274 + $0x5c] sm:$0x1] %v350
          %v352 = vld [vmem:[%s274 + $0x68] sm:$0x1]
          %v353 = vsel %vm327, 0, %v352
          %354 = vst [vmem:[%s274 + $0x68] sm:$0x1] %v353
          %v355 = vld [vmem:[%s274 + $0x74] sm:$0x1]
          %v356 = vsel %vm327, 0, %v355
          %357 = vst [vmem:[%s274 + $0x74] sm:$0x1] %v356
          %v358 = vld [vmem:[%s274 + $0x80] sm:$0x1]
          %v359 = vsel %vm327, 0, %v358
          %360 = vst [vmem:[%s274 + $0x80] sm:$0x1] %v359
          %v361 = vld [vmem:[%s274 + $0x8c] sm:$0x1]
          %v362 = vsel %vm327, 0, %v361
          %363 = vst [vmem:[%s274 + $0x8c] sm:$0x1] %v362
          %v364 = vld [vmem:[%s274 + $0x98] sm:$0x1]
          %v365 = vsel %vm327, 0, %v364
          %366 = vst [vmem:[%s274 + $0x98] sm:$0x1] %v365
          %v367 = vld [vmem:[%s274 + $0xa4] sm:$0x1]
          %v368 = vsel %vm327, 0, %v367
          %369 = vst [vmem:[%s274 + $0xa4] sm:$0x1] %v368
          %v370 = vld [vmem:[%s274 + $0xb0] sm:$0x1]
          %v371 = vsel %vm327, 0, %v370
          %372 = vst [vmem:[%s274 + $0xb0] sm:$0x1] %v371
          %v373 = vld [vmem:[%s274 + $0xbc] sm:$0x1]
          %v374 = vsel %vm327, 0, %v373
          %375 = vst [vmem:[%s274 + $0xbc] sm:$0x1] %v374
          %v376 = vld [vmem:[%s224] sm:$0xf]
          %v377 = vld [vmem:[%s224 + $0x4] sm:$0xf]
          %v378 = vld [vmem:[%s224 + $0x8] sm:$0xf]
          %v379 = vld [vmem:[%s224 + $0xc] sm:$0xf]
          %v380 = vld [vmem:[%s224 + $0x10] sm:$0xf]
          %v381 = vld [vmem:[%s224 + $0x14] sm:$0xf]
          %v382 = vld [vmem:[%s224 + $0x18] sm:$0xf]
          %v383 = vld [vmem:[%s224 + $0x1c] sm:$0xf]
          %v384 = vld [vmem:[%s224 + $0x20] sm:$0xf]
          %v385 = vld [vmem:[%s224 + $0x24] sm:$0xf]
          %v386 = vld [vmem:[%s224 + $0x28] sm:$0xf]
          %v387 = vld [vmem:[%s224 + $0x2c] sm:$0xf]
          %v388 = vld [vmem:[%s224 + $0x30] sm:$0xf]
          %v389 = vld [vmem:[%s224 + $0x34] sm:$0xf]
          %v390 = vld [vmem:[%s224 + $0x38] sm:$0xf]
          %v391 = vld [vmem:[%s224 + $0x3c] sm:$0xf]
          %v392 = vld [vmem:[%s224 + $0x40] sm:$0xf]
          %v393 = vld [vmem:[%s224 + $0x44] sm:$0xf]
          %v394 = vld [vmem:[%s224 + $0x48] sm:$0xf]
          %v395 = vld [vmem:[%s224 + $0x4c] sm:$0xf]
          %v396 = vld [vmem:[%s224 + $0x50] sm:$0xf]
          %v397 = vld [vmem:[%s224 + $0x54] sm:$0xf]
          %v398 = vld [vmem:[%s224 + $0x58] sm:$0xf]
          %v399 = vld [vmem:[%s224 + $0x5c] sm:$0xf]
          %v400 = vld [vmem:[%s224 + $0x60] sm:$0xf]
          %v401 = vld [vmem:[%s224 + $0x64] sm:$0xf]
          %v402 = vld [vmem:[%s224 + $0x68] sm:$0xf]
          %v403 = vld [vmem:[%s224 + $0x6c] sm:$0xf]
          %v404 = vld [vmem:[%s224 + $0x70] sm:$0xf]
          %v405 = vld [vmem:[%s224 + $0x74] sm:$0xf]
          %v406 = vld [vmem:[%s224 + $0x78] sm:$0xf]
          %v407 = vld [vmem:[%s224 + $0x7c] sm:$0xf]
          %vm408 = vsmask.f32 4368
          %vm409 = vmor %vm276, %vm408
          %v411 = vshrl.u32 %v376, 16
          %v413 = vrot.slane %v411, 7
          %v414 = vshll.u32 %v376, 16
          %v416 = vor.u32 %v413, %v414
          %v417 = vrot.slane %v413, 4
          %v419 = vshrl.u32 %v377, 16
          %v421 = vrot.slane %v419, 7
          %v422 = vshll.u32 %v377, 16
          %v424 = vor.u32 %v421, %v422
          %v425 = vsel %vm409, %v417, %v424
          %v426 = vrot.slane %v421, 4
          %v428 = vshrl.u32 %v378, 16
          %v430 = vrot.slane %v428, 7
          %v431 = vshll.u32 %v378, 16
          %v433 = vor.u32 %v430, %v431
          %v434 = vrot.slane %v430, 4
          %v436 = vshrl.u32 %v379, 16
          %v438 = vrot.slane %v436, 7
          %v439 = vshll.u32 %v379, 16
          %v441 = vor.u32 %v438, %v439
          %v442 = vsel %vm409, %v434, %v441
          %v443 = vrot.slane %v438, 4
          %v445 = vshrl.u32 %v380, 16
          %v447 = vrot.slane %v445, 7
          %v448 = vshll.u32 %v380, 16
          %v450 = vor.u32 %v447, %v448
          %v451 = vrot.slane %v447, 4
          %v453 = vshrl.u32 %v381, 16
          %v455 = vrot.slane %v453, 7
          %v456 = vshll.u32 %v381, 16
          %v458 = vor.u32 %v455, %v456
          %v459 = vsel %vm409, %v451, %v458
          %v460 = vrot.slane %v455, 4
          %v462 = vshrl.u32 %v382, 16
          %v464 = vrot.slane %v462, 7
          %v465 = vshll.u32 %v382, 16
          %v467 = vor.u32 %v464, %v465
          %v468 = vrot.slane %v464, 4
          %v470 = vshrl.u32 %v383, 16
          %v472 = vrot.slane %v470, 7
          %v473 = vshll.u32 %v383, 16
          %v475 = vor.u32 %v472, %v473
          %v476 = vsel %vm409, %v468, %v475
          %v477 = vrot.slane %v472, 4
          %v479 = vshrl.u32 %v384, 16
          %v481 = vrot.slane %v479, 7
          %v482 = vshll.u32 %v384, 16
          %v484 = vor.u32 %v481, %v482
          %v485 = vrot.slane %v481, 4
          %v487 = vshrl.u32 %v385, 16
          %v489 = vrot.slane %v487, 7
          %v490 = vshll.u32 %v385, 16
          %v492 = vor.u32 %v489, %v490
          %v493 = vsel %vm409, %v485, %v492
          %v494 = vrot.slane %v489, 4
          %v496 = vshrl.u32 %v386, 16
          %v498 = vrot.slane %v496, 7
          %v499 = vshll.u32 %v386, 16
          %v501 = vor.u32 %v498, %v499
          %v502 = vrot.slane %v498, 4
          %v504 = vshrl.u32 %v387, 16
          %v506 = vrot.slane %v504, 7
          %v507 = vshll.u32 %v387, 16
          %v509 = vor.u32 %v506, %v507
          %v510 = vsel %vm409, %v502, %v509
          %v511 = vrot.slane %v506, 4
          %v513 = vshrl.u32 %v388, 16
          %v515 = vrot.slane %v513, 7
          %v516 = vshll.u32 %v388, 16
          %v518 = vor.u32 %v515, %v516
          %v519 = vrot.slane %v515, 4
          %v521 = vshrl.u32 %v389, 16
          %v523 = vrot.slane %v521, 7
          %v524 = vshll.u32 %v389, 16
          %v526 = vor.u32 %v523, %v524
          %v527 = vsel %vm409, %v519, %v526
          %v528 = vrot.slane %v523, 4
          %v530 = vshrl.u32 %v390, 16
          %v532 = vrot.slane %v530, 7
          %v533 = vshll.u32 %v390, 16
          %v535 = vor.u32 %v532, %v533
          %v536 = vrot.slane %v532, 4
          %v538 = vshrl.u32 %v391, 16
          %v540 = vrot.slane %v538, 7
          %v541 = vshll.u32 %v391, 16
          %v543 = vor.u32 %v540, %v541
          %v544 = vsel %vm409, %v536, %v543
          %v545 = vrot.slane %v540, 4
          %v547 = vshrl.u32 %v392, 16
          %v549 = vrot.slane %v547, 7
          %v550 = vshll.u32 %v392, 16
          %v552 = vor.u32 %v549, %v550
          %v553 = vrot.slane %v549, 4
          %v555 = vshrl.u32 %v393, 16
          %v557 = vrot.slane %v555, 7
          %v558 = vshll.u32 %v393, 16
          %v560 = vor.u32 %v557, %v558
          %v561 = vsel %vm409, %v553, %v560
          %v562 = vrot.slane %v557, 4
          %v564 = vshrl.u32 %v394, 16
          %v566 = vrot.slane %v564, 7
          %v567 = vshll.u32 %v394, 16
          %v569 = vor.u32 %v566, %v567
          %v570 = vrot.slane %v566, 4
          %v572 = vshrl.u32 %v395, 16
          %v574 = vrot.slane %v572, 7
          %v575 = vshll.u32 %v395, 16
          %v577 = vor.u32 %v574, %v575
          %v578 = vsel %vm409, %v570, %v577
          %v579 = vrot.slane %v574, 4
          %v581 = vshrl.u32 %v396, 16
          %v583 = vrot.slane %v581, 7
          %v584 = vshll.u32 %v396, 16
          %v586 = vor.u32 %v583, %v584
          %v587 = vrot.slane %v583, 4
          %v589 = vshrl.u32 %v397, 16
          %v591 = vrot.slane %v589, 7
          %v592 = vshll.u32 %v397, 16
          %v594 = vor.u32 %v591, %v592
          %v595 = vsel %vm409, %v587, %v594
          %v596 = vrot.slane %v591, 4
          %v598 = vshrl.u32 %v398, 16
          %v600 = vrot.slane %v598, 7
          %v601 = vshll.u32 %v398, 16
          %v603 = vor.u32 %v600, %v601
          %v604 = vrot.slane %v600, 4
          %v606 = vshrl.u32 %v399, 16
          %v608 = vrot.slane %v606, 7
          %v609 = vshll.u32 %v399, 16
          %v611 = vor.u32 %v608, %v609
          %v612 = vsel %vm409, %v604, %v611
          %v613 = vrot.slane %v608, 4
          %v615 = vshrl.u32 %v400, 16
          %v617 = vrot.slane %v615, 7
          %v618 = vshll.u32 %v400, 16
          %v620 = vor.u32 %v617, %v618
          %v621 = vrot.slane %v617, 4
          %v623 = vshrl.u32 %v401, 16
          %v625 = vrot.slane %v623, 7
          %v626 = vshll.u32 %v401, 16
          %v628 = vor.u32 %v625, %v626
          %v629 = vsel %vm409, %v621, %v628
          %v630 = vrot.slane %v625, 4
          %v632 = vshrl.u32 %v402, 16
          %v634 = vrot.slane %v632, 7
          %v635 = vshll.u32 %v402, 16
          %v637 = vor.u32 %v634, %v635
          %v638 = vrot.slane %v634, 4
          %v640 = vshrl.u32 %v403, 16
          %v642 = vrot.slane %v640, 7
          %v643 = vshll.u32 %v403, 16
          %v645 = vor.u32 %v642, %v643
          %v646 = vsel %vm409, %v638, %v645
          %v647 = vrot.slane %v642, 4
          %v649 = vshrl.u32 %v404, 16
          %v651 = vrot.slane %v649, 7
          %v652 = vshll.u32 %v404, 16
          %v654 = vor.u32 %v651, %v652
          %v655 = vrot.slane %v651, 4
          %v657 = vshrl.u32 %v405, 16
          %v659 = vrot.slane %v657, 7
          %v660 = vshll.u32 %v405, 16
          %v662 = vor.u32 %v659, %v660
          %v663 = vsel %vm409, %v655, %v662
          %v664 = vrot.slane %v659, 4
          %v666 = vshrl.u32 %v406, 16
          %v668 = vrot.slane %v666, 7
          %v669 = vshll.u32 %v406, 16
          %v671 = vor.u32 %v668, %v669
          %v672 = vrot.slane %v668, 4
          %v674 = vshrl.u32 %v407, 16
          %v676 = vrot.slane %v674, 7
          %v677 = vshll.u32 %v407, 16
          %v679 = vor.u32 %v676, %v677
          %v680 = vsel %vm409, %v672, %v679
          %v681 = vrot.slane %v676, 4
          %vm730 = vcmask 257024
          %vm731 = vmand %vm730, %vm326
          %v732 = vld [vmem:[%s274] sm:$0xf]
          %v733 = vsel %vm731, %v416, %v732
          %734 = vst [vmem:[%s274] sm:$0xf] %v733
          %735 = vst.msk [vmem:[%s274 + $0x4] sm:$0xf] %vm265, %v425
          %v736 = vld [vmem:[%s274 + $0x8] sm:$0x1]
          %v737 = vsel %vm277, %v426, %v736
          %738 = vst [vmem:[%s274 + $0x8] sm:$0x1] %v737
          %v739 = vld [vmem:[%s274 + $0xc] sm:$0xf]
          %v740 = vsel %vm731, %v433, %v739
          %741 = vst [vmem:[%s274 + $0xc] sm:$0xf] %v740
          %742 = vst.msk [vmem:[%s274 + $0x10] sm:$0xf] %vm265, %v442
          %v743 = vld [vmem:[%s274 + $0x14] sm:$0x1]
          %v744 = vsel %vm277, %v443, %v743
          %745 = vst [vmem:[%s274 + $0x14] sm:$0x1] %v744
          %v746 = vld [vmem:[%s274 + $0x18] sm:$0xf]
          %v747 = vsel %vm731, %v450, %v746
          %748 = vst [vmem:[%s274 + $0x18] sm:$0xf] %v747
          %749 = vst.msk [vmem:[%s274 + $0x1c] sm:$0xf] %vm265, %v459
          %v750 = vld [vmem:[%s274 + $0x20] sm:$0x1]
          %v751 = vsel %vm277, %v460, %v750
          %752 = vst [vmem:[%s274 + $0x20] sm:$0x1] %v751
          %v753 = vld [vmem:[%s274 + $0x24] sm:$0xf]
          %v754 = vsel %vm731, %v467, %v753
          %755 = vst [vmem:[%s274 + $0x24] sm:$0xf] %v754
          %756 = vst.msk [vmem:[%s274 + $0x28] sm:$0xf] %vm265, %v476
          %v757 = vld [vmem:[%s274 + $0x2c] sm:$0x1]
          %v758 = vsel %vm277, %v477, %v757
          %759 = vst [vmem:[%s274 + $0x2c] sm:$0x1] %v758
          %v760 = vld [vmem:[%s274 + $0x30] sm:$0xf]
          %v761 = vsel %vm731, %v484, %v760
          %762 = vst [vmem:[%s274 + $0x30] sm:$0xf] %v761
          %763 = vst.msk [vmem:[%s274 + $0x34] sm:$0xf] %vm265, %v493
          %v764 = vld [vmem:[%s274 + $0x38] sm:$0x1]
          %v765 = vsel %vm277, %v494, %v764
          %766 = vst [vmem:[%s274 + $0x38] sm:$0x1] %v765
          %v767 = vld [vmem:[%s274 + $0x3c] sm:$0xf]
          %v768 = vsel %vm731, %v501, %v767
          %769 = vst [vmem:[%s274 + $0x3c] sm:$0xf] %v768
          %770 = vst.msk [vmem:[%s274 + $0x40] sm:$0xf] %vm265, %v510
          %v771 = vld [vmem:[%s274 + $0x44] sm:$0x1]
          %v772 = vsel %vm277, %v511, %v771
          %773 = vst [vmem:[%s274 + $0x44] sm:$0x1] %v772
          %v774 = vld [vmem:[%s274 + $0x48] sm:$0xf]
          %v775 = vsel %vm731, %v518, %v774
          %776 = vst [vmem:[%s274 + $0x48] sm:$0xf] %v775
          %777 = vst.msk [vmem:[%s274 + $0x4c] sm:$0xf] %vm265, %v527
          %v778 = vld [vmem:[%s274 + $0x50] sm:$0x1]
          %v779 = vsel %vm277, %v528, %v778
          %780 = vst [vmem:[%s274 + $0x50] sm:$0x1] %v779
          %v781 = vld [vmem:[%s274 + $0x54] sm:$0xf]
          %v782 = vsel %vm731, %v535, %v781
          %783 = vst [vmem:[%s274 + $0x54] sm:$0xf] %v782
          %784 = vst.msk [vmem:[%s274 + $0x58] sm:$0xf] %vm265, %v544
          %v785 = vld [vmem:[%s274 + $0x5c] sm:$0x1]
          %v786 = vsel %vm277, %v545, %v785
          %787 = vst [vmem:[%s274 + $0x5c] sm:$0x1] %v786
          %v788 = vld [vmem:[%s274 + $0x60] sm:$0xf]
          %v789 = vsel %vm731, %v552, %v788
          %790 = vst [vmem:[%s274 + $0x60] sm:$0xf] %v789
          %791 = vst.msk [vmem:[%s274 + $0x64] sm:$0xf] %vm265, %v561
          %v792 = vld [vmem:[%s274 + $0x68] sm:$0x1]
          %v793 = vsel %vm277, %v562, %v792
          %794 = vst [vmem:[%s274 + $0x68] sm:$0x1] %v793
          %v795 = vld [vmem:[%s274 + $0x6c] sm:$0xf]
          %v796 = vsel %vm731, %v569, %v795
          %797 = vst [vmem:[%s274 + $0x6c] sm:$0xf] %v796
          %798 = vst.msk [vmem:[%s274 + $0x70] sm:$0xf] %vm265, %v578
          %v799 = vld [vmem:[%s274 + $0x74] sm:$0x1]
          %v800 = vsel %vm277, %v579, %v799
          %801 = vst [vmem:[%s274 + $0x74] sm:$0x1] %v800
          %v802 = vld [vmem:[%s274 + $0x78] sm:$0xf]
          %v803 = vsel %vm731, %v586, %v802
          %804 = vst [vmem:[%s274 + $0x78] sm:$0xf] %v803
          %805 = vst.msk [vmem:[%s274 + $0x7c] sm:$0xf] %vm265, %v595
          %v806 = vld [vmem:[%s274 + $0x80] sm:$0x1]
          %v807 = vsel %vm277, %v596, %v806
          %808 = vst [vmem:[%s274 + $0x80] sm:$0x1] %v807
          %v809 = vld [vmem:[%s274 + $0x84] sm:$0xf]
          %v810 = vsel %vm731, %v603, %v809
          %811 = vst [vmem:[%s274 + $0x84] sm:$0xf] %v810
          %812 = vst.msk [vmem:[%s274 + $0x88] sm:$0xf] %vm265, %v612
          %v813 = vld [vmem:[%s274 + $0x8c] sm:$0x1]
          %v814 = vsel %vm277, %v613, %v813
          %815 = vst [vmem:[%s274 + $0x8c] sm:$0x1] %v814
          %v816 = vld [vmem:[%s274 + $0x90] sm:$0xf]
          %v817 = vsel %vm731, %v620, %v816
          %818 = vst [vmem:[%s274 + $0x90] sm:$0xf] %v817
          %819 = vst.msk [vmem:[%s274 + $0x94] sm:$0xf] %vm265, %v629
          %v820 = vld [vmem:[%s274 + $0x98] sm:$0x1]
          %v821 = vsel %vm277, %v630, %v820
          %822 = vst [vmem:[%s274 + $0x98] sm:$0x1] %v821
          %v823 = vld [vmem:[%s274 + $0x9c] sm:$0xf]
          %v824 = vsel %vm731, %v637, %v823
          %825 = vst [vmem:[%s274 + $0x9c] sm:$0xf] %v824
          %826 = vst.msk [vmem:[%s274 + $0xa0] sm:$0xf] %vm265, %v646
          %v827 = vld [vmem:[%s274 + $0xa4] sm:$0x1]
          %v828 = vsel %vm277, %v647, %v827
          %829 = vst [vmem:[%s274 + $0xa4] sm:$0x1] %v828
          %v830 = vld [vmem:[%s274 + $0xa8] sm:$0xf]
          %v831 = vsel %vm731, %v654, %v830
          %832 = vst [vmem:[%s274 + $0xa8] sm:$0xf] %v831
          %833 = vst.msk [vmem:[%s274 + $0xac] sm:$0xf] %vm265, %v663
          %v834 = vld [vmem:[%s274 + $0xb0] sm:$0x1]
          %v835 = vsel %vm277, %v664, %v834
          %836 = vst [vmem:[%s274 + $0xb0] sm:$0x1] %v835
          %v837 = vld [vmem:[%s274 + $0xb4] sm:$0xf]
          %v838 = vsel %vm731, %v671, %v837
          %839 = vst [vmem:[%s274 + $0xb4] sm:$0xf] %v838
          %840 = vst.msk [vmem:[%s274 + $0xb8] sm:$0xf] %vm265, %v680
          %v841 = vld [vmem:[%s274 + $0xbc] sm:$0x1]
          %v842 = vsel %vm277, %v681, %v841
          %843 = vst [vmem:[%s274 + $0xbc] sm:$0x1] %v842
        $region44: #{tpu_custom_call.1} parent=31 // pred_fallthru
          _
        %s844 = smul.u32 %s31, 16
        %s845 = smul.u32 %s844, 3
        %s846 = smul.addr %s845, 4
        %s847 = scalar_lea.vmem [#allocation2], %s846
        %v848 = vld [vmem:[%s847] sm:$0xf]
        %v849 = vld [vmem:[%s847 + $0x4] sm:$0xf]
        %v850 = vld [vmem:[%s847 + $0xc] sm:$0xf]
        %v851 = vld [vmem:[%s847 + $0x10] sm:$0xf]
        %v852 = vld [vmem:[%s847 + $0x18] sm:$0xf]
        %v853 = vld [vmem:[%s847 + $0x1c] sm:$0xf]
        %v854 = vld [vmem:[%s847 + $0x24] sm:$0xf]
        %v855 = vld [vmem:[%s847 + $0x28] sm:$0xf]
        %v856 = vld [vmem:[%s847 + $0x30] sm:$0xf]
        %v857 = vld [vmem:[%s847 + $0x34] sm:$0xf]
        %v858 = vld [vmem:[%s847 + $0x3c] sm:$0xf]
        %v859 = vld [vmem:[%s847 + $0x40] sm:$0xf]
        %v860 = vld [vmem:[%s847 + $0x48] sm:$0xf]
        %v861 = vld [vmem:[%s847 + $0x4c] sm:$0xf]
        %v862 = vld [vmem:[%s847 + $0x54] sm:$0xf]
        %v863 = vld [vmem:[%s847 + $0x58] sm:$0xf]
        %v864 = vld [vmem:[%s847 + $0x60] sm:$0xf]
        %v865 = vld [vmem:[%s847 + $0x64] sm:$0xf]
        %v866 = vld [vmem:[%s847 + $0x6c] sm:$0xf]
        %v867 = vld [vmem:[%s847 + $0x70] sm:$0xf]
        %v868 = vld [vmem:[%s847 + $0x78] sm:$0xf]
        %v869 = vld [vmem:[%s847 + $0x7c] sm:$0xf]
        %v870 = vld [vmem:[%s847 + $0x84] sm:$0xf]
        %v871 = vld [vmem:[%s847 + $0x88] sm:$0xf]
        %v872 = vld [vmem:[%s847 + $0x90] sm:$0xf]
        %v873 = vld [vmem:[%s847 + $0x94] sm:$0xf]
        %v874 = vld [vmem:[%s847 + $0x9c] sm:$0xf]
        %v875 = vld [vmem:[%s847 + $0xa0] sm:$0xf]
        %v876 = vld [vmem:[%s847 + $0xa8] sm:$0xf]
        %v877 = vld [vmem:[%s847 + $0xac] sm:$0xf]
        %v878 = vld [vmem:[%s847 + $0xb4] sm:$0xf]
        %v879 = vld [vmem:[%s847 + $0xb8] sm:$0xf]
        %v880 = vld [vmem:[#allocation6] sm:$0xf]
        %v881 = vld [vmem:[#allocation6 + $0x4] sm:$0xf]
        %v882 = vld [vmem:[#allocation6 + $0x8] sm:$0xf]
        %v883 = vld [vmem:[#allocation6 + $0xc] sm:$0xf]
        %v884 = vld [vmem:[%s847 + $0x8] sm:$0x1]
        %v885 = vld [vmem:[%s847 + $0x14] sm:$0x1]
        %v886 = vld [vmem:[%s847 + $0x20] sm:$0x1]
        %v887 = vld [vmem:[%s847 + $0x2c] sm:$0x1]
        %v888 = vld [vmem:[%s847 + $0x38] sm:$0x1]
        %v889 = vld [vmem:[%s847 + $0x44] sm:$0x1]
        %v890 = vld [vmem:[%s847 + $0x50] sm:$0x1]
        %v891 = vld [vmem:[%s847 + $0x5c] sm:$0x1]
        %v892 = vld [vmem:[%s847 + $0x68] sm:$0x1]
        %v893 = vld [vmem:[%s847 + $0x74] sm:$0x1]
        %v894 = vld [vmem:[%s847 + $0x80] sm:$0x1]
        %v895 = vld [vmem:[%s847 + $0x8c] sm:$0x1]
        %v896 = vld [vmem:[%s847 + $0x98] sm:$0x1]
        %v897 = vld [vmem:[%s847 + $0xa4] sm:$0x1]
        %v898 = vld [vmem:[%s847 + $0xb0] sm:$0x1]
        %v899 = vld [vmem:[%s847 + $0xbc] sm:$0x1]
        %vm900 = vsmask.f32 3328
        %vm901 = vsmask.f32 7440
        %vm902 = vmor %vm900, %vm901
        %v904 = vshrl.u32 %v848, 16
        %v906 = vrot.slane %v904, 4
        %v907 = vshll.u32 %v848, 16
        %v909 = vrot.slane %v907, 5
        %v910 = vor.u32 %v906, %v909
        %v911 = vrot.slane %v910, 4
        %v913 = vshll.u32 %v849, 16
        %v915 = vrot.slane %v913, 5
        %v916 = vsel %vm902, %v911, %v915
        %v917 = vshrl.u32 %v849, 16
        %v919 = vrot.slane %v917, 4
        %v920 = vor.u32 %v919, %v915
        %v921 = vrot.slane %v920, 4
        %v923 = vshll.u32 %v884, 16
        %v925 = vrot.slane %v923, 5
        %v926 = vsel %vm902, %v921, %v925
        %v928 = vshrl.u32 %v850, 16
        %v930 = vrot.slane %v928, 4
        %v931 = vshll.u32 %v850, 16
        %v933 = vrot.slane %v931, 5
        %v934 = vor.u32 %v930, %v933
        %v935 = vrot.slane %v934, 4
        %v937 = vshll.u32 %v851, 16
        %v939 = vrot.slane %v937, 5
        %v940 = vsel %vm902, %v935, %v939
        %v941 = vshrl.u32 %v851, 16
        %v943 = vrot.slane %v941, 4
        %v944 = vor.u32 %v943, %v939
        %v945 = vrot.slane %v944, 4
        %v947 = vshll.u32 %v885, 16
        %v949 = vrot.slane %v947, 5
        %v950 = vsel %vm902, %v945, %v949
        %v952 = vshrl.u32 %v852, 16
        %v954 = vrot.slane %v952, 4
        %v955 = vshll.u32 %v852, 16
        %v957 = vrot.slane %v955, 5
        %v958 = vor.u32 %v954, %v957
        %v959 = vrot.slane %v958, 4
        %v961 = vshll.u32 %v853, 16
        %v963 = vrot.slane %v961, 5
        %v964 = vsel %vm902, %v959, %v963
        %v965 = vshrl.u32 %v853, 16
        %v967 = vrot.slane %v965, 4
        %v968 = vor.u32 %v967, %v963
        %v969 = vrot.slane %v968, 4
        %v971 = vshll.u32 %v886, 16
        %v973 = vrot.slane %v971, 5
        %v974 = vsel %vm902, %v969, %v973
        %v976 = vshrl.u32 %v854, 16
        %v978 = vrot.slane %v976, 4
        %v979 = vshll.u32 %v854, 16
        %v981 = vrot.slane %v979, 5
        %v982 = vor.u32 %v978, %v981
        %v983 = vrot.slane %v982, 4
        %v985 = vshll.u32 %v855, 16
        %v987 = vrot.slane %v985, 5
        %v988 = vsel %vm902, %v983, %v987
        %v989 = vshrl.u32 %v855, 16
        %v991 = vrot.slane %v989, 4
        %v992 = vor.u32 %v991, %v987
        %v993 = vrot.slane %v992, 4
        %v995 = vshll.u32 %v887, 16
        %v997 = vrot.slane %v995, 5
        %v998 = vsel %vm902, %v993, %v997
        %v1000 = vshrl.u32 %v856, 16
        %v1002 = vrot.slane %v1000, 4
        %v1003 = vshll.u32 %v856, 16
        %v1005 = vrot.slane %v1003, 5
        %v1006 = vor.u32 %v1002, %v1005
        %v1007 = vrot.slane %v1006, 4
        %v1009 = vshll.u32 %v857, 16
        %v1011 = vrot.slane %v1009, 5
        %v1012 = vsel %vm902, %v1007, %v1011
        %v1013 = vshrl.u32 %v857, 16
        %v1015 = vrot.slane %v1013, 4
        %v1016 = vor.u32 %v1015, %v1011
        %v1017 = vrot.slane %v1016, 4
        %v1019 = vshll.u32 %v888, 16
        %v1021 = vrot.slane %v1019, 5
        %v1022 = vsel %vm902, %v1017, %v1021
        %v1024 = vshrl.u32 %v858, 16
        %v1026 = vrot.slane %v1024, 4
        %v1027 = vshll.u32 %v858, 16
        %v1029 = vrot.slane %v1027, 5
        %v1030 = vor.u32 %v1026, %v1029
        %v1031 = vrot.slane %v1030, 4
        %v1033 = vshll.u32 %v859, 16
        %v1035 = vrot.slane %v1033, 5
        %v1036 = vsel %vm902, %v1031, %v1035
        %v1037 = vshrl.u32 %v859, 16
        %v1039 = vrot.slane %v1037, 4
        %v1040 = vor.u32 %v1039, %v1035
        %v1041 = vrot.slane %v1040, 4
        %v1043 = vshll.u32 %v889, 16
        %v1045 = vrot.slane %v1043, 5
        %v1046 = vsel %vm902, %v1041, %v1045
        %v1048 = vshrl.u32 %v860, 16
        %v1050 = vrot.slane %v1048, 4
        %v1051 = vshll.u32 %v860, 16
        %v1053 = vrot.slane %v1051, 5
        %v1054 = vor.u32 %v1050, %v1053
        %v1055 = vrot.slane %v1054, 4
        %v1057 = vshll.u32 %v861, 16
        %v1059 = vrot.slane %v1057, 5
        %v1060 = vsel %vm902, %v1055, %v1059
        %v1061 = vshrl.u32 %v861, 16
        %v1063 = vrot.slane %v1061, 4
        %v1064 = vor.u32 %v1063, %v1059
        %v1065 = vrot.slane %v1064, 4
        %v1067 = vshll.u32 %v890, 16
        %v1069 = vrot.slane %v1067, 5
        %v1070 = vsel %vm902, %v1065, %v1069
        %v1072 = vshrl.u32 %v862, 16
        %v1074 = vrot.slane %v1072, 4
        %v1075 = vshll.u32 %v862, 16
        %v1077 = vrot.slane %v1075, 5
        %v1078 = vor.u32 %v1074, %v1077
        %v1079 = vrot.slane %v1078, 4
        %v1081 = vshll.u32 %v863, 16
        %v1083 = vrot.slane %v1081, 5
        %v1084 = vsel %vm902, %v1079, %v1083
        %v1085 = vshrl.u32 %v863, 16
        %v1087 = vrot.slane %v1085, 4
        %v1088 = vor.u32 %v1087, %v1083
        %v1089 = vrot.slane %v1088, 4
        %v1091 = vshll.u32 %v891, 16
        %v1093 = vrot.slane %v1091, 5
        %v1094 = vsel %vm902, %v1089, %v1093
        %v1096 = vshrl.u32 %v864, 16
        %v1098 = vrot.slane %v1096, 4
        %v1099 = vshll.u32 %v864, 16
        %v1101 = vrot.slane %v1099, 5
        %v1102 = vor.u32 %v1098, %v1101
        %v1103 = vrot.slane %v1102, 4
        %v1105 = vshll.u32 %v865, 16
        %v1107 = vrot.slane %v1105, 5
        %v1108 = vsel %vm902, %v1103, %v1107
        %v1109 = vshrl.u32 %v865, 16
        %v1111 = vrot.slane %v1109, 4
        %v1112 = vor.u32 %v1111, %v1107
        %v1113 = vrot.slane %v1112, 4
        %v1115 = vshll.u32 %v892, 16
        %v1117 = vrot.slane %v1115, 5
        %v1118 = vsel %vm902, %v1113, %v1117
        %v1120 = vshrl.u32 %v866, 16
        %v1122 = vrot.slane %v1120, 4
        %v1123 = vshll.u32 %v866, 16
        %v1125 = vrot.slane %v1123, 5
        %v1126 = vor.u32 %v1122, %v1125
        %v1127 = vrot.slane %v1126, 4
        %v1129 = vshll.u32 %v867, 16
        %v1131 = vrot.slane %v1129, 5
        %v1132 = vsel %vm902, %v1127, %v1131
        %v1133 = vshrl.u32 %v867, 16
        %v1135 = vrot.slane %v1133, 4
        %v1136 = vor.u32 %v1135, %v1131
        %v1137 = vrot.slane %v1136, 4
        %v1139 = vshll.u32 %v893, 16
        %v1141 = vrot.slane %v1139, 5
        %v1142 = vsel %vm902, %v1137, %v1141
        %v1144 = vshrl.u32 %v868, 16
        %v1146 = vrot.slane %v1144, 4
        %v1147 = vshll.u32 %v868, 16
        %v1149 = vrot.slane %v1147, 5
        %v1150 = vor.u32 %v1146, %v1149
        %v1151 = vrot.slane %v1150, 4
        %v1153 = vshll.u32 %v869, 16
        %v1155 = vrot.slane %v1153, 5
        %v1156 = vsel %vm902, %v1151, %v1155
        %v1157 = vshrl.u32 %v869, 16
        %v1159 = vrot.slane %v1157, 4
        %v1160 = vor.u32 %v1159, %v1155
        %v1161 = vrot.slane %v1160, 4
        %v1163 = vshll.u32 %v894, 16
        %v1165 = vrot.slane %v1163, 5
        %v1166 = vsel %vm902, %v1161, %v1165
        %v1168 = vshrl.u32 %v870, 16
        %v1170 = vrot.slane %v1168, 4
        %v1171 = vshll.u32 %v870, 16
        %v1173 = vrot.slane %v1171, 5
        %v1174 = vor.u32 %v1170, %v1173
        %v1175 = vrot.slane %v1174, 4
        %v1177 = vshll.u32 %v871, 16
        %v1179 = vrot.slane %v1177, 5
        %v1180 = vsel %vm902, %v1175, %v1179
        %v1181 = vshrl.u32 %v871, 16
        %v1183 = vrot.slane %v1181, 4
        %v1184 = vor.u32 %v1183, %v1179
        %v1185 = vrot.slane %v1184, 4
        %v1187 = vshll.u32 %v895, 16
        %v1189 = vrot.slane %v1187, 5
        %v1190 = vsel %vm902, %v1185, %v1189
        %v1192 = vshrl.u32 %v872, 16
        %v1194 = vrot.slane %v1192, 4
        %v1195 = vshll.u32 %v872, 16
        %v1197 = vrot.slane %v1195, 5
        %v1198 = vor.u32 %v1194, %v1197
        %v1199 = vrot.slane %v1198, 4
        %v1201 = vshll.u32 %v873, 16
        %v1203 = vrot.slane %v1201, 5
        %v1204 = vsel %vm902, %v1199, %v1203
        %v1205 = vshrl.u32 %v873, 16
        %v1207 = vrot.slane %v1205, 4
        %v1208 = vor.u32 %v1207, %v1203
        %v1209 = vrot.slane %v1208, 4
        %v1211 = vshll.u32 %v896, 16
        %v1213 = vrot.slane %v1211, 5
        %v1214 = vsel %vm902, %v1209, %v1213
        %v1216 = vshrl.u32 %v874, 16
        %v1218 = vrot.slane %v1216, 4
        %v1219 = vshll.u32 %v874, 16
        %v1221 = vrot.slane %v1219, 5
        %v1222 = vor.u32 %v1218, %v1221
        %v1223 = vrot.slane %v1222, 4
        %v1225 = vshll.u32 %v875, 16
        %v1227 = vrot.slane %v1225, 5
        %v1228 = vsel %vm902, %v1223, %v1227
        %v1229 = vshrl.u32 %v875, 16
        %v1231 = vrot.slane %v1229, 4
        %v1232 = vor.u32 %v1231, %v1227
        %v1233 = vrot.slane %v1232, 4
        %v1235 = vshll.u32 %v897, 16
        %v1237 = vrot.slane %v1235, 5
        %v1238 = vsel %vm902, %v1233, %v1237
        %v1240 = vshrl.u32 %v876, 16
        %v1242 = vrot.slane %v1240, 4
        %v1243 = vshll.u32 %v876, 16
        %v1245 = vrot.slane %v1243, 5
        %v1246 = vor.u32 %v1242, %v1245
        %v1247 = vrot.slane %v1246, 4
        %v1249 = vshll.u32 %v877, 16
        %v1251 = vrot.slane %v1249, 5
        %v1252 = vsel %vm902, %v1247, %v1251
        %v1253 = vshrl.u32 %v877, 16
        %v1255 = vrot.slane %v1253, 4
        %v1256 = vor.u32 %v1255, %v1251
        %v1257 = vrot.slane %v1256, 4
        %v1259 = vshll.u32 %v898, 16
        %v1261 = vrot.slane %v1259, 5
        %v1262 = vsel %vm902, %v1257, %v1261
        %v1264 = vshrl.u32 %v878, 16
        %v1266 = vrot.slane %v1264, 4
        %v1267 = vshll.u32 %v878, 16
        %v1269 = vrot.slane %v1267, 5
        %v1270 = vor.u32 %v1266, %v1269
        %v1271 = vrot.slane %v1270, 4
        %v1273 = vshll.u32 %v879, 16
        %v1275 = vrot.slane %v1273, 5
        %v1276 = vsel %vm902, %v1271, %v1275
        %v1277 = vshrl.u32 %v879, 16
        %v1279 = vrot.slane %v1277, 4
        %v1280 = vor.u32 %v1279, %v1275
        %v1281 = vrot.slane %v1280, 4
        %v1283 = vshll.u32 %v899, 16
        %v1285 = vrot.slane %v1283, 5
        %v1286 = vsel %vm902, %v1281, %v1285
        %s1287 = scalar_lea.vmem [#allocation6], 16
        %v1288 = vld [vmem:[%s1287] sm:$0xf]
        %v1289 = vld [vmem:[%s1287 + $0x4] sm:$0xf]
        %v1290 = vld [vmem:[%s1287 + $0x8] sm:$0xf]
        %v1291 = vld [vmem:[%s1287 + $0xc] sm:$0xf]
        %v1292 = vunpack.c.l.b16 %v916
        %v1293 = vunpack.c.l.b16 %v926
        %v1294 = vunpack.c.l.b16 %v940
        %v1295 = vunpack.c.l.b16 %v950
        %v1296 = vunpack.c.l.b16 %v964
        %v1297 = vunpack.c.l.b16 %v974
        %v1298 = vunpack.c.l.b16 %v988
        %v1299 = vunpack.c.l.b16 %v998
        %v1300 = vunpack.c.l.b16 %v1012
        %v1301 = vunpack.c.l.b16 %v1022
        %v1302 = vunpack.c.l.b16 %v1036
        %v1303 = vunpack.c.l.b16 %v1046
        %v1304 = vunpack.c.l.b16 %v1060
        %v1305 = vunpack.c.l.b16 %v1070
        %v1306 = vunpack.c.l.b16 %v1084
        %v1307 = vunpack.c.l.b16 %v1094
        %v1308 = vunpack.c.l.b16 %v1108
        %v1309 = vunpack.c.l.b16 %v1118
        %v1310 = vunpack.c.l.b16 %v1132
        %v1311 = vunpack.c.l.b16 %v1142
        %v1312 = vunpack.c.l.b16 %v1156
        %v1313 = vunpack.c.l.b16 %v1166
        %v1314 = vunpack.c.l.b16 %v1180
        %v1315 = vunpack.c.l.b16 %v1190
        %v1316 = vunpack.c.l.b16 %v1204
        %v1317 = vunpack.c.l.b16 %v1214
        %v1318 = vunpack.c.l.b16 %v1228
        %v1319 = vunpack.c.l.b16 %v1238
        %v1320 = vunpack.c.l.b16 %v1252
        %v1321 = vunpack.c.l.b16 %v1262
        %v1322 = vunpack.c.l.b16 %v1276
        %v1323 = vunpack.c.l.b16 %v1286
        %v1324 = vpack.c.b16 %v1293, %v1292
        %v1325 = vpack.c.b16 %v1295, %v1294
        %v1326 = vpack.c.b16 %v1297, %v1296
        %v1327 = vpack.c.b16 %v1299, %v1298
        %v1328 = vpack.c.b16 %v1301, %v1300
        %v1329 = vpack.c.b16 %v1303, %v1302
        %v1330 = vpack.c.b16 %v1305, %v1304
        %v1331 = vpack.c.b16 %v1307, %v1306
        %v1332 = vpack.c.b16 %v1309, %v1308
        %v1333 = vpack.c.b16 %v1311, %v1310
        %v1334 = vpack.c.b16 %v1313, %v1312
        %v1335 = vpack.c.b16 %v1315, %v1314
        %v1336 = vpack.c.b16 %v1317, %v1316
        %v1337 = vpack.c.b16 %v1319, %v1318
        %v1338 = vpack.c.b16 %v1321, %v1320
        %v1339 = vpack.c.b16 %v1323, %v1322
        %v1344 = vunpack.c.l.b16 %v1288
        %v1345 = vunpack.c.l.b16 %v1289
        %v1346 = vunpack.c.l.b16 %v1290
        %v1347 = vunpack.c.l.b16 %v1291
        %v1348 = vpack.c.b16 %v1345, %v1344
        %v1349 = vpack.c.b16 %v1347, %v1346
        %vm1352 = vcmask 261120
        %v1354 = vsel %vm1352, %v1324, 0
        %v1357 = vsel %vm1352, %v1325, 0
        %v1360 = vsel %vm1352, %v1326, 0
        %v1363 = vsel %vm1352, %v1327, 0
        %v1366 = vsel %vm1352, %v1328, 0
        %v1369 = vsel %vm1352, %v1329, 0
        %v1372 = vsel %vm1352, %v1330, 0
        %v1375 = vsel %vm1352, %v1331, 0
        %v1378 = vsel %vm1352, %v1332, 0
        %v1381 = vsel %vm1352, %v1333, 0
        %v1384 = vsel %vm1352, %v1334, 0
        %v1387 = vsel %vm1352, %v1335, 0
        %v1390 = vsel %vm1352, %v1336, 0
        %v1393 = vsel %vm1352, %v1337, 0
        %v1396 = vsel %vm1352, %v1338, 0
        %v1399 = vsel %vm1352, %v1339, 0
        %1401 = vmatprep.subr.bf16.mxu0 0
        %1402 = vmatpush1.bf16.msra.mxu0 0
        %1403 = vmatprep.subr.bf16.mxu0 0
        %1404 = vmatpush1.bf16.msra.mxu0 0
        %1405 = vmatprep.subr.bf16.mxu0 0
        %1406 = vmatpush1.bf16.msra.mxu0 0
        %1407 = vmatprep.subr.bf16.mxu0 0
        %1408 = vmatpush1.bf16.msra.mxu0 0
        %1409 = vmatprep.subr.bf16.mxu0 0
        %1410 = vmatpush1.bf16.msra.mxu0 0
        %1411 = vmatprep.subr.bf16.mxu0 0
        %1412 = vmatpush1.bf16.msra.mxu0 0
        %1413 = vmatprep.subr.bf16.mxu0 0
        %1414 = vmatpush1.bf16.msra.mxu0 %v1349
        %1415 = vmatprep.subr.bf16.mxu0 0
        %1416 = vmatpush1.bf16.msra.mxu0 %v1348
        %1417 = vmatprep.subr.bf16.mxu0 0
        %1418 = vmatpush2.bf16.msra.mxu0 0
        %1419 = vmatprep.subr.bf16.mxu0 0
        %1420 = vmatpush2.bf16.msra.mxu0 0
        %1421 = vmatprep.subr.bf16.mxu0 0
        %1422 = vmatpush2.bf16.msra.mxu0 0
        %1423 = vmatprep.subr.bf16.mxu0 0
        %1424 = vmatpush2.bf16.msra.mxu0 0
        %1425 = vmatprep.subr.bf16.mxu0 0
        %1426 = vmatpush2.bf16.msra.mxu0 0
        %1427 = vmatprep.subr.bf16.mxu0 0
        %1428 = vmatpush2.bf16.msra.mxu0 0
        %1429 = vmatprep.subr.bf16.mxu0 0
        %1430 = vmatpush2.bf16.msra.mxu0 0
        %1431 = vmatprep.subr.bf16.mxu0 0
        %1432 = vmatpush2.bf16.msra.mxu0 0
        %1433 = vmatprep.mubr.bf16.mxu0 0
        %1434 = vmatmul.mubr.bf16.gmra.mxu0 %v1354
        %v1435 = vpop.f32.mrf.mxu0
        %v1436 = vadd.f32 0.0, %v1435
        %v1437 = vpop.f32.mrf.mxu0
        %v1438 = vpop.f32.mrf.mxu0
        %v1439 = vadd.f32 0.0, %v1438
        %v1440 = vpop.f32.mrf.mxu0
        %1441 = vmatprep.mubr.bf16.mxu0 0
        %1442 = vmatmul.mubr.bf16.gmra.mxu0 %v1357
        %v1443 = vpop.f32.mrf.mxu0
        %v1444 = vadd.f32 0.0, %v1443
        %v1445 = vpop.f32.mrf.mxu0
        %v1446 = vpop.f32.mrf.mxu0
        %v1447 = vadd.f32 0.0, %v1446
        %v1448 = vpop.f32.mrf.mxu0
        %1449 = vmatprep.mubr.bf16.mxu0 0
        %1450 = vmatmul.mubr.bf16.gmra.mxu0 %v1360
        %v1451 = vpop.f32.mrf.mxu0
        %v1452 = vadd.f32 0.0, %v1451
        %v1453 = vpop.f32.mrf.mxu0
        %v1454 = vpop.f32.mrf.mxu0
        %v1455 = vadd.f32 0.0, %v1454
        %v1456 = vpop.f32.mrf.mxu0
        %1457 = vmatprep.mubr.bf16.mxu0 0
        %1458 = vmatmul.mubr.bf16.gmra.mxu0 %v1363
        %v1459 = vpop.f32.mrf.mxu0
        %v1460 = vadd.f32 0.0, %v1459
        %v1461 = vpop.f32.mrf.mxu0
        %v1462 = vpop.f32.mrf.mxu0
        %v1463 = vadd.f32 0.0, %v1462
        %v1464 = vpop.f32.mrf.mxu0
        %1465 = vmatprep.mubr.bf16.mxu0 0
        %1466 = vmatmul.mubr.bf16.gmra.mxu0 %v1366
        %v1467 = vpop.f32.mrf.mxu0
        %v1468 = vadd.f32 0.0, %v1467
        %v1469 = vpop.f32.mrf.mxu0
        %v1470 = vpop.f32.mrf.mxu0
        %v1471 = vadd.f32 0.0, %v1470
        %v1472 = vpop.f32.mrf.mxu0
        %1473 = vmatprep.mubr.bf16.mxu0 0
        %1474 = vmatmul.mubr.bf16.gmra.mxu0 %v1369
        %v1475 = vpop.f32.mrf.mxu0
        %v1476 = vadd.f32 0.0, %v1475
        %v1477 = vpop.f32.mrf.mxu0
        %v1478 = vpop.f32.mrf.mxu0
        %v1479 = vadd.f32 0.0, %v1478
        %v1480 = vpop.f32.mrf.mxu0
        %1481 = vmatprep.mubr.bf16.mxu0 0
        %1482 = vmatmul.mubr.bf16.gmra.mxu0 %v1372
        %v1483 = vpop.f32.mrf.mxu0
        %v1484 = vadd.f32 0.0, %v1483
        %v1485 = vpop.f32.mrf.mxu0
        %v1486 = vpop.f32.mrf.mxu0
        %v1487 = vadd.f32 0.0, %v1486
        %v1488 = vpop.f32.mrf.mxu0
        %1489 = vmatprep.mubr.bf16.mxu0 0
        %1490 = vmatmul.mubr.bf16.gmra.mxu0 %v1375
        %v1491 = vpop.f32.mrf.mxu0
        %v1492 = vadd.f32 0.0, %v1491
        %v1493 = vpop.f32.mrf.mxu0
        %v1494 = vpop.f32.mrf.mxu0
        %v1495 = vadd.f32 0.0, %v1494
        %v1496 = vpop.f32.mrf.mxu0
        %1497 = vmatprep.mubr.bf16.mxu0 0
        %1498 = vmatmul.mubr.bf16.gmra.mxu0 %v1378
        %v1499 = vpop.f32.mrf.mxu0
        %v1500 = vadd.f32 0.0, %v1499
        %v1501 = vpop.f32.mrf.mxu0
        %v1502 = vpop.f32.mrf.mxu0
        %v1503 = vadd.f32 0.0, %v1502
        %v1504 = vpop.f32.mrf.mxu0
        %1505 = vmatprep.mubr.bf16.mxu0 0
        %1506 = vmatmul.mubr.bf16.gmra.mxu0 %v1381
        %v1507 = vpop.f32.mrf.mxu0
        %v1508 = vadd.f32 0.0, %v1507
        %v1509 = vpop.f32.mrf.mxu0
        %v1510 = vpop.f32.mrf.mxu0
        %v1511 = vadd.f32 0.0, %v1510
        %v1512 = vpop.f32.mrf.mxu0
        %1513 = vmatprep.mubr.bf16.mxu0 0
        %1514 = vmatmul.mubr.bf16.gmra.mxu0 %v1384
        %v1515 = vpop.f32.mrf.mxu0
        %v1516 = vadd.f32 0.0, %v1515
        %v1517 = vpop.f32.mrf.mxu0
        %v1518 = vpop.f32.mrf.mxu0
        %v1519 = vadd.f32 0.0, %v1518
        %v1520 = vpop.f32.mrf.mxu0
        %1521 = vmatprep.mubr.bf16.mxu0 0
        %1522 = vmatmul.mubr.bf16.gmra.mxu0 %v1387
        %v1523 = vpop.f32.mrf.mxu0
        %v1524 = vadd.f32 0.0, %v1523
        %v1525 = vpop.f32.mrf.mxu0
        %v1526 = vpop.f32.mrf.mxu0
        %v1527 = vadd.f32 0.0, %v1526
        %v1528 = vpop.f32.mrf.mxu0
        %1529 = vmatprep.mubr.bf16.mxu0 0
        %1530 = vmatmul.mubr.bf16.gmra.mxu0 %v1390
        %v1531 = vpop.f32.mrf.mxu0
        %v1532 = vadd.f32 0.0, %v1531
        %v1533 = vpop.f32.mrf.mxu0
        %v1534 = vpop.f32.mrf.mxu0
        %v1535 = vadd.f32 0.0, %v1534
        %v1536 = vpop.f32.mrf.mxu0
        %1537 = vmatprep.mubr.bf16.mxu0 0
        %1538 = vmatmul.mubr.bf16.gmra.mxu0 %v1393
        %v1539 = vpop.f32.mrf.mxu0
        %v1540 = vadd.f32 0.0, %v1539
        %v1541 = vpop.f32.mrf.mxu0
        %v1542 = vpop.f32.mrf.mxu0
        %v1543 = vadd.f32 0.0, %v1542
        %v1544 = vpop.f32.mrf.mxu0
        %1545 = vmatprep.mubr.bf16.mxu0 0
        %1546 = vmatmul.mubr.bf16.gmra.mxu0 %v1396
        %v1547 = vpop.f32.mrf.mxu0
        %v1548 = vadd.f32 0.0, %v1547
        %v1549 = vpop.f32.mrf.mxu0
        %v1550 = vpop.f32.mrf.mxu0
        %v1551 = vadd.f32 0.0, %v1550
        %v1552 = vpop.f32.mrf.mxu0
        %1553 = vmatprep.mubr.bf16.mxu0 0
        %1554 = vmatmul.mubr.bf16.gmra.mxu0 %v1399
        %v1555 = vpop.f32.mrf.mxu0
        %v1556 = vadd.f32 0.0, %v1555
        %v1557 = vpop.f32.mrf.mxu0
        %v1558 = vpop.f32.mrf.mxu0
        %v1559 = vadd.f32 0.0, %v1558
        %v1560 = vpop.f32.mrf.mxu0
        %1561 = vdwg.mxu0
        %v1594 = vunpack.c.l.b16 %v848
        %v1595 = vunpack.c.l.b16 %v849
        %v1596 = vunpack.c.l.b16 %v850
        %v1597 = vunpack.c.l.b16 %v851
        %v1598 = vunpack.c.l.b16 %v852
        %v1599 = vunpack.c.l.b16 %v853
        %v1600 = vunpack.c.l.b16 %v854
        %v1601 = vunpack.c.l.b16 %v855
        %v1602 = vunpack.c.l.b16 %v856
        %v1603 = vunpack.c.l.b16 %v857
        %v1604 = vunpack.c.l.b16 %v858
        %v1605 = vunpack.c.l.b16 %v859
        %v1606 = vunpack.c.l.b16 %v860
        %v1607 = vunpack.c.l.b16 %v861
        %v1608 = vunpack.c.l.b16 %v862
        %v1609 = vunpack.c.l.b16 %v863
        %v1610 = vunpack.c.l.b16 %v864
        %v1611 = vunpack.c.l.b16 %v865
        %v1612 = vunpack.c.l.b16 %v866
        %v1613 = vunpack.c.l.b16 %v867
        %v1614 = vunpack.c.l.b16 %v868
        %v1615 = vunpack.c.l.b16 %v869
        %v1616 = vunpack.c.l.b16 %v870
        %v1617 = vunpack.c.l.b16 %v871
        %v1618 = vunpack.c.l.b16 %v872
        %v1619 = vunpack.c.l.b16 %v873
        %v1620 = vunpack.c.l.b16 %v874
        %v1621 = vunpack.c.l.b16 %v875
        %v1622 = vunpack.c.l.b16 %v876
        %v1623 = vunpack.c.l.b16 %v877
        %v1624 = vunpack.c.l.b16 %v878
        %v1625 = vunpack.c.l.b16 %v879
        %v1626 = vpack.c.b16 %v1595, %v1594
        %v1627 = vpack.c.b16 %v1597, %v1596
        %v1628 = vpack.c.b16 %v1599, %v1598
        %v1629 = vpack.c.b16 %v1601, %v1600
        %v1630 = vpack.c.b16 %v1603, %v1602
        %v1631 = vpack.c.b16 %v1605, %v1604
        %v1632 = vpack.c.b16 %v1607, %v1606
        %v1633 = vpack.c.b16 %v1609, %v1608
        %v1634 = vpack.c.b16 %v1611, %v1610
        %v1635 = vpack.c.b16 %v1613, %v1612
        %v1636 = vpack.c.b16 %v1615, %v1614
        %v1637 = vpack.c.b16 %v1617, %v1616
        %v1638 = vpack.c.b16 %v1619, %v1618
        %v1639 = vpack.c.b16 %v1621, %v1620
        %v1640 = vpack.c.b16 %v1623, %v1622
        %v1641 = vpack.c.b16 %v1625, %v1624
        %v1646 = vunpack.c.l.b16 %v880
        %v1647 = vunpack.c.l.b16 %v881
        %v1648 = vunpack.c.l.b16 %v882
        %v1649 = vunpack.c.l.b16 %v883
        %v1650 = vpack.c.b16 %v1647, %v1646
        %v1651 = vpack.c.b16 %v1649, %v1648
        %v1655 = vsel %vm1352, %v1626, 0
        %v1658 = vsel %vm1352, %v1627, 0
        %v1661 = vsel %vm1352, %v1628, 0
        %v1664 = vsel %vm1352, %v1629, 0
        %v1667 = vsel %vm1352, %v1630, 0
        %v1670 = vsel %vm1352, %v1631, 0
        %v1673 = vsel %vm1352, %v1632, 0
        %v1676 = vsel %vm1352, %v1633, 0
        %v1679 = vsel %vm1352, %v1634, 0
        %v1682 = vsel %vm1352, %v1635, 0
        %v1685 = vsel %vm1352, %v1636, 0
        %v1688 = vsel %vm1352, %v1637, 0
        %v1691 = vsel %vm1352, %v1638, 0
        %v1694 = vsel %vm1352, %v1639, 0
        %v1697 = vsel %vm1352, %v1640, 0
        %v1700 = vsel %vm1352, %v1641, 0
        %1702 = vmatprep.subr.bf16.mxu0 0
        %1703 = vmatpush1.bf16.msra.mxu0 0
        %1704 = vmatprep.subr.bf16.mxu0 0
        %1705 = vmatpush1.bf16.msra.mxu0 0
        %1706 = vmatprep.subr.bf16.mxu0 0
        %1707 = vmatpush1.bf16.msra.mxu0 0
        %1708 = vmatprep.subr.bf16.mxu0 0
        %1709 = vmatpush1.bf16.msra.mxu0 0
        %1710 = vmatprep.subr.bf16.mxu0 0
        %1711 = vmatpush1.bf16.msra.mxu0 0
        %1712 = vmatprep.subr.bf16.mxu0 0
        %1713 = vmatpush1.bf16.msra.mxu0 0
        %1714 = vmatprep.subr.bf16.mxu0 0
        %1715 = vmatpush1.bf16.msra.mxu0 %v1651
        %1716 = vmatprep.subr.bf16.mxu0 0
        %1717 = vmatpush1.bf16.msra.mxu0 %v1650
        %1718 = vmatprep.subr.bf16.mxu0 0
        %1719 = vmatpush2.bf16.msra.mxu0 0
        %1720 = vmatprep.subr.bf16.mxu0 0
        %1721 = vmatpush2.bf16.msra.mxu0 0
        %1722 = vmatprep.subr.bf16.mxu0 0
        %1723 = vmatpush2.bf16.msra.mxu0 0
        %1724 = vmatprep.subr.bf16.mxu0 0
        %1725 = vmatpush2.bf16.msra.mxu0 0
        %1726 = vmatprep.subr.bf16.mxu0 0
        %1727 = vmatpush2.bf16.msra.mxu0 0
        %1728 = vmatprep.subr.bf16.mxu0 0
        %1729 = vmatpush2.bf16.msra.mxu0 0
        %1730 = vmatprep.subr.bf16.mxu0 0
        %1731 = vmatpush2.bf16.msra.mxu0 0
        %1732 = vmatprep.subr.bf16.mxu0 0
        %1733 = vmatpush2.bf16.msra.mxu0 0
        %1734 = vmatprep.mubr.bf16.mxu0 0
        %1735 = vmatmul.mubr.bf16.gmra.mxu0 %v1655
        %v1736 = vpop.f32.mrf.mxu0
        %v1737 = vadd.f32 %v1436, %v1736
        %v1738 = vpop.f32.mrf.mxu0
        %v1739 = vpop.f32.mrf.mxu0
        %v1740 = vadd.f32 %v1439, %v1739
        %v1741 = vpop.f32.mrf.mxu0
        %1742 = vmatprep.mubr.bf16.mxu0 0
        %1743 = vmatmul.mubr.bf16.gmra.mxu0 %v1658
        %v1744 = vpop.f32.mrf.mxu0
        %v1745 = vadd.f32 %v1444, %v1744
        %v1746 = vpop.f32.mrf.mxu0
        %v1747 = vpop.f32.mrf.mxu0
        %v1748 = vadd.f32 %v1447, %v1747
        %v1749 = vpop.f32.mrf.mxu0
        %1750 = vmatprep.mubr.bf16.mxu0 0
        %1751 = vmatmul.mubr.bf16.gmra.mxu0 %v1661
        %v1752 = vpop.f32.mrf.mxu0
        %v1753 = vadd.f32 %v1452, %v1752
        %v1754 = vpop.f32.mrf.mxu0
        %v1755 = vpop.f32.mrf.mxu0
        %v1756 = vadd.f32 %v1455, %v1755
        %v1757 = vpop.f32.mrf.mxu0
        %1758 = vmatprep.mubr.bf16.mxu0 0
        %1759 = vmatmul.mubr.bf16.gmra.mxu0 %v1664
        %v1760 = vpop.f32.mrf.mxu0
        %v1761 = vadd.f32 %v1460, %v1760
        %v1762 = vpop.f32.mrf.mxu0
        %v1763 = vpop.f32.mrf.mxu0
        %v1764 = vadd.f32 %v1463, %v1763
        %v1765 = vpop.f32.mrf.mxu0
        %1766 = vmatprep.mubr.bf16.mxu0 0
        %1767 = vmatmul.mubr.bf16.gmra.mxu0 %v1667
        %v1768 = vpop.f32.mrf.mxu0
        %v1769 = vadd.f32 %v1468, %v1768
        %v1770 = vpop.f32.mrf.mxu0
        %v1771 = vpop.f32.mrf.mxu0
        %v1772 = vadd.f32 %v1471, %v1771
        %v1773 = vpop.f32.mrf.mxu0
        %1774 = vmatprep.mubr.bf16.mxu0 0
        %1775 = vmatmul.mubr.bf16.gmra.mxu0 %v1670
        %v1776 = vpop.f32.mrf.mxu0
        %v1777 = vadd.f32 %v1476, %v1776
        %v1778 = vpop.f32.mrf.mxu0
        %v1779 = vpop.f32.mrf.mxu0
        %v1780 = vadd.f32 %v1479, %v1779
        %v1781 = vpop.f32.mrf.mxu0
        %1782 = vmatprep.mubr.bf16.mxu0 0
        %1783 = vmatmul.mubr.bf16.gmra.mxu0 %v1673
        %v1784 = vpop.f32.mrf.mxu0
        %v1785 = vadd.f32 %v1484, %v1784
        %v1786 = vpop.f32.mrf.mxu0
        %v1787 = vpop.f32.mrf.mxu0
        %v1788 = vadd.f32 %v1487, %v1787
        %v1789 = vpop.f32.mrf.mxu0
        %1790 = vmatprep.mubr.bf16.mxu0 0
        %1791 = vmatmul.mubr.bf16.gmra.mxu0 %v1676
        %v1792 = vpop.f32.mrf.mxu0
        %v1793 = vadd.f32 %v1492, %v1792
        %v1794 = vpop.f32.mrf.mxu0
        %v1795 = vpop.f32.mrf.mxu0
        %v1796 = vadd.f32 %v1495, %v1795
        %v1797 = vpop.f32.mrf.mxu0
        %1798 = vmatprep.mubr.bf16.mxu0 0
        %1799 = vmatmul.mubr.bf16.gmra.mxu0 %v1679
        %v1800 = vpop.f32.mrf.mxu0
        %v1801 = vadd.f32 %v1500, %v1800
        %v1802 = vpop.f32.mrf.mxu0
        %v1803 = vpop.f32.mrf.mxu0
        %v1804 = vadd.f32 %v1503, %v1803
        %v1805 = vpop.f32.mrf.mxu0
        %1806 = vmatprep.mubr.bf16.mxu0 0
        %1807 = vmatmul.mubr.bf16.gmra.mxu0 %v1682
        %v1808 = vpop.f32.mrf.mxu0
        %v1809 = vadd.f32 %v1508, %v1808
        %v1810 = vpop.f32.mrf.mxu0
        %v1811 = vpop.f32.mrf.mxu0
        %v1812 = vadd.f32 %v1511, %v1811
        %v1813 = vpop.f32.mrf.mxu0
        %1814 = vmatprep.mubr.bf16.mxu0 0
        %1815 = vmatmul.mubr.bf16.gmra.mxu0 %v1685
        %v1816 = vpop.f32.mrf.mxu0
        %v1817 = vadd.f32 %v1516, %v1816
        %v1818 = vpop.f32.mrf.mxu0
        %v1819 = vpop.f32.mrf.mxu0
        %v1820 = vadd.f32 %v1519, %v1819
        %v1821 = vpop.f32.mrf.mxu0
        %1822 = vmatprep.mubr.bf16.mxu0 0
        %1823 = vmatmul.mubr.bf16.gmra.mxu0 %v1688
        %v1824 = vpop.f32.mrf.mxu0
        %v1825 = vadd.f32 %v1524, %v1824
        %v1826 = vpop.f32.mrf.mxu0
        %v1827 = vpop.f32.mrf.mxu0
        %v1828 = vadd.f32 %v1527, %v1827
        %v1829 = vpop.f32.mrf.mxu0
        %1830 = vmatprep.mubr.bf16.mxu0 0
        %1831 = vmatmul.mubr.bf16.gmra.mxu0 %v1691
        %v1832 = vpop.f32.mrf.mxu0
        %v1833 = vadd.f32 %v1532, %v1832
        %v1834 = vpop.f32.mrf.mxu0
        %v1835 = vpop.f32.mrf.mxu0
        %v1836 = vadd.f32 %v1535, %v1835
        %v1837 = vpop.f32.mrf.mxu0
        %1838 = vmatprep.mubr.bf16.mxu0 0
        %1839 = vmatmul.mubr.bf16.gmra.mxu0 %v1694
        %v1840 = vpop.f32.mrf.mxu0
        %v1841 = vadd.f32 %v1540, %v1840
        %v1842 = vpop.f32.mrf.mxu0
        %v1843 = vpop.f32.mrf.mxu0
        %v1844 = vadd.f32 %v1543, %v1843
        %v1845 = vpop.f32.mrf.mxu0
        %1846 = vmatprep.mubr.bf16.mxu0 0
        %1847 = vmatmul.mubr.bf16.gmra.mxu0 %v1697
        %v1848 = vpop.f32.mrf.mxu0
        %v1849 = vadd.f32 %v1548, %v1848
        %v1850 = vpop.f32.mrf.mxu0
        %v1851 = vpop.f32.mrf.mxu0
        %v1852 = vadd.f32 %v1551, %v1851
        %v1853 = vpop.f32.mrf.mxu0
        %1854 = vmatprep.mubr.bf16.mxu0 0
        %1855 = vmatmul.mubr.bf16.gmra.mxu0 %v1700
        %v1856 = vpop.f32.mrf.mxu0
        %v1857 = vadd.f32 %v1556, %v1856
        %v1858 = vpop.f32.mrf.mxu0
        %v1859 = vpop.f32.mrf.mxu0
        %v1860 = vadd.f32 %v1559, %v1859
        %v1861 = vpop.f32.mrf.mxu0
        %1862 = vdwg.mxu0
        %v1863 = vld [vmem:[%s847] sm:$0xe]
        %v1864 = vld [vmem:[%s847 + $0xc] sm:$0xe]
        %v1865 = vld [vmem:[%s847 + $0x18] sm:$0xe]
        %v1866 = vld [vmem:[%s847 + $0x24] sm:$0xe]
        %v1867 = vld [vmem:[%s847 + $0x30] sm:$0xe]
        %v1868 = vld [vmem:[%s847 + $0x3c] sm:$0xe]
        %v1869 = vld [vmem:[%s847 + $0x48] sm:$0xe]
        %v1870 = vld [vmem:[%s847 + $0x54] sm:$0xe]
        %v1871 = vld [vmem:[%s847 + $0x60] sm:$0xe]
        %v1872 = vld [vmem:[%s847 + $0x6c] sm:$0xe]
        %v1873 = vld [vmem:[%s847 + $0x78] sm:$0xe]
        %v1874 = vld [vmem:[%s847 + $0x84] sm:$0xe]
        %v1875 = vld [vmem:[%s847 + $0x90] sm:$0xe]
        %v1876 = vld [vmem:[%s847 + $0x9c] sm:$0xe]
        %v1877 = vld [vmem:[%s847 + $0xa8] sm:$0xe]
        %v1878 = vld [vmem:[%s847 + $0xb4] sm:$0xe]
        %vm1911 = vcmask 1042432
        %vm1912 = vcmask 1046532
        %vm1913 = vmor %vm1911, %vm1912
        %v1914 = vrot.slane %v1863, 5
        %v1915 = vrot.slane %v1914, 4
        %v1916 = vrot.slane %v849, 5
        %v1917 = vsel %vm1913, %v1915, %v1916
        %v1918 = vrot.slane %v1916, 4
        %v1919 = vrot.slane %v884, 5
        %v1920 = vsel %vm1913, %v1918, %v1919
        %v1921 = vrot.slane %v1864, 5
        %v1922 = vrot.slane %v1921, 4
        %v1923 = vrot.slane %v851, 5
        %v1924 = vsel %vm1913, %v1922, %v1923
        %v1925 = vrot.slane %v1923, 4
        %v1926 = vrot.slane %v885, 5
        %v1927 = vsel %vm1913, %v1925, %v1926
        %v1928 = vrot.slane %v1865, 5
        %v1929 = vrot.slane %v1928, 4
        %v1930 = vrot.slane %v853, 5
        %v1931 = vsel %vm1913, %v1929, %v1930
        %v1932 = vrot.slane %v1930, 4
        %v1933 = vrot.slane %v886, 5
        %v1934 = vsel %vm1913, %v1932, %v1933
        %v1935 = vrot.slane %v1866, 5
        %v1936 = vrot.slane %v1935, 4
        %v1937 = vrot.slane %v855, 5
        %v1938 = vsel %vm1913, %v1936, %v1937
        %v1939 = vrot.slane %v1937, 4
        %v1940 = vrot.slane %v887, 5
        %v1941 = vsel %vm1913, %v1939, %v1940
        %v1942 = vrot.slane %v1867, 5
        %v1943 = vrot.slane %v1942, 4
        %v1944 = vrot.slane %v857, 5
        %v1945 = vsel %vm1913, %v1943, %v1944
        %v1946 = vrot.slane %v1944, 4
        %v1947 = vrot.slane %v888, 5
        %v1948 = vsel %vm1913, %v1946, %v1947
        %v1949 = vrot.slane %v1868, 5
        %v1950 = vrot.slane %v1949, 4
        %v1951 = vrot.slane %v859, 5
        %v1952 = vsel %vm1913, %v1950, %v1951
        %v1953 = vrot.slane %v1951, 4
        %v1954 = vrot.slane %v889, 5
        %v1955 = vsel %vm1913, %v1953, %v1954
        %v1956 = vrot.slane %v1869, 5
        %v1957 = vrot.slane %v1956, 4
        %v1958 = vrot.slane %v861, 5
        %v1959 = vsel %vm1913, %v1957, %v1958
        %v1960 = vrot.slane %v1958, 4
        %v1961 = vrot.slane %v890, 5
        %v1962 = vsel %vm1913, %v1960, %v1961
        %v1963 = vrot.slane %v1870, 5
        %v1964 = vrot.slane %v1963, 4
        %v1965 = vrot.slane %v863, 5
        %v1966 = vsel %vm1913, %v1964, %v1965
        %v1967 = vrot.slane %v1965, 4
        %v1968 = vrot.slane %v891, 5
        %v1969 = vsel %vm1913, %v1967, %v1968
        %v1970 = vrot.slane %v1871, 5
        %v1971 = vrot.slane %v1970, 4
        %v1972 = vrot.slane %v865, 5
        %v1973 = vsel %vm1913, %v1971, %v1972
        %v1974 = vrot.slane %v1972, 4
        %v1975 = vrot.slane %v892, 5
        %v1976 = vsel %vm1913, %v1974, %v1975
        %v1977 = vrot.slane %v1872, 5
        %v1978 = vrot.slane %v1977, 4
        %v1979 = vrot.slane %v867, 5
        %v1980 = vsel %vm1913, %v1978, %v1979
        %v1981 = vrot.slane %v1979, 4
        %v1982 = vrot.slane %v893, 5
        %v1983 = vsel %vm1913, %v1981, %v1982
        %v1984 = vrot.slane %v1873, 5
        %v1985 = vrot.slane %v1984, 4
        %v1986 = vrot.slane %v869, 5
        %v1987 = vsel %vm1913, %v1985, %v1986
        %v1988 = vrot.slane %v1986, 4
        %v1989 = vrot.slane %v894, 5
        %v1990 = vsel %vm1913, %v1988, %v1989
        %v1991 = vrot.slane %v1874, 5
        %v1992 = vrot.slane %v1991, 4
        %v1993 = vrot.slane %v871, 5
        %v1994 = vsel %vm1913, %v1992, %v1993
        %v1995 = vrot.slane %v1993, 4
        %v1996 = vrot.slane %v895, 5
        %v1997 = vsel %vm1913, %v1995, %v1996
        %v1998 = vrot.slane %v1875, 5
        %v1999 = vrot.slane %v1998, 4
        %v2000 = vrot.slane %v873, 5
        %v2001 = vsel %vm1913, %v1999, %v2000
        %v2002 = vrot.slane %v2000, 4
        %v2003 = vrot.slane %v896, 5
        %v2004 = vsel %vm1913, %v2002, %v2003
        %v2005 = vrot.slane %v1876, 5
        %v2006 = vrot.slane %v2005, 4
        %v2007 = vrot.slane %v875, 5
        %v2008 = vsel %vm1913, %v2006, %v2007
        %v2009 = vrot.slane %v2007, 4
        %v2010 = vrot.slane %v897, 5
        %v2011 = vsel %vm1913, %v2009, %v2010
        %v2012 = vrot.slane %v1877, 5
        %v2013 = vrot.slane %v2012, 4
        %v2014 = vrot.slane %v877, 5
        %v2015 = vsel %vm1913, %v2013, %v2014
        %v2016 = vrot.slane %v2014, 4
        %v2017 = vrot.slane %v898, 5
        %v2018 = vsel %vm1913, %v2016, %v2017
        %v2019 = vrot.slane %v1878, 5
        %v2020 = vrot.slane %v2019, 4
        %v2021 = vrot.slane %v879, 5
        %v2022 = vsel %vm1913, %v2020, %v2021
        %v2023 = vrot.slane %v2021, 4
        %v2024 = vrot.slane %v899, 5
        %v2025 = vsel %vm1913, %v2023, %v2024
        %s2026 = scalar_lea.vmem [#allocation6], 32
        %v2027 = vld [vmem:[%s2026] sm:$0xf]
        %v2028 = vld [vmem:[%s2026 + $0x4] sm:$0xf]
        %v2029 = vld [vmem:[%s2026 + $0x8] sm:$0xf]
        %v2030 = vld [vmem:[%s2026 + $0xc] sm:$0xf]
        %v2031 = vunpack.c.l.b16 %v1917
        %v2032 = vunpack.c.l.b16 %v1920
        %v2033 = vunpack.c.l.b16 %v1924
        %v2034 = vunpack.c.l.b16 %v1927
        %v2035 = vunpack.c.l.b16 %v1931
        %v2036 = vunpack.c.l.b16 %v1934
        %v2037 = vunpack.c.l.b16 %v1938
        %v2038 = vunpack.c.l.b16 %v1941
        %v2039 = vunpack.c.l.b16 %v1945
        %v2040 = vunpack.c.l.b16 %v1948
        %v2041 = vunpack.c.l.b16 %v1952
        %v2042 = vunpack.c.l.b16 %v1955
        %v2043 = vunpack.c.l.b16 %v1959
        %v2044 = vunpack.c.l.b16 %v1962
        %v2045 = vunpack.c.l.b16 %v1966
        %v2046 = vunpack.c.l.b16 %v1969
        %v2047 = vunpack.c.l.b16 %v1973
        %v2048 = vunpack.c.l.b16 %v1976
        %v2049 = vunpack.c.l.b16 %v1980
        %v2050 = vunpack.c.l.b16 %v1983
        %v2051 = vunpack.c.l.b16 %v1987
        %v2052 = vunpack.c.l.b16 %v1990
        %v2053 = vunpack.c.l.b16 %v1994
        %v2054 = vunpack.c.l.b16 %v1997
        %v2055 = vunpack.c.l.b16 %v2001
        %v2056 = vunpack.c.l.b16 %v2004
        %v2057 = vunpack.c.l.b16 %v2008
        %v2058 = vunpack.c.l.b16 %v2011
        %v2059 = vunpack.c.l.b16 %v2015
        %v2060 = vunpack.c.l.b16 %v2018
        %v2061 = vunpack.c.l.b16 %v2022
        %v2062 = vunpack.c.l.b16 %v2025
        %v2063 = vpack.c.b16 %v2032, %v2031
        %v2064 = vpack.c.b16 %v2034, %v2033
        %v2065 = vpack.c.b16 %v2036, %v2035
        %v2066 = vpack.c.b16 %v2038, %v2037
        %v2067 = vpack.c.b16 %v2040, %v2039
        %v2068 = vpack.c.b16 %v2042, %v2041
        %v2069 = vpack.c.b16 %v2044, %v2043
        %v2070 = vpack.c.b16 %v2046, %v2045
        %v2071 = vpack.c.b16 %v2048, %v2047
        %v2072 = vpack.c.b16 %v2050, %v2049
        %v2073 = vpack.c.b16 %v2052, %v2051
        %v2074 = vpack.c.b16 %v2054, %v2053
        %v2075 = vpack.c.b16 %v2056, %v2055
        %v2076 = vpack.c.b16 %v2058, %v2057
        %v2077 = vpack.c.b16 %v2060, %v2059
        %v2078 = vpack.c.b16 %v2062, %v2061
        %v2083 = vunpack.c.l.b16 %v2027
        %v2084 = vunpack.c.l.b16 %v2028
        %v2085 = vunpack.c.l.b16 %v2029
        %v2086 = vunpack.c.l.b16 %v2030
        %v2087 = vpack.c.b16 %v2084, %v2083
        %v2088 = vpack.c.b16 %v2086, %v2085
        %v2092 = vsel %vm1352, %v2063, 0
        %v2095 = vsel %vm1352, %v2064, 0
        %v2098 = vsel %vm1352, %v2065, 0
        %v2101 = vsel %vm1352, %v2066, 0
        %v2104 = vsel %vm1352, %v2067, 0
        %v2107 = vsel %vm1352, %v2068, 0
        %v2110 = vsel %vm1352, %v2069, 0
        %v2113 = vsel %vm1352, %v2070, 0
        %v2116 = vsel %vm1352, %v2071, 0
        %v2119 = vsel %vm1352, %v2072, 0
        %v2122 = vsel %vm1352, %v2073, 0
        %v2125 = vsel %vm1352, %v2074, 0
        %v2128 = vsel %vm1352, %v2075, 0
        %v2131 = vsel %vm1352, %v2076, 0
        %v2134 = vsel %vm1352, %v2077, 0
        %v2137 = vsel %vm1352, %v2078, 0
        %2139 = vmatprep.subr.bf16.mxu0 0
        %2140 = vmatpush1.bf16.msra.mxu0 0
        %2141 = vmatprep.subr.bf16.mxu0 0
        %2142 = vmatpush1.bf16.msra.mxu0 0
        %2143 = vmatprep.subr.bf16.mxu0 0
        %2144 = vmatpush1.bf16.msra.mxu0 0
        %2145 = vmatprep.subr.bf16.mxu0 0
        %2146 = vmatpush1.bf16.msra.mxu0 0
        %2147 = vmatprep.subr.bf16.mxu0 0
        %2148 = vmatpush1.bf16.msra.mxu0 0
        %2149 = vmatprep.subr.bf16.mxu0 0
        %2150 = vmatpush1.bf16.msra.mxu0 0
        %2151 = vmatprep.subr.bf16.mxu0 0
        %2152 = vmatpush1.bf16.msra.mxu0 %v2088
        %2153 = vmatprep.subr.bf16.mxu0 0
        %2154 = vmatpush1.bf16.msra.mxu0 %v2087
        %2155 = vmatprep.subr.bf16.mxu0 0
        %2156 = vmatpush2.bf16.msra.mxu0 0
        %2157 = vmatprep.subr.bf16.mxu0 0
        %2158 = vmatpush2.bf16.msra.mxu0 0
        %2159 = vmatprep.subr.bf16.mxu0 0
        %2160 = vmatpush2.bf16.msra.mxu0 0
        %2161 = vmatprep.subr.bf16.mxu0 0
        %2162 = vmatpush2.bf16.msra.mxu0 0
        %2163 = vmatprep.subr.bf16.mxu0 0
        %2164 = vmatpush2.bf16.msra.mxu0 0
        %2165 = vmatprep.subr.bf16.mxu0 0
        %2166 = vmatpush2.bf16.msra.mxu0 0
        %2167 = vmatprep.subr.bf16.mxu0 0
        %2168 = vmatpush2.bf16.msra.mxu0 0
        %2169 = vmatprep.subr.bf16.mxu0 0
        %2170 = vmatpush2.bf16.msra.mxu0 0
        %2171 = vmatprep.mubr.bf16.mxu0 0
        %2172 = vmatmul.mubr.bf16.gmra.mxu0 %v2092
        %v2173 = vpop.f32.mrf.mxu0
        %v2174 = vadd.f32 0.0, %v2173
        %v2175 = vpop.f32.mrf.mxu0
        %v2176 = vpop.f32.mrf.mxu0
        %v2177 = vadd.f32 0.0, %v2176
        %v2178 = vpop.f32.mrf.mxu0
        %2179 = vmatprep.mubr.bf16.mxu0 0
        %2180 = vmatmul.mubr.bf16.gmra.mxu0 %v2095
        %v2181 = vpop.f32.mrf.mxu0
        %v2182 = vadd.f32 0.0, %v2181
        %v2183 = vpop.f32.mrf.mxu0
        %v2184 = vpop.f32.mrf.mxu0
        %v2185 = vadd.f32 0.0, %v2184
        %v2186 = vpop.f32.mrf.mxu0
        %2187 = vmatprep.mubr.bf16.mxu0 0
        %2188 = vmatmul.mubr.bf16.gmra.mxu0 %v2098
        %v2189 = vpop.f32.mrf.mxu0
        %v2190 = vadd.f32 0.0, %v2189
        %v2191 = vpop.f32.mrf.mxu0
        %v2192 = vpop.f32.mrf.mxu0
        %v2193 = vadd.f32 0.0, %v2192
        %v2194 = vpop.f32.mrf.mxu0
        %2195 = vmatprep.mubr.bf16.mxu0 0
        %2196 = vmatmul.mubr.bf16.gmra.mxu0 %v2101
        %v2197 = vpop.f32.mrf.mxu0
        %v2198 = vadd.f32 0.0, %v2197
        %v2199 = vpop.f32.mrf.mxu0
        %v2200 = vpop.f32.mrf.mxu0
        %v2201 = vadd.f32 0.0, %v2200
        %v2202 = vpop.f32.mrf.mxu0
        %2203 = vmatprep.mubr.bf16.mxu0 0
        %2204 = vmatmul.mubr.bf16.gmra.mxu0 %v2104
        %v2205 = vpop.f32.mrf.mxu0
        %v2206 = vadd.f32 0.0, %v2205
        %v2207 = vpop.f32.mrf.mxu0
        %v2208 = vpop.f32.mrf.mxu0
        %v2209 = vadd.f32 0.0, %v2208
        %v2210 = vpop.f32.mrf.mxu0
        %2211 = vmatprep.mubr.bf16.mxu0 0
        %2212 = vmatmul.mubr.bf16.gmra.mxu0 %v2107
        %v2213 = vpop.f32.mrf.mxu0
        %v2214 = vadd.f32 0.0, %v2213
        %v2215 = vpop.f32.mrf.mxu0
        %v2216 = vpop.f32.mrf.mxu0
        %v2217 = vadd.f32 0.0, %v2216
        %v2218 = vpop.f32.mrf.mxu0
        %2219 = vmatprep.mubr.bf16.mxu0 0
        %2220 = vmatmul.mubr.bf16.gmra.mxu0 %v2110
        %v2221 = vpop.f32.mrf.mxu0
        %v2222 = vadd.f32 0.0, %v2221
        %v2223 = vpop.f32.mrf.mxu0
        %v2224 = vpop.f32.mrf.mxu0
        %v2225 = vadd.f32 0.0, %v2224
        %v2226 = vpop.f32.mrf.mxu0
        %2227 = vmatprep.mubr.bf16.mxu0 0
        %2228 = vmatmul.mubr.bf16.gmra.mxu0 %v2113
        %v2229 = vpop.f32.mrf.mxu0
        %v2230 = vadd.f32 0.0, %v2229
        %v2231 = vpop.f32.mrf.mxu0
        %v2232 = vpop.f32.mrf.mxu0
        %v2233 = vadd.f32 0.0, %v2232
        %v2234 = vpop.f32.mrf.mxu0
        %2235 = vmatprep.mubr.bf16.mxu0 0
        %2236 = vmatmul.mubr.bf16.gmra.mxu0 %v2116
        %v2237 = vpop.f32.mrf.mxu0
        %v2238 = vadd.f32 0.0, %v2237
        %v2239 = vpop.f32.mrf.mxu0
        %v2240 = vpop.f32.mrf.mxu0
        %v2241 = vadd.f32 0.0, %v2240
        %v2242 = vpop.f32.mrf.mxu0
        %2243 = vmatprep.mubr.bf16.mxu0 0
        %2244 = vmatmul.mubr.bf16.gmra.mxu0 %v2119
        %v2245 = vpop.f32.mrf.mxu0
        %v2246 = vadd.f32 0.0, %v2245
        %v2247 = vpop.f32.mrf.mxu0
        %v2248 = vpop.f32.mrf.mxu0
        %v2249 = vadd.f32 0.0, %v2248
        %v2250 = vpop.f32.mrf.mxu0
        %2251 = vmatprep.mubr.bf16.mxu0 0
        %2252 = vmatmul.mubr.bf16.gmra.mxu0 %v2122
        %v2253 = vpop.f32.mrf.mxu0
        %v2254 = vadd.f32 0.0, %v2253
        %v2255 = vpop.f32.mrf.mxu0
        %v2256 = vpop.f32.mrf.mxu0
        %v2257 = vadd.f32 0.0, %v2256
        %v2258 = vpop.f32.mrf.mxu0
        %2259 = vmatprep.mubr.bf16.mxu0 0
        %2260 = vmatmul.mubr.bf16.gmra.mxu0 %v2125
        %v2261 = vpop.f32.mrf.mxu0
        %v2262 = vadd.f32 0.0, %v2261
        %v2263 = vpop.f32.mrf.mxu0
        %v2264 = vpop.f32.mrf.mxu0
        %v2265 = vadd.f32 0.0, %v2264
        %v2266 = vpop.f32.mrf.mxu0
        %2267 = vmatprep.mubr.bf16.mxu0 0
        %2268 = vmatmul.mubr.bf16.gmra.mxu0 %v2128
        %v2269 = vpop.f32.mrf.mxu0
        %v2270 = vadd.f32 0.0, %v2269
        %v2271 = vpop.f32.mrf.mxu0
        %v2272 = vpop.f32.mrf.mxu0
        %v2273 = vadd.f32 0.0, %v2272
        %v2274 = vpop.f32.mrf.mxu0
        %2275 = vmatprep.mubr.bf16.mxu0 0
        %2276 = vmatmul.mubr.bf16.gmra.mxu0 %v2131
        %v2277 = vpop.f32.mrf.mxu0
        %v2278 = vadd.f32 0.0, %v2277
        %v2279 = vpop.f32.mrf.mxu0
        %v2280 = vpop.f32.mrf.mxu0
        %v2281 = vadd.f32 0.0, %v2280
        %v2282 = vpop.f32.mrf.mxu0
        %2283 = vmatprep.mubr.bf16.mxu0 0
        %2284 = vmatmul.mubr.bf16.gmra.mxu0 %v2134
        %v2285 = vpop.f32.mrf.mxu0
        %v2286 = vadd.f32 0.0, %v2285
        %v2287 = vpop.f32.mrf.mxu0
        %v2288 = vpop.f32.mrf.mxu0
        %v2289 = vadd.f32 0.0, %v2288
        %v2290 = vpop.f32.mrf.mxu0
        %2291 = vmatprep.mubr.bf16.mxu0 0
        %2292 = vmatmul.mubr.bf16.gmra.mxu0 %v2137
        %v2293 = vpop.f32.mrf.mxu0
        %v2294 = vadd.f32 0.0, %v2293
        %v2295 = vpop.f32.mrf.mxu0
        %v2296 = vpop.f32.mrf.mxu0
        %v2297 = vadd.f32 0.0, %v2296
        %v2298 = vpop.f32.mrf.mxu0
        %2299 = vdwg.mxu0
        %v2300 = vadd.f32 %v1737, %v2174
        %v2301 = vadd.f32 %v1740, %v2177
        %v2302 = vadd.f32 %v1745, %v2182
        %v2303 = vadd.f32 %v1748, %v2185
        %v2304 = vadd.f32 %v1753, %v2190
        %v2305 = vadd.f32 %v1756, %v2193
        %v2306 = vadd.f32 %v1761, %v2198
        %v2307 = vadd.f32 %v1764, %v2201
        %v2308 = vadd.f32 %v1769, %v2206
        %v2309 = vadd.f32 %v1772, %v2209
        %v2310 = vadd.f32 %v1777, %v2214
        %v2311 = vadd.f32 %v1780, %v2217
        %v2312 = vadd.f32 %v1785, %v2222
        %v2313 = vadd.f32 %v1788, %v2225
        %v2314 = vadd.f32 %v1793, %v2230
        %v2315 = vadd.f32 %v1796, %v2233
        %v2316 = vadd.f32 %v1801, %v2238
        %v2317 = vadd.f32 %v1804, %v2241
        %v2318 = vadd.f32 %v1809, %v2246
        %v2319 = vadd.f32 %v1812, %v2249
        %v2320 = vadd.f32 %v1817, %v2254
        %v2321 = vadd.f32 %v1820, %v2257
        %v2322 = vadd.f32 %v1825, %v2262
        %v2323 = vadd.f32 %v1828, %v2265
        %v2324 = vadd.f32 %v1833, %v2270
        %v2325 = vadd.f32 %v1836, %v2273
        %v2326 = vadd.f32 %v1841, %v2278
        %v2327 = vadd.f32 %v1844, %v2281
        %v2328 = vadd.f32 %v1849, %v2286
        %v2329 = vadd.f32 %v1852, %v2289
        %v2330 = vadd.f32 %v1857, %v2294
        %v2331 = vadd.f32 %v1860, %v2297
        %s2332 = sadd.s32 %s844, 1
        %s2333 = smul.u32 %s2332, 3
        %s2334 = smul.addr %s2333, 4
        %s2335 = scalar_lea.vmem [#allocation2], %s2334
        %v2336 = vld [vmem:[%s2335] sm:$0xf]
        %v2337 = vld [vmem:[%s2335 + $0x4] sm:$0xf]
        %v2338 = vld [vmem:[%s2335 + $0xc] sm:$0xf]
        %v2339 = vld [vmem:[%s2335 + $0x10] sm:$0xf]
        %v2340 = vld [vmem:[%s2335 + $0x18] sm:$0xf]
        %v2341 = vld [vmem:[%s2335 + $0x1c] sm:$0xf]
        %v2342 = vld [vmem:[%s2335 + $0x24] sm:$0xf]
        %v2343 = vld [vmem:[%s2335 + $0x28] sm:$0xf]
        %v2344 = vld [vmem:[%s2335 + $0x30] sm:$0xf]
        %v2345 = vld [vmem:[%s2335 + $0x34] sm:$0xf]
        %v2346 = vld [vmem:[%s2335 + $0x3c] sm:$0xf]
        %v2347 = vld [vmem:[%s2335 + $0x40] sm:$0xf]
        %v2348 = vld [vmem:[%s2335 + $0x48] sm:$0xf]
        %v2349 = vld [vmem:[%s2335 + $0x4c] sm:$0xf]
        %v2350 = vld [vmem:[%s2335 + $0x54] sm:$0xf]
        %v2351 = vld [vmem:[%s2335 + $0x58] sm:$0xf]
        %v2352 = vld [vmem:[%s2335 + $0x60] sm:$0xf]
        %v2353 = vld [vmem:[%s2335 + $0x64] sm:$0xf]
        %v2354 = vld [vmem:[%s2335 + $0x6c] sm:$0xf]
        %v2355 = vld [vmem:[%s2335 + $0x70] sm:$0xf]
        %v2356 = vld [vmem:[%s2335 + $0x78] sm:$0xf]
        %v2357 = vld [vmem:[%s2335 + $0x7c] sm:$0xf]
        %v2358 = vld [vmem:[%s2335 + $0x84] sm:$0xf]
        %v2359 = vld [vmem:[%s2335 + $0x88] sm:$0xf]
        %v2360 = vld [vmem:[%s2335 + $0x90] sm:$0xf]
        %v2361 = vld [vmem:[%s2335 + $0x94] sm:$0xf]
        %v2362 = vld [vmem:[%s2335 + $0x9c] sm:$0xf]
        %v2363 = vld [vmem:[%s2335 + $0xa0] sm:$0xf]
        %v2364 = vld [vmem:[%s2335 + $0xa8] sm:$0xf]
        %v2365 = vld [vmem:[%s2335 + $0xac] sm:$0xf]
        %v2366 = vld [vmem:[%s2335 + $0xb4] sm:$0xf]
        %v2367 = vld [vmem:[%s2335 + $0xb8] sm:$0xf]
        %s2368 = scalar_lea.vmem [#allocation6], 48
        %v2369 = vld [vmem:[%s2368] sm:$0xf]
        %v2370 = vld [vmem:[%s2368 + $0x4] sm:$0xf]
        %v2371 = vld [vmem:[%s2368 + $0x8] sm:$0xf]
        %v2372 = vld [vmem:[%s2368 + $0xc] sm:$0xf]
        %v2405 = vunpack.c.l.b16 %v2336
        %v2406 = vunpack.c.l.b16 %v2337
        %v2407 = vunpack.c.l.b16 %v2338
        %v2408 = vunpack.c.l.b16 %v2339
        %v2409 = vunpack.c.l.b16 %v2340
        %v2410 = vunpack.c.l.b16 %v2341
        %v2411 = vunpack.c.l.b16 %v2342
        %v2412 = vunpack.c.l.b16 %v2343
        %v2413 = vunpack.c.l.b16 %v2344
        %v2414 = vunpack.c.l.b16 %v2345
        %v2415 = vunpack.c.l.b16 %v2346
        %v2416 = vunpack.c.l.b16 %v2347
        %v2417 = vunpack.c.l.b16 %v2348
        %v2418 = vunpack.c.l.b16 %v2349
        %v2419 = vunpack.c.l.b16 %v2350
        %v2420 = vunpack.c.l.b16 %v2351
        %v2421 = vunpack.c.l.b16 %v2352
        %v2422 = vunpack.c.l.b16 %v2353
        %v2423 = vunpack.c.l.b16 %v2354
        %v2424 = vunpack.c.l.b16 %v2355
        %v2425 = vunpack.c.l.b16 %v2356
        %v2426 = vunpack.c.l.b16 %v2357
        %v2427 = vunpack.c.l.b16 %v2358
        %v2428 = vunpack.c.l.b16 %v2359
        %v2429 = vunpack.c.l.b16 %v2360
        %v2430 = vunpack.c.l.b16 %v2361
        %v2431 = vunpack.c.l.b16 %v2362
        %v2432 = vunpack.c.l.b16 %v2363
        %v2433 = vunpack.c.l.b16 %v2364
        %v2434 = vunpack.c.l.b16 %v2365
        %v2435 = vunpack.c.l.b16 %v2366
        %v2436 = vunpack.c.l.b16 %v2367
        %v2437 = vpack.c.b16 %v2406, %v2405
        %v2438 = vpack.c.b16 %v2408, %v2407
        %v2439 = vpack.c.b16 %v2410, %v2409
        %v2440 = vpack.c.b16 %v2412, %v2411
        %v2441 = vpack.c.b16 %v2414, %v2413
        %v2442 = vpack.c.b16 %v2416, %v2415
        %v2443 = vpack.c.b16 %v2418, %v2417
        %v2444 = vpack.c.b16 %v2420, %v2419
        %v2445 = vpack.c.b16 %v2422, %v2421
        %v2446 = vpack.c.b16 %v2424, %v2423
        %v2447 = vpack.c.b16 %v2426, %v2425
        %v2448 = vpack.c.b16 %v2428, %v2427
        %v2449 = vpack.c.b16 %v2430, %v2429
        %v2450 = vpack.c.b16 %v2432, %v2431
        %v2451 = vpack.c.b16 %v2434, %v2433
        %v2452 = vpack.c.b16 %v2436, %v2435
        %v2457 = vunpack.c.l.b16 %v2369
        %v2458 = vunpack.c.l.b16 %v2370
        %v2459 = vunpack.c.l.b16 %v2371
        %v2460 = vunpack.c.l.b16 %v2372
        %v2461 = vpack.c.b16 %v2458, %v2457
        %v2462 = vpack.c.b16 %v2460, %v2459
        %v2466 = vsel %vm1352, %v2437, 0
        %v2469 = vsel %vm1352, %v2438, 0
        %v2472 = vsel %vm1352, %v2439, 0
        %v2475 = vsel %vm1352, %v2440, 0
        %v2478 = vsel %vm1352, %v2441, 0
        %v2481 = vsel %vm1352, %v2442, 0
        %v2484 = vsel %vm1352, %v2443, 0
        %v2487 = vsel %vm1352, %v2444, 0
        %v2490 = vsel %vm1352, %v2445, 0
        %v2493 = vsel %vm1352, %v2446, 0
        %v2496 = vsel %vm1352, %v2447, 0
        %v2499 = vsel %vm1352, %v2448, 0
        %v2502 = vsel %vm1352, %v2449, 0
        %v2505 = vsel %vm1352, %v2450, 0
        %v2508 = vsel %vm1352, %v2451, 0
        %v2511 = vsel %vm1352, %v2452, 0
        %2513 = vmatprep.subr.bf16.mxu0 0
        %2514 = vmatpush1.bf16.msra.mxu0 0
        %2515 = vmatprep.subr.bf16.mxu0 0
        %2516 = vmatpush1.bf16.msra.mxu0 0
        %2517 = vmatprep.subr.bf16.mxu0 0
        %2518 = vmatpush1.bf16.msra.mxu0 0
        %2519 = vmatprep.subr.bf16.mxu0 0
        %2520 = vmatpush1.bf16.msra.mxu0 0
        %2521 = vmatprep.subr.bf16.mxu0 0
        %2522 = vmatpush1.bf16.msra.mxu0 0
        %2523 = vmatprep.subr.bf16.mxu0 0
        %2524 = vmatpush1.bf16.msra.mxu0 0
        %2525 = vmatprep.subr.bf16.mxu0 0
        %2526 = vmatpush1.bf16.msra.mxu0 %v2462
        %2527 = vmatprep.subr.bf16.mxu0 0
        %2528 = vmatpush1.bf16.msra.mxu0 %v2461
        %2529 = vmatprep.subr.bf16.mxu0 0
        %2530 = vmatpush2.bf16.msra.mxu0 0
        %2531 = vmatprep.subr.bf16.mxu0 0
        %2532 = vmatpush2.bf16.msra.mxu0 0
        %2533 = vmatprep.subr.bf16.mxu0 0
        %2534 = vmatpush2.bf16.msra.mxu0 0
        %2535 = vmatprep.subr.bf16.mxu0 0
        %2536 = vmatpush2.bf16.msra.mxu0 0
        %2537 = vmatprep.subr.bf16.mxu0 0
        %2538 = vmatpush2.bf16.msra.mxu0 0
        %2539 = vmatprep.subr.bf16.mxu0 0
        %2540 = vmatpush2.bf16.msra.mxu0 0
        %2541 = vmatprep.subr.bf16.mxu0 0
        %2542 = vmatpush2.bf16.msra.mxu0 0
        %2543 = vmatprep.subr.bf16.mxu0 0
        %2544 = vmatpush2.bf16.msra.mxu0 0
        %2545 = vmatprep.mubr.bf16.mxu0 0
        %2546 = vmatmul.mubr.bf16.gmra.mxu0 %v2466
        %v2547 = vpop.f32.mrf.mxu0
        %v2548 = vadd.f32 0.0, %v2547
        %v2549 = vpop.f32.mrf.mxu0
        %v2550 = vpop.f32.mrf.mxu0
        %v2551 = vadd.f32 0.0, %v2550
        %v2552 = vpop.f32.mrf.mxu0
        %2553 = vmatprep.mubr.bf16.mxu0 0
        %2554 = vmatmul.mubr.bf16.gmra.mxu0 %v2469
        %v2555 = vpop.f32.mrf.mxu0
        %v2556 = vadd.f32 0.0, %v2555
        %v2557 = vpop.f32.mrf.mxu0
        %v2558 = vpop.f32.mrf.mxu0
        %v2559 = vadd.f32 0.0, %v2558
        %v2560 = vpop.f32.mrf.mxu0
        %2561 = vmatprep.mubr.bf16.mxu0 0
        %2562 = vmatmul.mubr.bf16.gmra.mxu0 %v2472
        %v2563 = vpop.f32.mrf.mxu0
        %v2564 = vadd.f32 0.0, %v2563
        %v2565 = vpop.f32.mrf.mxu0
        %v2566 = vpop.f32.mrf.mxu0
        %v2567 = vadd.f32 0.0, %v2566
        %v2568 = vpop.f32.mrf.mxu0
        %2569 = vmatprep.mubr.bf16.mxu0 0
        %2570 = vmatmul.mubr.bf16.gmra.mxu0 %v2475
        %v2571 = vpop.f32.mrf.mxu0
        %v2572 = vadd.f32 0.0, %v2571
        %v2573 = vpop.f32.mrf.mxu0
        %v2574 = vpop.f32.mrf.mxu0
        %v2575 = vadd.f32 0.0, %v2574
        %v2576 = vpop.f32.mrf.mxu0
        %2577 = vmatprep.mubr.bf16.mxu0 0
        %2578 = vmatmul.mubr.bf16.gmra.mxu0 %v2478
        %v2579 = vpop.f32.mrf.mxu0
        %v2580 = vadd.f32 0.0, %v2579
        %v2581 = vpop.f32.mrf.mxu0
        %v2582 = vpop.f32.mrf.mxu0
        %v2583 = vadd.f32 0.0, %v2582
        %v2584 = vpop.f32.mrf.mxu0
        %2585 = vmatprep.mubr.bf16.mxu0 0
        %2586 = vmatmul.mubr.bf16.gmra.mxu0 %v2481
        %v2587 = vpop.f32.mrf.mxu0
        %v2588 = vadd.f32 0.0, %v2587
        %v2589 = vpop.f32.mrf.mxu0
        %v2590 = vpop.f32.mrf.mxu0
        %v2591 = vadd.f32 0.0, %v2590
        %v2592 = vpop.f32.mrf.mxu0
        %2593 = vmatprep.mubr.bf16.mxu0 0
        %2594 = vmatmul.mubr.bf16.gmra.mxu0 %v2484
        %v2595 = vpop.f32.mrf.mxu0
        %v2596 = vadd.f32 0.0, %v2595
        %v2597 = vpop.f32.mrf.mxu0
        %v2598 = vpop.f32.mrf.mxu0
        %v2599 = vadd.f32 0.0, %v2598
        %v2600 = vpop.f32.mrf.mxu0
        %2601 = vmatprep.mubr.bf16.mxu0 0
        %2602 = vmatmul.mubr.bf16.gmra.mxu0 %v2487
        %v2603 = vpop.f32.mrf.mxu0
        %v2604 = vadd.f32 0.0, %v2603
        %v2605 = vpop.f32.mrf.mxu0
        %v2606 = vpop.f32.mrf.mxu0
        %v2607 = vadd.f32 0.0, %v2606
        %v2608 = vpop.f32.mrf.mxu0
        %2609 = vmatprep.mubr.bf16.mxu0 0
        %2610 = vmatmul.mubr.bf16.gmra.mxu0 %v2490
        %v2611 = vpop.f32.mrf.mxu0
        %v2612 = vadd.f32 0.0, %v2611
        %v2613 = vpop.f32.mrf.mxu0
        %v2614 = vpop.f32.mrf.mxu0
        %v2615 = vadd.f32 0.0, %v2614
        %v2616 = vpop.f32.mrf.mxu0
        %2617 = vmatprep.mubr.bf16.mxu0 0
        %2618 = vmatmul.mubr.bf16.gmra.mxu0 %v2493
        %v2619 = vpop.f32.mrf.mxu0
        %v2620 = vadd.f32 0.0, %v2619
        %v2621 = vpop.f32.mrf.mxu0
        %v2622 = vpop.f32.mrf.mxu0
        %v2623 = vadd.f32 0.0, %v2622
        %v2624 = vpop.f32.mrf.mxu0
        %2625 = vmatprep.mubr.bf16.mxu0 0
        %2626 = vmatmul.mubr.bf16.gmra.mxu0 %v2496
        %v2627 = vpop.f32.mrf.mxu0
        %v2628 = vadd.f32 0.0, %v2627
        %v2629 = vpop.f32.mrf.mxu0
        %v2630 = vpop.f32.mrf.mxu0
        %v2631 = vadd.f32 0.0, %v2630
        %v2632 = vpop.f32.mrf.mxu0
        %2633 = vmatprep.mubr.bf16.mxu0 0
        %2634 = vmatmul.mubr.bf16.gmra.mxu0 %v2499
        %v2635 = vpop.f32.mrf.mxu0
        %v2636 = vadd.f32 0.0, %v2635
        %v2637 = vpop.f32.mrf.mxu0
        %v2638 = vpop.f32.mrf.mxu0
        %v2639 = vadd.f32 0.0, %v2638
        %v2640 = vpop.f32.mrf.mxu0
        %2641 = vmatprep.mubr.bf16.mxu0 0
        %2642 = vmatmul.mubr.bf16.gmra.mxu0 %v2502
        %v2643 = vpop.f32.mrf.mxu0
        %v2644 = vadd.f32 0.0, %v2643
        %v2645 = vpop.f32.mrf.mxu0
        %v2646 = vpop.f32.mrf.mxu0
        %v2647 = vadd.f32 0.0, %v2646
        %v2648 = vpop.f32.mrf.mxu0
        %2649 = vmatprep.mubr.bf16.mxu0 0
        %2650 = vmatmul.mubr.bf16.gmra.mxu0 %v2505
        %v2651 = vpop.f32.mrf.mxu0
        %v2652 = vadd.f32 0.0, %v2651
        %v2653 = vpop.f32.mrf.mxu0
        %v2654 = vpop.f32.mrf.mxu0
        %v2655 = vadd.f32 0.0, %v2654
        %v2656 = vpop.f32.mrf.mxu0
        %2657 = vmatprep.mubr.bf16.mxu0 0
        %2658 = vmatmul.mubr.bf16.gmra.mxu0 %v2508
        %v2659 = vpop.f32.mrf.mxu0
        %v2660 = vadd.f32 0.0, %v2659
        %v2661 = vpop.f32.mrf.mxu0
        %v2662 = vpop.f32.mrf.mxu0
        %v2663 = vadd.f32 0.0, %v2662
        %v2664 = vpop.f32.mrf.mxu0
        %2665 = vmatprep.mubr.bf16.mxu0 0
        %2666 = vmatmul.mubr.bf16.gmra.mxu0 %v2511
        %v2667 = vpop.f32.mrf.mxu0
        %v2668 = vadd.f32 0.0, %v2667
        %v2669 = vpop.f32.mrf.mxu0
        %v2670 = vpop.f32.mrf.mxu0
        %v2671 = vadd.f32 0.0, %v2670
        %v2672 = vpop.f32.mrf.mxu0
        %2673 = vdwg.mxu0
        %v2674 = vadd.f32 %v2300, %v2548
        %v2675 = vadd.f32 %v2301, %v2551
        %v2676 = vadd.f32 %v2302, %v2556
        %v2677 = vadd.f32 %v2303, %v2559
        %v2678 = vadd.f32 %v2304, %v2564
        %v2679 = vadd.f32 %v2305, %v2567
        %v2680 = vadd.f32 %v2306, %v2572
        %v2681 = vadd.f32 %v2307, %v2575
        %v2682 = vadd.f32 %v2308, %v2580
        %v2683 = vadd.f32 %v2309, %v2583
        %v2684 = vadd.f32 %v2310, %v2588
        %v2685 = vadd.f32 %v2311, %v2591
        %v2686 = vadd.f32 %v2312, %v2596
        %v2687 = vadd.f32 %v2313, %v2599
        %v2688 = vadd.f32 %v2314, %v2604
        %v2689 = vadd.f32 %v2315, %v2607
        %v2690 = vadd.f32 %v2316, %v2612
        %v2691 = vadd.f32 %v2317, %v2615
        %v2692 = vadd.f32 %v2318, %v2620
        %v2693 = vadd.f32 %v2319, %v2623
        %v2694 = vadd.f32 %v2320, %v2628
        %v2695 = vadd.f32 %v2321, %v2631
        %v2696 = vadd.f32 %v2322, %v2636
        %v2697 = vadd.f32 %v2323, %v2639
        %v2698 = vadd.f32 %v2324, %v2644
        %v2699 = vadd.f32 %v2325, %v2647
        %v2700 = vadd.f32 %v2326, %v2652
        %v2701 = vadd.f32 %v2327, %v2655
        %v2702 = vadd.f32 %v2328, %v2660
        %v2703 = vadd.f32 %v2329, %v2663
        %v2704 = vadd.f32 %v2330, %v2668
        %v2705 = vadd.f32 %v2331, %v2671
        %v2706 = vld [vmem:[%s2335] sm:$0xf]
        %v2707 = vld [vmem:[%s2335 + $0x4] sm:$0xf]
        %v2708 = vld [vmem:[%s2335 + $0x8] sm:$0x1]
        %v2709 = vld [vmem:[%s2335 + $0xc] sm:$0xf]
        %v2710 = vld [vmem:[%s2335 + $0x10] sm:$0xf]
        %v2711 = vld [vmem:[%s2335 + $0x14] sm:$0x1]
        %v2712 = vld [vmem:[%s2335 + $0x18] sm:$0xf]
        %v2713 = vld [vmem:[%s2335 + $0x1c] sm:$0xf]
        %v2714 = vld [vmem:[%s2335 + $0x20] sm:$0x1]
        %v2715 = vld [vmem:[%s2335 + $0x24] sm:$0xf]
        %v2716 = vld [vmem:[%s2335 + $0x28] sm:$0xf]
        %v2717 = vld [vmem:[%s2335 + $0x2c] sm:$0x1]
        %v2718 = vld [vmem:[%s2335 + $0x30] sm:$0xf]
        %v2719 = vld [vmem:[%s2335 + $0x34] sm:$0xf]
        %v2720 = vld [vmem:[%s2335 + $0x38] sm:$0x1]
        %v2721 = vld [vmem:[%s2335 + $0x3c] sm:$0xf]
        %v2722 = vld [vmem:[%s2335 + $0x40] sm:$0xf]
        %v2723 = vld [vmem:[%s2335 + $0x44] sm:$0x1]
        %v2724 = vld [vmem:[%s2335 + $0x48] sm:$0xf]
        %v2725 = vld [vmem:[%s2335 + $0x4c] sm:$0xf]
        %v2726 = vld [vmem:[%s2335 + $0x50] sm:$0x1]
        %v2727 = vld [vmem:[%s2335 + $0x54] sm:$0xf]
        %v2728 = vld [vmem:[%s2335 + $0x58] sm:$0xf]
        %v2729 = vld [vmem:[%s2335 + $0x5c] sm:$0x1]
        %v2730 = vld [vmem:[%s2335 + $0x60] sm:$0xf]
        %v2731 = vld [vmem:[%s2335 + $0x64] sm:$0xf]
        %v2732 = vld [vmem:[%s2335 + $0x68] sm:$0x1]
        %v2733 = vld [vmem:[%s2335 + $0x6c] sm:$0xf]
        %v2734 = vld [vmem:[%s2335 + $0x70] sm:$0xf]
        %v2735 = vld [vmem:[%s2335 + $0x74] sm:$0x1]
        %v2736 = vld [vmem:[%s2335 + $0x78] sm:$0xf]
        %v2737 = vld [vmem:[%s2335 + $0x7c] sm:$0xf]
        %v2738 = vld [vmem:[%s2335 + $0x80] sm:$0x1]
        %v2739 = vld [vmem:[%s2335 + $0x84] sm:$0xf]
        %v2740 = vld [vmem:[%s2335 + $0x88] sm:$0xf]
        %v2741 = vld [vmem:[%s2335 + $0x8c] sm:$0x1]
        %v2742 = vld [vmem:[%s2335 + $0x90] sm:$0xf]
        %v2743 = vld [vmem:[%s2335 + $0x94] sm:$0xf]
        %v2744 = vld [vmem:[%s2335 + $0x98] sm:$0x1]
        %v2745 = vld [vmem:[%s2335 + $0x9c] sm:$0xf]
        %v2746 = vld [vmem:[%s2335 + $0xa0] sm:$0xf]
        %v2747 = vld [vmem:[%s2335 + $0xa4] sm:$0x1]
        %v2748 = vld [vmem:[%s2335 + $0xa8] sm:$0xf]
        %v2749 = vld [vmem:[%s2335 + $0xac] sm:$0xf]
        %v2750 = vld [vmem:[%s2335 + $0xb0] sm:$0x1]
        %v2751 = vld [vmem:[%s2335 + $0xb4] sm:$0xf]
        %v2752 = vld [vmem:[%s2335 + $0xb8] sm:$0xf]
        %v2753 = vld [vmem:[%s2335 + $0xbc] sm:$0x1]
        %v2755 = vshrl.u32 %v2706, 16
        %v2757 = vrot.slane %v2755, 4
        %v2758 = vshll.u32 %v2706, 16
        %v2760 = vrot.slane %v2758, 5
        %v2761 = vor.u32 %v2757, %v2760
        %v2762 = vrot.slane %v2761, 4
        %v2764 = vshll.u32 %v2707, 16
        %v2766 = vrot.slane %v2764, 5
        %v2767 = vsel %vm902, %v2762, %v2766
        %v2768 = vshrl.u32 %v2707, 16
        %v2770 = vrot.slane %v2768, 4
        %v2771 = vor.u32 %v2770, %v2766
        %v2772 = vrot.slane %v2771, 4
        %v2774 = vshll.u32 %v2708, 16
        %v2776 = vrot.slane %v2774, 5
        %v2777 = vsel %vm902, %v2772, %v2776
        %v2779 = vshrl.u32 %v2709, 16
        %v2781 = vrot.slane %v2779, 4
        %v2782 = vshll.u32 %v2709, 16
        %v2784 = vrot.slane %v2782, 5
        %v2785 = vor.u32 %v2781, %v2784
        %v2786 = vrot.slane %v2785, 4
        %v2788 = vshll.u32 %v2710, 16
        %v2790 = vrot.slane %v2788, 5
        %v2791 = vsel %vm902, %v2786, %v2790
        %v2792 = vshrl.u32 %v2710, 16
        %v2794 = vrot.slane %v2792, 4
        %v2795 = vor.u32 %v2794, %v2790
        %v2796 = vrot.slane %v2795, 4
        %v2798 = vshll.u32 %v2711, 16
        %v2800 = vrot.slane %v2798, 5
        %v2801 = vsel %vm902, %v2796, %v2800
        %v2803 = vshrl.u32 %v2712, 16
        %v2805 = vrot.slane %v2803, 4
        %v2806 = vshll.u32 %v2712, 16
        %v2808 = vrot.slane %v2806, 5
        %v2809 = vor.u32 %v2805, %v2808
        %v2810 = vrot.slane %v2809, 4
        %v2812 = vshll.u32 %v2713, 16
        %v2814 = vrot.slane %v2812, 5
        %v2815 = vsel %vm902, %v2810, %v2814
        %v2816 = vshrl.u32 %v2713, 16
        %v2818 = vrot.slane %v2816, 4
        %v2819 = vor.u32 %v2818, %v2814
        %v2820 = vrot.slane %v2819, 4
        %v2822 = vshll.u32 %v2714, 16
        %v2824 = vrot.slane %v2822, 5
        %v2825 = vsel %vm902, %v2820, %v2824
        %v2827 = vshrl.u32 %v2715, 16
        %v2829 = vrot.slane %v2827, 4
        %v2830 = vshll.u32 %v2715, 16
        %v2832 = vrot.slane %v2830, 5
        %v2833 = vor.u32 %v2829, %v2832
        %v2834 = vrot.slane %v2833, 4
        %v2836 = vshll.u32 %v2716, 16
        %v2838 = vrot.slane %v2836, 5
        %v2839 = vsel %vm902, %v2834, %v2838
        %v2840 = vshrl.u32 %v2716, 16
        %v2842 = vrot.slane %v2840, 4
        %v2843 = vor.u32 %v2842, %v2838
        %v2844 = vrot.slane %v2843, 4
        %v2846 = vshll.u32 %v2717, 16
        %v2848 = vrot.slane %v2846, 5
        %v2849 = vsel %vm902, %v2844, %v2848
        %v2851 = vshrl.u32 %v2718, 16
        %v2853 = vrot.slane %v2851, 4
        %v2854 = vshll.u32 %v2718, 16
        %v2856 = vrot.slane %v2854, 5
        %v2857 = vor.u32 %v2853, %v2856
        %v2858 = vrot.slane %v2857, 4
        %v2860 = vshll.u32 %v2719, 16
        %v2862 = vrot.slane %v2860, 5
        %v2863 = vsel %vm902, %v2858, %v2862
        %v2864 = vshrl.u32 %v2719, 16
        %v2866 = vrot.slane %v2864, 4
        %v2867 = vor.u32 %v2866, %v2862
        %v2868 = vrot.slane %v2867, 4
        %v2870 = vshll.u32 %v2720, 16
        %v2872 = vrot.slane %v2870, 5
        %v2873 = vsel %vm902, %v2868, %v2872
        %v2875 = vshrl.u32 %v2721, 16
        %v2877 = vrot.slane %v2875, 4
        %v2878 = vshll.u32 %v2721, 16
        %v2880 = vrot.slane %v2878, 5
        %v2881 = vor.u32 %v2877, %v2880
        %v2882 = vrot.slane %v2881, 4
        %v2884 = vshll.u32 %v2722, 16
        %v2886 = vrot.slane %v2884, 5
        %v2887 = vsel %vm902, %v2882, %v2886
        %v2888 = vshrl.u32 %v2722, 16
        %v2890 = vrot.slane %v2888, 4
        %v2891 = vor.u32 %v2890, %v2886
        %v2892 = vrot.slane %v2891, 4
        %v2894 = vshll.u32 %v2723, 16
        %v2896 = vrot.slane %v2894, 5
        %v2897 = vsel %vm902, %v2892, %v2896
        %v2899 = vshrl.u32 %v2724, 16
        %v2901 = vrot.slane %v2899, 4
        %v2902 = vshll.u32 %v2724, 16
        %v2904 = vrot.slane %v2902, 5
        %v2905 = vor.u32 %v2901, %v2904
        %v2906 = vrot.slane %v2905, 4
        %v2908 = vshll.u32 %v2725, 16
        %v2910 = vrot.slane %v2908, 5
        %v2911 = vsel %vm902, %v2906, %v2910
        %v2912 = vshrl.u32 %v2725, 16
        %v2914 = vrot.slane %v2912, 4
        %v2915 = vor.u32 %v2914, %v2910
        %v2916 = vrot.slane %v2915, 4
        %v2918 = vshll.u32 %v2726, 16
        %v2920 = vrot.slane %v2918, 5
        %v2921 = vsel %vm902, %v2916, %v2920
        %v2923 = vshrl.u32 %v2727, 16
        %v2925 = vrot.slane %v2923, 4
        %v2926 = vshll.u32 %v2727, 16
        %v2928 = vrot.slane %v2926, 5
        %v2929 = vor.u32 %v2925, %v2928
        %v2930 = vrot.slane %v2929, 4
        %v2932 = vshll.u32 %v2728, 16
        %v2934 = vrot.slane %v2932, 5
        %v2935 = vsel %vm902, %v2930, %v2934
        %v2936 = vshrl.u32 %v2728, 16
        %v2938 = vrot.slane %v2936, 4
        %v2939 = vor.u32 %v2938, %v2934
        %v2940 = vrot.slane %v2939, 4
        %v2942 = vshll.u32 %v2729, 16
        %v2944 = vrot.slane %v2942, 5
        %v2945 = vsel %vm902, %v2940, %v2944
        %v2947 = vshrl.u32 %v2730, 16
        %v2949 = vrot.slane %v2947, 4
        %v2950 = vshll.u32 %v2730, 16
        %v2952 = vrot.slane %v2950, 5
        %v2953 = vor.u32 %v2949, %v2952
        %v2954 = vrot.slane %v2953, 4
        %v2956 = vshll.u32 %v2731, 16
        %v2958 = vrot.slane %v2956, 5
        %v2959 = vsel %vm902, %v2954, %v2958
        %v2960 = vshrl.u32 %v2731, 16
        %v2962 = vrot.slane %v2960, 4
        %v2963 = vor.u32 %v2962, %v2958
        %v2964 = vrot.slane %v2963, 4
        %v2966 = vshll.u32 %v2732, 16
        %v2968 = vrot.slane %v2966, 5
        %v2969 = vsel %vm902, %v2964, %v2968
        %v2971 = vshrl.u32 %v2733, 16
        %v2973 = vrot.slane %v2971, 4
        %v2974 = vshll.u32 %v2733, 16
        %v2976 = vrot.slane %v2974, 5
        %v2977 = vor.u32 %v2973, %v2976
        %v2978 = vrot.slane %v2977, 4
        %v2980 = vshll.u32 %v2734, 16
        %v2982 = vrot.slane %v2980, 5
        %v2983 = vsel %vm902, %v2978, %v2982
        %v2984 = vshrl.u32 %v2734, 16
        %v2986 = vrot.slane %v2984, 4
        %v2987 = vor.u32 %v2986, %v2982
        %v2988 = vrot.slane %v2987, 4
        %v2990 = vshll.u32 %v2735, 16
        %v2992 = vrot.slane %v2990, 5
        %v2993 = vsel %vm902, %v2988, %v2992
        %v2995 = vshrl.u32 %v2736, 16
        %v2997 = vrot.slane %v2995, 4
        %v2998 = vshll.u32 %v2736, 16
        %v3000 = vrot.slane %v2998, 5
        %v3001 = vor.u32 %v2997, %v3000
        %v3002 = vrot.slane %v3001, 4
        %v3004 = vshll.u32 %v2737, 16
        %v3006 = vrot.slane %v3004, 5
        %v3007 = vsel %vm902, %v3002, %v3006
        %v3008 = vshrl.u32 %v2737, 16
        %v3010 = vrot.slane %v3008, 4
        %v3011 = vor.u32 %v3010, %v3006
        %v3012 = vrot.slane %v3011, 4
        %v3014 = vshll.u32 %v2738, 16
        %v3016 = vrot.slane %v3014, 5
        %v3017 = vsel %vm902, %v3012, %v3016
        %v3019 = vshrl.u32 %v2739, 16
        %v3021 = vrot.slane %v3019, 4
        %v3022 = vshll.u32 %v2739, 16
        %v3024 = vrot.slane %v3022, 5
        %v3025 = vor.u32 %v3021, %v3024
        %v3026 = vrot.slane %v3025, 4
        %v3028 = vshll.u32 %v2740, 16
        %v3030 = vrot.slane %v3028, 5
        %v3031 = vsel %vm902, %v3026, %v3030
        %v3032 = vshrl.u32 %v2740, 16
        %v3034 = vrot.slane %v3032, 4
        %v3035 = vor.u32 %v3034, %v3030
        %v3036 = vrot.slane %v3035, 4
        %v3038 = vshll.u32 %v2741, 16
        %v3040 = vrot.slane %v3038, 5
        %v3041 = vsel %vm902, %v3036, %v3040
        %v3043 = vshrl.u32 %v2742, 16
        %v3045 = vrot.slane %v3043, 4
        %v3046 = vshll.u32 %v2742, 16
        %v3048 = vrot.slane %v3046, 5
        %v3049 = vor.u32 %v3045, %v3048
        %v3050 = vrot.slane %v3049, 4
        %v3052 = vshll.u32 %v2743, 16
        %v3054 = vrot.slane %v3052, 5
        %v3055 = vsel %vm902, %v3050, %v3054
        %v3056 = vshrl.u32 %v2743, 16
        %v3058 = vrot.slane %v3056, 4
        %v3059 = vor.u32 %v3058, %v3054
        %v3060 = vrot.slane %v3059, 4
        %v3062 = vshll.u32 %v2744, 16
        %v3064 = vrot.slane %v3062, 5
        %v3065 = vsel %vm902, %v3060, %v3064
        %v3067 = vshrl.u32 %v2745, 16
        %v3069 = vrot.slane %v3067, 4
        %v3070 = vshll.u32 %v2745, 16
        %v3072 = vrot.slane %v3070, 5
        %v3073 = vor.u32 %v3069, %v3072
        %v3074 = vrot.slane %v3073, 4
        %v3076 = vshll.u32 %v2746, 16
        %v3078 = vrot.slane %v3076, 5
        %v3079 = vsel %vm902, %v3074, %v3078
        %v3080 = vshrl.u32 %v2746, 16
        %v3082 = vrot.slane %v3080, 4
        %v3083 = vor.u32 %v3082, %v3078
        %v3084 = vrot.slane %v3083, 4
        %v3086 = vshll.u32 %v2747, 16
        %v3088 = vrot.slane %v3086, 5
        %v3089 = vsel %vm902, %v3084, %v3088
        %v3091 = vshrl.u32 %v2748, 16
        %v3093 = vrot.slane %v3091, 4
        %v3094 = vshll.u32 %v2748, 16
        %v3096 = vrot.slane %v3094, 5
        %v3097 = vor.u32 %v3093, %v3096
        %v3098 = vrot.slane %v3097, 4
        %v3100 = vshll.u32 %v2749, 16
        %v3102 = vrot.slane %v3100, 5
        %v3103 = vsel %vm902, %v3098, %v3102
        %v3104 = vshrl.u32 %v2749, 16
        %v3106 = vrot.slane %v3104, 4
        %v3107 = vor.u32 %v3106, %v3102
        %v3108 = vrot.slane %v3107, 4
        %v3110 = vshll.u32 %v2750, 16
        %v3112 = vrot.slane %v3110, 5
        %v3113 = vsel %vm902, %v3108, %v3112
        %v3115 = vshrl.u32 %v2751, 16
        %v3117 = vrot.slane %v3115, 4
        %v3118 = vshll.u32 %v2751, 16
        %v3120 = vrot.slane %v3118, 5
        %v3121 = vor.u32 %v3117, %v3120
        %v3122 = vrot.slane %v3121, 4
        %v3124 = vshll.u32 %v2752, 16
        %v3126 = vrot.slane %v3124, 5
        %v3127 = vsel %vm902, %v3122, %v3126
        %v3128 = vshrl.u32 %v2752, 16
        %v3130 = vrot.slane %v3128, 4
        %v3131 = vor.u32 %v3130, %v3126
        %v3132 = vrot.slane %v3131, 4
        %v3134 = vshll.u32 %v2753, 16
        %v3136 = vrot.slane %v3134, 5
        %v3137 = vsel %vm902, %v3132, %v3136
        %s3138 = scalar_lea.vmem [#allocation6], 64
        %v3139 = vld [vmem:[%s3138] sm:$0xf]
        %v3140 = vld [vmem:[%s3138 + $0x4] sm:$0xf]
        %v3141 = vld [vmem:[%s3138 + $0x8] sm:$0xf]
        %v3142 = vld [vmem:[%s3138 + $0xc] sm:$0xf]
        %v3143 = vunpack.c.l.b16 %v2767
        %v3144 = vunpack.c.l.b16 %v2777
        %v3145 = vunpack.c.l.b16 %v2791
        %v3146 = vunpack.c.l.b16 %v2801
        %v3147 = vunpack.c.l.b16 %v2815
        %v3148 = vunpack.c.l.b16 %v2825
        %v3149 = vunpack.c.l.b16 %v2839
        %v3150 = vunpack.c.l.b16 %v2849
        %v3151 = vunpack.c.l.b16 %v2863
        %v3152 = vunpack.c.l.b16 %v2873
        %v3153 = vunpack.c.l.b16 %v2887
        %v3154 = vunpack.c.l.b16 %v2897
        %v3155 = vunpack.c.l.b16 %v2911
        %v3156 = vunpack.c.l.b16 %v2921
        %v3157 = vunpack.c.l.b16 %v2935
        %v3158 = vunpack.c.l.b16 %v2945
        %v3159 = vunpack.c.l.b16 %v2959
        %v3160 = vunpack.c.l.b16 %v2969
        %v3161 = vunpack.c.l.b16 %v2983
        %v3162 = vunpack.c.l.b16 %v2993
        %v3163 = vunpack.c.l.b16 %v3007
        %v3164 = vunpack.c.l.b16 %v3017
        %v3165 = vunpack.c.l.b16 %v3031
        %v3166 = vunpack.c.l.b16 %v3041
        %v3167 = vunpack.c.l.b16 %v3055
        %v3168 = vunpack.c.l.b16 %v3065
        %v3169 = vunpack.c.l.b16 %v3079
        %v3170 = vunpack.c.l.b16 %v3089
        %v3171 = vunpack.c.l.b16 %v3103
        %v3172 = vunpack.c.l.b16 %v3113
        %v3173 = vunpack.c.l.b16 %v3127
        %v3174 = vunpack.c.l.b16 %v3137
        %v3175 = vpack.c.b16 %v3144, %v3143
        %v3176 = vpack.c.b16 %v3146, %v3145
        %v3177 = vpack.c.b16 %v3148, %v3147
        %v3178 = vpack.c.b16 %v3150, %v3149
        %v3179 = vpack.c.b16 %v3152, %v3151
        %v3180 = vpack.c.b16 %v3154, %v3153
        %v3181 = vpack.c.b16 %v3156, %v3155
        %v3182 = vpack.c.b16 %v3158, %v3157
        %v3183 = vpack.c.b16 %v3160, %v3159
        %v3184 = vpack.c.b16 %v3162, %v3161
        %v3185 = vpack.c.b16 %v3164, %v3163
        %v3186 = vpack.c.b16 %v3166, %v3165
        %v3187 = vpack.c.b16 %v3168, %v3167
        %v3188 = vpack.c.b16 %v3170, %v3169
        %v3189 = vpack.c.b16 %v3172, %v3171
        %v3190 = vpack.c.b16 %v3174, %v3173
        %v3195 = vunpack.c.l.b16 %v3139
        %v3196 = vunpack.c.l.b16 %v3140
        %v3197 = vunpack.c.l.b16 %v3141
        %v3198 = vunpack.c.l.b16 %v3142
        %v3199 = vpack.c.b16 %v3196, %v3195
        %v3200 = vpack.c.b16 %v3198, %v3197
        %v3204 = vsel %vm1352, %v3175, 0
        %v3207 = vsel %vm1352, %v3176, 0
        %v3210 = vsel %vm1352, %v3177, 0
        %v3213 = vsel %vm1352, %v3178, 0
        %v3216 = vsel %vm1352, %v3179, 0
        %v3219 = vsel %vm1352, %v3180, 0
        %v3222 = vsel %vm1352, %v3181, 0
        %v3225 = vsel %vm1352, %v3182, 0
        %v3228 = vsel %vm1352, %v3183, 0
        %v3231 = vsel %vm1352, %v3184, 0
        %v3234 = vsel %vm1352, %v3185, 0
        %v3237 = vsel %vm1352, %v3186, 0
        %v3240 = vsel %vm1352, %v3187, 0
        %v3243 = vsel %vm1352, %v3188, 0
        %v3246 = vsel %vm1352, %v3189, 0
        %v3249 = vsel %vm1352, %v3190, 0
        %3251 = vmatprep.subr.bf16.mxu0 0
        %3252 = vmatpush1.bf16.msra.mxu0 0
        %3253 = vmatprep.subr.bf16.mxu0 0
        %3254 = vmatpush1.bf16.msra.mxu0 0
        %3255 = vmatprep.subr.bf16.mxu0 0
        %3256 = vmatpush1.bf16.msra.mxu0 0
        %3257 = vmatprep.subr.bf16.mxu0 0
        %3258 = vmatpush1.bf16.msra.mxu0 0
        %3259 = vmatprep.subr.bf16.mxu0 0
        %3260 = vmatpush1.bf16.msra.mxu0 0
        %3261 = vmatprep.subr.bf16.mxu0 0
        %3262 = vmatpush1.bf16.msra.mxu0 0
        %3263 = vmatprep.subr.bf16.mxu0 0
        %3264 = vmatpush1.bf16.msra.mxu0 %v3200
        %3265 = vmatprep.subr.bf16.mxu0 0
        %3266 = vmatpush1.bf16.msra.mxu0 %v3199
        %3267 = vmatprep.subr.bf16.mxu0 0
        %3268 = vmatpush2.bf16.msra.mxu0 0
        %3269 = vmatprep.subr.bf16.mxu0 0
        %3270 = vmatpush2.bf16.msra.mxu0 0
        %3271 = vmatprep.subr.bf16.mxu0 0
        %3272 = vmatpush2.bf16.msra.mxu0 0
        %3273 = vmatprep.subr.bf16.mxu0 0
        %3274 = vmatpush2.bf16.msra.mxu0 0
        %3275 = vmatprep.subr.bf16.mxu0 0
        %3276 = vmatpush2.bf16.msra.mxu0 0
        %3277 = vmatprep.subr.bf16.mxu0 0
        %3278 = vmatpush2.bf16.msra.mxu0 0
        %3279 = vmatprep.subr.bf16.mxu0 0
        %3280 = vmatpush2.bf16.msra.mxu0 0
        %3281 = vmatprep.subr.bf16.mxu0 0
        %3282 = vmatpush2.bf16.msra.mxu0 0
        %3283 = vmatprep.mubr.bf16.mxu0 0
        %3284 = vmatmul.mubr.bf16.gmra.mxu0 %v3204
        %v3285 = vpop.f32.mrf.mxu0
        %v3286 = vadd.f32 0.0, %v3285
        %v3287 = vpop.f32.mrf.mxu0
        %v3288 = vpop.f32.mrf.mxu0
        %v3289 = vadd.f32 0.0, %v3288
        %v3290 = vpop.f32.mrf.mxu0
        %3291 = vmatprep.mubr.bf16.mxu0 0
        %3292 = vmatmul.mubr.bf16.gmra.mxu0 %v3207
        %v3293 = vpop.f32.mrf.mxu0
        %v3294 = vadd.f32 0.0, %v3293
        %v3295 = vpop.f32.mrf.mxu0
        %v3296 = vpop.f32.mrf.mxu0
        %v3297 = vadd.f32 0.0, %v3296
        %v3298 = vpop.f32.mrf.mxu0
        %3299 = vmatprep.mubr.bf16.mxu0 0
        %3300 = vmatmul.mubr.bf16.gmra.mxu0 %v3210
        %v3301 = vpop.f32.mrf.mxu0
        %v3302 = vadd.f32 0.0, %v3301
        %v3303 = vpop.f32.mrf.mxu0
        %v3304 = vpop.f32.mrf.mxu0
        %v3305 = vadd.f32 0.0, %v3304
        %v3306 = vpop.f32.mrf.mxu0
        %3307 = vmatprep.mubr.bf16.mxu0 0
        %3308 = vmatmul.mubr.bf16.gmra.mxu0 %v3213
        %v3309 = vpop.f32.mrf.mxu0
        %v3310 = vadd.f32 0.0, %v3309
        %v3311 = vpop.f32.mrf.mxu0
        %v3312 = vpop.f32.mrf.mxu0
        %v3313 = vadd.f32 0.0, %v3312
        %v3314 = vpop.f32.mrf.mxu0
        %3315 = vmatprep.mubr.bf16.mxu0 0
        %3316 = vmatmul.mubr.bf16.gmra.mxu0 %v3216
        %v3317 = vpop.f32.mrf.mxu0
        %v3318 = vadd.f32 0.0, %v3317
        %v3319 = vpop.f32.mrf.mxu0
        %v3320 = vpop.f32.mrf.mxu0
        %v3321 = vadd.f32 0.0, %v3320
        %v3322 = vpop.f32.mrf.mxu0
        %3323 = vmatprep.mubr.bf16.mxu0 0
        %3324 = vmatmul.mubr.bf16.gmra.mxu0 %v3219
        %v3325 = vpop.f32.mrf.mxu0
        %v3326 = vadd.f32 0.0, %v3325
        %v3327 = vpop.f32.mrf.mxu0
        %v3328 = vpop.f32.mrf.mxu0
        %v3329 = vadd.f32 0.0, %v3328
        %v3330 = vpop.f32.mrf.mxu0
        %3331 = vmatprep.mubr.bf16.mxu0 0
        %3332 = vmatmul.mubr.bf16.gmra.mxu0 %v3222
        %v3333 = vpop.f32.mrf.mxu0
        %v3334 = vadd.f32 0.0, %v3333
        %v3335 = vpop.f32.mrf.mxu0
        %v3336 = vpop.f32.mrf.mxu0
        %v3337 = vadd.f32 0.0, %v3336
        %v3338 = vpop.f32.mrf.mxu0
        %3339 = vmatprep.mubr.bf16.mxu0 0
        %3340 = vmatmul.mubr.bf16.gmra.mxu0 %v3225
        %v3341 = vpop.f32.mrf.mxu0
        %v3342 = vadd.f32 0.0, %v3341
        %v3343 = vpop.f32.mrf.mxu0
        %v3344 = vpop.f32.mrf.mxu0
        %v3345 = vadd.f32 0.0, %v3344
        %v3346 = vpop.f32.mrf.mxu0
        %3347 = vmatprep.mubr.bf16.mxu0 0
        %3348 = vmatmul.mubr.bf16.gmra.mxu0 %v3228
        %v3349 = vpop.f32.mrf.mxu0
        %v3350 = vadd.f32 0.0, %v3349
        %v3351 = vpop.f32.mrf.mxu0
        %v3352 = vpop.f32.mrf.mxu0
        %v3353 = vadd.f32 0.0, %v3352
        %v3354 = vpop.f32.mrf.mxu0
        %3355 = vmatprep.mubr.bf16.mxu0 0
        %3356 = vmatmul.mubr.bf16.gmra.mxu0 %v3231
        %v3357 = vpop.f32.mrf.mxu0
        %v3358 = vadd.f32 0.0, %v3357
        %v3359 = vpop.f32.mrf.mxu0
        %v3360 = vpop.f32.mrf.mxu0
        %v3361 = vadd.f32 0.0, %v3360
        %v3362 = vpop.f32.mrf.mxu0
        %3363 = vmatprep.mubr.bf16.mxu0 0
        %3364 = vmatmul.mubr.bf16.gmra.mxu0 %v3234
        %v3365 = vpop.f32.mrf.mxu0
        %v3366 = vadd.f32 0.0, %v3365
        %v3367 = vpop.f32.mrf.mxu0
        %v3368 = vpop.f32.mrf.mxu0
        %v3369 = vadd.f32 0.0, %v3368
        %v3370 = vpop.f32.mrf.mxu0
        %3371 = vmatprep.mubr.bf16.mxu0 0
        %3372 = vmatmul.mubr.bf16.gmra.mxu0 %v3237
        %v3373 = vpop.f32.mrf.mxu0
        %v3374 = vadd.f32 0.0, %v3373
        %v3375 = vpop.f32.mrf.mxu0
        %v3376 = vpop.f32.mrf.mxu0
        %v3377 = vadd.f32 0.0, %v3376
        %v3378 = vpop.f32.mrf.mxu0
        %3379 = vmatprep.mubr.bf16.mxu0 0
        %3380 = vmatmul.mubr.bf16.gmra.mxu0 %v3240
        %v3381 = vpop.f32.mrf.mxu0
        %v3382 = vadd.f32 0.0, %v3381
        %v3383 = vpop.f32.mrf.mxu0
        %v3384 = vpop.f32.mrf.mxu0
        %v3385 = vadd.f32 0.0, %v3384
        %v3386 = vpop.f32.mrf.mxu0
        %3387 = vmatprep.mubr.bf16.mxu0 0
        %3388 = vmatmul.mubr.bf16.gmra.mxu0 %v3243
        %v3389 = vpop.f32.mrf.mxu0
        %v3390 = vadd.f32 0.0, %v3389
        %v3391 = vpop.f32.mrf.mxu0
        %v3392 = vpop.f32.mrf.mxu0
        %v3393 = vadd.f32 0.0, %v3392
        %v3394 = vpop.f32.mrf.mxu0
        %3395 = vmatprep.mubr.bf16.mxu0 0
        %3396 = vmatmul.mubr.bf16.gmra.mxu0 %v3246
        %v3397 = vpop.f32.mrf.mxu0
        %v3398 = vadd.f32 0.0, %v3397
        %v3399 = vpop.f32.mrf.mxu0
        %v3400 = vpop.f32.mrf.mxu0
        %v3401 = vadd.f32 0.0, %v3400
        %v3402 = vpop.f32.mrf.mxu0
        %3403 = vmatprep.mubr.bf16.mxu0 0
        %3404 = vmatmul.mubr.bf16.gmra.mxu0 %v3249
        %v3405 = vpop.f32.mrf.mxu0
        %v3406 = vadd.f32 0.0, %v3405
        %v3407 = vpop.f32.mrf.mxu0
        %v3408 = vpop.f32.mrf.mxu0
        %v3409 = vadd.f32 0.0, %v3408
        %v3410 = vpop.f32.mrf.mxu0
        %3411 = vdwg.mxu0
        %v3412 = vadd.f32 %v2674, %v3286
        %v3413 = vadd.f32 %v2675, %v3289
        %v3414 = vadd.f32 %v2676, %v3294
        %v3415 = vadd.f32 %v2677, %v3297
        %v3416 = vadd.f32 %v2678, %v3302
        %v3417 = vadd.f32 %v2679, %v3305
        %v3418 = vadd.f32 %v2680, %v3310
        %v3419 = vadd.f32 %v2681, %v3313
        %v3420 = vadd.f32 %v2682, %v3318
        %v3421 = vadd.f32 %v2683, %v3321
        %v3422 = vadd.f32 %v2684, %v3326
        %v3423 = vadd.f32 %v2685, %v3329
        %v3424 = vadd.f32 %v2686, %v3334
        %v3425 = vadd.f32 %v2687, %v3337
        %v3426 = vadd.f32 %v2688, %v3342
        %v3427 = vadd.f32 %v2689, %v3345
        %v3428 = vadd.f32 %v2690, %v3350
        %v3429 = vadd.f32 %v2691, %v3353
        %v3430 = vadd.f32 %v2692, %v3358
        %v3431 = vadd.f32 %v2693, %v3361
        %v3432 = vadd.f32 %v2694, %v3366
        %v3433 = vadd.f32 %v2695, %v3369
        %v3434 = vadd.f32 %v2696, %v3374
        %v3435 = vadd.f32 %v2697, %v3377
        %v3436 = vadd.f32 %v2698, %v3382
        %v3437 = vadd.f32 %v2699, %v3385
        %v3438 = vadd.f32 %v2700, %v3390
        %v3439 = vadd.f32 %v2701, %v3393
        %v3440 = vadd.f32 %v2702, %v3398
        %v3441 = vadd.f32 %v2703, %v3401
        %v3442 = vadd.f32 %v2704, %v3406
        %v3443 = vadd.f32 %v2705, %v3409
        %v3444 = vld [vmem:[%s2335] sm:$0xe]
        %v3445 = vld [vmem:[%s2335 + $0xc] sm:$0xe]
        %v3446 = vld [vmem:[%s2335 + $0x18] sm:$0xe]
        %v3447 = vld [vmem:[%s2335 + $0x24] sm:$0xe]
        %v3448 = vld [vmem:[%s2335 + $0x30] sm:$0xe]
        %v3449 = vld [vmem:[%s2335 + $0x3c] sm:$0xe]
        %v3450 = vld [vmem:[%s2335 + $0x48] sm:$0xe]
        %v3451 = vld [vmem:[%s2335 + $0x54] sm:$0xe]
        %v3452 = vld [vmem:[%s2335 + $0x60] sm:$0xe]
        %v3453 = vld [vmem:[%s2335 + $0x6c] sm:$0xe]
        %v3454 = vld [vmem:[%s2335 + $0x78] sm:$0xe]
        %v3455 = vld [vmem:[%s2335 + $0x84] sm:$0xe]
        %v3456 = vld [vmem:[%s2335 + $0x90] sm:$0xe]
        %v3457 = vld [vmem:[%s2335 + $0x9c] sm:$0xe]
        %v3458 = vld [vmem:[%s2335 + $0xa8] sm:$0xe]
        %v3459 = vld [vmem:[%s2335 + $0xb4] sm:$0xe]
        %v3508 = vrot.slane %v3444, 5
        %v3509 = vrot.slane %v3508, 4
        %v3510 = vrot.slane %v2707, 5
        %v3511 = vsel %vm1913, %v3509, %v3510
        %v3512 = vrot.slane %v3510, 4
        %v3513 = vrot.slane %v2708, 5
        %v3514 = vsel %vm1913, %v3512, %v3513
        %v3515 = vrot.slane %v3445, 5
        %v3516 = vrot.slane %v3515, 4
        %v3517 = vrot.slane %v2710, 5
        %v3518 = vsel %vm1913, %v3516, %v3517
        %v3519 = vrot.slane %v3517, 4
        %v3520 = vrot.slane %v2711, 5
        %v3521 = vsel %vm1913, %v3519, %v3520
        %v3522 = vrot.slane %v3446, 5
        %v3523 = vrot.slane %v3522, 4
        %v3524 = vrot.slane %v2713, 5
        %v3525 = vsel %vm1913, %v3523, %v3524
        %v3526 = vrot.slane %v3524, 4
        %v3527 = vrot.slane %v2714, 5
        %v3528 = vsel %vm1913, %v3526, %v3527
        %v3529 = vrot.slane %v3447, 5
        %v3530 = vrot.slane %v3529, 4
        %v3531 = vrot.slane %v2716, 5
        %v3532 = vsel %vm1913, %v3530, %v3531
        %v3533 = vrot.slane %v3531, 4
        %v3534 = vrot.slane %v2717, 5
        %v3535 = vsel %vm1913, %v3533, %v3534
        %v3536 = vrot.slane %v3448, 5
        %v3537 = vrot.slane %v3536, 4
        %v3538 = vrot.slane %v2719, 5
        %v3539 = vsel %vm1913, %v3537, %v3538
        %v3540 = vrot.slane %v3538, 4
        %v3541 = vrot.slane %v2720, 5
        %v3542 = vsel %vm1913, %v3540, %v3541
        %v3543 = vrot.slane %v3449, 5
        %v3544 = vrot.slane %v3543, 4
        %v3545 = vrot.slane %v2722, 5
        %v3546 = vsel %vm1913, %v3544, %v3545
        %v3547 = vrot.slane %v3545, 4
        %v3548 = vrot.slane %v2723, 5
        %v3549 = vsel %vm1913, %v3547, %v3548
        %v3550 = vrot.slane %v3450, 5
        %v3551 = vrot.slane %v3550, 4
        %v3552 = vrot.slane %v2725, 5
        %v3553 = vsel %vm1913, %v3551, %v3552
        %v3554 = vrot.slane %v3552, 4
        %v3555 = vrot.slane %v2726, 5
        %v3556 = vsel %vm1913, %v3554, %v3555
        %v3557 = vrot.slane %v3451, 5
        %v3558 = vrot.slane %v3557, 4
        %v3559 = vrot.slane %v2728, 5
        %v3560 = vsel %vm1913, %v3558, %v3559
        %v3561 = vrot.slane %v3559, 4
        %v3562 = vrot.slane %v2729, 5
        %v3563 = vsel %vm1913, %v3561, %v3562
        %v3564 = vrot.slane %v3452, 5
        %v3565 = vrot.slane %v3564, 4
        %v3566 = vrot.slane %v2731, 5
        %v3567 = vsel %vm1913, %v3565, %v3566
        %v3568 = vrot.slane %v3566, 4
        %v3569 = vrot.slane %v2732, 5
        %v3570 = vsel %vm1913, %v3568, %v3569
        %v3571 = vrot.slane %v3453, 5
        %v3572 = vrot.slane %v3571, 4
        %v3573 = vrot.slane %v2734, 5
        %v3574 = vsel %vm1913, %v3572, %v3573
        %v3575 = vrot.slane %v3573, 4
        %v3576 = vrot.slane %v2735, 5
        %v3577 = vsel %vm1913, %v3575, %v3576
        %v3578 = vrot.slane %v3454, 5
        %v3579 = vrot.slane %v3578, 4
        %v3580 = vrot.slane %v2737, 5
        %v3581 = vsel %vm1913, %v3579, %v3580
        %v3582 = vrot.slane %v3580, 4
        %v3583 = vrot.slane %v2738, 5
        %v3584 = vsel %vm1913, %v3582, %v3583
        %v3585 = vrot.slane %v3455, 5
        %v3586 = vrot.slane %v3585, 4
        %v3587 = vrot.slane %v2740, 5
        %v3588 = vsel %vm1913, %v3586, %v3587
        %v3589 = vrot.slane %v3587, 4
        %v3590 = vrot.slane %v2741, 5
        %v3591 = vsel %vm1913, %v3589, %v3590
        %v3592 = vrot.slane %v3456, 5
        %v3593 = vrot.slane %v3592, 4
        %v3594 = vrot.slane %v2743, 5
        %v3595 = vsel %vm1913, %v3593, %v3594
        %v3596 = vrot.slane %v3594, 4
        %v3597 = vrot.slane %v2744, 5
        %v3598 = vsel %vm1913, %v3596, %v3597
        %v3599 = vrot.slane %v3457, 5
        %v3600 = vrot.slane %v3599, 4
        %v3601 = vrot.slane %v2746, 5
        %v3602 = vsel %vm1913, %v3600, %v3601
        %v3603 = vrot.slane %v3601, 4
        %v3604 = vrot.slane %v2747, 5
        %v3605 = vsel %vm1913, %v3603, %v3604
        %v3606 = vrot.slane %v3458, 5
        %v3607 = vrot.slane %v3606, 4
        %v3608 = vrot.slane %v2749, 5
        %v3609 = vsel %vm1913, %v3607, %v3608
        %v3610 = vrot.slane %v3608, 4
        %v3611 = vrot.slane %v2750, 5
        %v3612 = vsel %vm1913, %v3610, %v3611
        %v3613 = vrot.slane %v3459, 5
        %v3614 = vrot.slane %v3613, 4
        %v3615 = vrot.slane %v2752, 5
        %v3616 = vsel %vm1913, %v3614, %v3615
        %v3617 = vrot.slane %v3615, 4
        %v3618 = vrot.slane %v2753, 5
        %v3619 = vsel %vm1913, %v3617, %v3618
        %s3620 = scalar_lea.vmem [#allocation6], 80
        %v3621 = vld [vmem:[%s3620] sm:$0xf]
        %v3622 = vld [vmem:[%s3620 + $0x4] sm:$0xf]
        %v3623 = vld [vmem:[%s3620 + $0x8] sm:$0xf]
        %v3624 = vld [vmem:[%s3620 + $0xc] sm:$0xf]
        %v3625 = vunpack.c.l.b16 %v3511
        %v3626 = vunpack.c.l.b16 %v3514
        %v3627 = vunpack.c.l.b16 %v3518
        %v3628 = vunpack.c.l.b16 %v3521
        %v3629 = vunpack.c.l.b16 %v3525
        %v3630 = vunpack.c.l.b16 %v3528
        %v3631 = vunpack.c.l.b16 %v3532
        %v3632 = vunpack.c.l.b16 %v3535
        %v3633 = vunpack.c.l.b16 %v3539
        %v3634 = vunpack.c.l.b16 %v3542
        %v3635 = vunpack.c.l.b16 %v3546
        %v3636 = vunpack.c.l.b16 %v3549
        %v3637 = vunpack.c.l.b16 %v3553
        %v3638 = vunpack.c.l.b16 %v3556
        %v3639 = vunpack.c.l.b16 %v3560
        %v3640 = vunpack.c.l.b16 %v3563
        %v3641 = vunpack.c.l.b16 %v3567
        %v3642 = vunpack.c.l.b16 %v3570
        %v3643 = vunpack.c.l.b16 %v3574
        %v3644 = vunpack.c.l.b16 %v3577
        %v3645 = vunpack.c.l.b16 %v3581
        %v3646 = vunpack.c.l.b16 %v3584
        %v3647 = vunpack.c.l.b16 %v3588
        %v3648 = vunpack.c.l.b16 %v3591
        %v3649 = vunpack.c.l.b16 %v3595
        %v3650 = vunpack.c.l.b16 %v3598
        %v3651 = vunpack.c.l.b16 %v3602
        %v3652 = vunpack.c.l.b16 %v3605
        %v3653 = vunpack.c.l.b16 %v3609
        %v3654 = vunpack.c.l.b16 %v3612
        %v3655 = vunpack.c.l.b16 %v3616
        %v3656 = vunpack.c.l.b16 %v3619
        %v3657 = vpack.c.b16 %v3626, %v3625
        %v3658 = vpack.c.b16 %v3628, %v3627
        %v3659 = vpack.c.b16 %v3630, %v3629
        %v3660 = vpack.c.b16 %v3632, %v3631
        %v3661 = vpack.c.b16 %v3634, %v3633
        %v3662 = vpack.c.b16 %v3636, %v3635
        %v3663 = vpack.c.b16 %v3638, %v3637
        %v3664 = vpack.c.b16 %v3640, %v3639
        %v3665 = vpack.c.b16 %v3642, %v3641
        %v3666 = vpack.c.b16 %v3644, %v3643
        %v3667 = vpack.c.b16 %v3646, %v3645
        %v3668 = vpack.c.b16 %v3648, %v3647
        %v3669 = vpack.c.b16 %v3650, %v3649
        %v3670 = vpack.c.b16 %v3652, %v3651
        %v3671 = vpack.c.b16 %v3654, %v3653
        %v3672 = vpack.c.b16 %v3656, %v3655
        %v3677 = vunpack.c.l.b16 %v3621
        %v3678 = vunpack.c.l.b16 %v3622
        %v3679 = vunpack.c.l.b16 %v3623
        %v3680 = vunpack.c.l.b16 %v3624
        %v3681 = vpack.c.b16 %v3678, %v3677
        %v3682 = vpack.c.b16 %v3680, %v3679
        %v3686 = vsel %vm1352, %v3657, 0
        %v3689 = vsel %vm1352, %v3658, 0
        %v3692 = vsel %vm1352, %v3659, 0
        %v3695 = vsel %vm1352, %v3660, 0
        %v3698 = vsel %vm1352, %v3661, 0
        %v3701 = vsel %vm1352, %v3662, 0
        %v3704 = vsel %vm1352, %v3663, 0
        %v3707 = vsel %vm1352, %v3664, 0
        %v3710 = vsel %vm1352, %v3665, 0
        %v3713 = vsel %vm1352, %v3666, 0
        %v3716 = vsel %vm1352, %v3667, 0
        %v3719 = vsel %vm1352, %v3668, 0
        %v3722 = vsel %vm1352, %v3669, 0
        %v3725 = vsel %vm1352, %v3670, 0
        %v3728 = vsel %vm1352, %v3671, 0
        %v3731 = vsel %vm1352, %v3672, 0
        %3733 = vmatprep.subr.bf16.mxu0 0
        %3734 = vmatpush1.bf16.msra.mxu0 0
        %3735 = vmatprep.subr.bf16.mxu0 0
        %3736 = vmatpush1.bf16.msra.mxu0 0
        %3737 = vmatprep.subr.bf16.mxu0 0
        %3738 = vmatpush1.bf16.msra.mxu0 0
        %3739 = vmatprep.subr.bf16.mxu0 0
        %3740 = vmatpush1.bf16.msra.mxu0 0
        %3741 = vmatprep.subr.bf16.mxu0 0
        %3742 = vmatpush1.bf16.msra.mxu0 0
        %3743 = vmatprep.subr.bf16.mxu0 0
        %3744 = vmatpush1.bf16.msra.mxu0 0
        %3745 = vmatprep.subr.bf16.mxu0 0
        %3746 = vmatpush1.bf16.msra.mxu0 %v3682
        %3747 = vmatprep.subr.bf16.mxu0 0
        %3748 = vmatpush1.bf16.msra.mxu0 %v3681
        %3749 = vmatprep.subr.bf16.mxu0 0
        %3750 = vmatpush2.bf16.msra.mxu0 0
        %3751 = vmatprep.subr.bf16.mxu0 0
        %3752 = vmatpush2.bf16.msra.mxu0 0
        %3753 = vmatprep.subr.bf16.mxu0 0
        %3754 = vmatpush2.bf16.msra.mxu0 0
        %3755 = vmatprep.subr.bf16.mxu0 0
        %3756 = vmatpush2.bf16.msra.mxu0 0
        %3757 = vmatprep.subr.bf16.mxu0 0
        %3758 = vmatpush2.bf16.msra.mxu0 0
        %3759 = vmatprep.subr.bf16.mxu0 0
        %3760 = vmatpush2.bf16.msra.mxu0 0
        %3761 = vmatprep.subr.bf16.mxu0 0
        %3762 = vmatpush2.bf16.msra.mxu0 0
        %3763 = vmatprep.subr.bf16.mxu0 0
        %3764 = vmatpush2.bf16.msra.mxu0 0
        %3765 = vmatprep.mubr.bf16.mxu0 0
        %3766 = vmatmul.mubr.bf16.gmra.mxu0 %v3686
        %v3767 = vpop.f32.mrf.mxu0
        %v3768 = vadd.f32 0.0, %v3767
        %v3769 = vpop.f32.mrf.mxu0
        %v3770 = vpop.f32.mrf.mxu0
        %v3771 = vadd.f32 0.0, %v3770
        %v3772 = vpop.f32.mrf.mxu0
        %3773 = vmatprep.mubr.bf16.mxu0 0
        %3774 = vmatmul.mubr.bf16.gmra.mxu0 %v3689
        %v3775 = vpop.f32.mrf.mxu0
        %v3776 = vadd.f32 0.0, %v3775
        %v3777 = vpop.f32.mrf.mxu0
        %v3778 = vpop.f32.mrf.mxu0
        %v3779 = vadd.f32 0.0, %v3778
        %v3780 = vpop.f32.mrf.mxu0
        %3781 = vmatprep.mubr.bf16.mxu0 0
        %3782 = vmatmul.mubr.bf16.gmra.mxu0 %v3692
        %v3783 = vpop.f32.mrf.mxu0
        %v3784 = vadd.f32 0.0, %v3783
        %v3785 = vpop.f32.mrf.mxu0
        %v3786 = vpop.f32.mrf.mxu0
        %v3787 = vadd.f32 0.0, %v3786
        %v3788 = vpop.f32.mrf.mxu0
        %3789 = vmatprep.mubr.bf16.mxu0 0
        %3790 = vmatmul.mubr.bf16.gmra.mxu0 %v3695
        %v3791 = vpop.f32.mrf.mxu0
        %v3792 = vadd.f32 0.0, %v3791
        %v3793 = vpop.f32.mrf.mxu0
        %v3794 = vpop.f32.mrf.mxu0
        %v3795 = vadd.f32 0.0, %v3794
        %v3796 = vpop.f32.mrf.mxu0
        %3797 = vmatprep.mubr.bf16.mxu0 0
        %3798 = vmatmul.mubr.bf16.gmra.mxu0 %v3698
        %v3799 = vpop.f32.mrf.mxu0
        %v3800 = vadd.f32 0.0, %v3799
        %v3801 = vpop.f32.mrf.mxu0
        %v3802 = vpop.f32.mrf.mxu0
        %v3803 = vadd.f32 0.0, %v3802
        %v3804 = vpop.f32.mrf.mxu0
        %3805 = vmatprep.mubr.bf16.mxu0 0
        %3806 = vmatmul.mubr.bf16.gmra.mxu0 %v3701
        %v3807 = vpop.f32.mrf.mxu0
        %v3808 = vadd.f32 0.0, %v3807
        %v3809 = vpop.f32.mrf.mxu0
        %v3810 = vpop.f32.mrf.mxu0
        %v3811 = vadd.f32 0.0, %v3810
        %v3812 = vpop.f32.mrf.mxu0
        %3813 = vmatprep.mubr.bf16.mxu0 0
        %3814 = vmatmul.mubr.bf16.gmra.mxu0 %v3704
        %v3815 = vpop.f32.mrf.mxu0
        %v3816 = vadd.f32 0.0, %v3815
        %v3817 = vpop.f32.mrf.mxu0
        %v3818 = vpop.f32.mrf.mxu0
        %v3819 = vadd.f32 0.0, %v3818
        %v3820 = vpop.f32.mrf.mxu0
        %3821 = vmatprep.mubr.bf16.mxu0 0
        %3822 = vmatmul.mubr.bf16.gmra.mxu0 %v3707
        %v3823 = vpop.f32.mrf.mxu0
        %v3824 = vadd.f32 0.0, %v3823
        %v3825 = vpop.f32.mrf.mxu0
        %v3826 = vpop.f32.mrf.mxu0
        %v3827 = vadd.f32 0.0, %v3826
        %v3828 = vpop.f32.mrf.mxu0
        %3829 = vmatprep.mubr.bf16.mxu0 0
        %3830 = vmatmul.mubr.bf16.gmra.mxu0 %v3710
        %v3831 = vpop.f32.mrf.mxu0
        %v3832 = vadd.f32 0.0, %v3831
        %v3833 = vpop.f32.mrf.mxu0
        %v3834 = vpop.f32.mrf.mxu0
        %v3835 = vadd.f32 0.0, %v3834
        %v3836 = vpop.f32.mrf.mxu0
        %3837 = vmatprep.mubr.bf16.mxu0 0
        %3838 = vmatmul.mubr.bf16.gmra.mxu0 %v3713
        %v3839 = vpop.f32.mrf.mxu0
        %v3840 = vadd.f32 0.0, %v3839
        %v3841 = vpop.f32.mrf.mxu0
        %v3842 = vpop.f32.mrf.mxu0
        %v3843 = vadd.f32 0.0, %v3842
        %v3844 = vpop.f32.mrf.mxu0
        %3845 = vmatprep.mubr.bf16.mxu0 0
        %3846 = vmatmul.mubr.bf16.gmra.mxu0 %v3716
        %v3847 = vpop.f32.mrf.mxu0
        %v3848 = vadd.f32 0.0, %v3847
        %v3849 = vpop.f32.mrf.mxu0
        %v3850 = vpop.f32.mrf.mxu0
        %v3851 = vadd.f32 0.0, %v3850
        %v3852 = vpop.f32.mrf.mxu0
        %3853 = vmatprep.mubr.bf16.mxu0 0
        %3854 = vmatmul.mubr.bf16.gmra.mxu0 %v3719
        %v3855 = vpop.f32.mrf.mxu0
        %v3856 = vadd.f32 0.0, %v3855
        %v3857 = vpop.f32.mrf.mxu0
        %v3858 = vpop.f32.mrf.mxu0
        %v3859 = vadd.f32 0.0, %v3858
        %v3860 = vpop.f32.mrf.mxu0
        %3861 = vmatprep.mubr.bf16.mxu0 0
        %3862 = vmatmul.mubr.bf16.gmra.mxu0 %v3722
        %v3863 = vpop.f32.mrf.mxu0
        %v3864 = vadd.f32 0.0, %v3863
        %v3865 = vpop.f32.mrf.mxu0
        %v3866 = vpop.f32.mrf.mxu0
        %v3867 = vadd.f32 0.0, %v3866
        %v3868 = vpop.f32.mrf.mxu0
        %3869 = vmatprep.mubr.bf16.mxu0 0
        %3870 = vmatmul.mubr.bf16.gmra.mxu0 %v3725
        %v3871 = vpop.f32.mrf.mxu0
        %v3872 = vadd.f32 0.0, %v3871
        %v3873 = vpop.f32.mrf.mxu0
        %v3874 = vpop.f32.mrf.mxu0
        %v3875 = vadd.f32 0.0, %v3874
        %v3876 = vpop.f32.mrf.mxu0
        %3877 = vmatprep.mubr.bf16.mxu0 0
        %3878 = vmatmul.mubr.bf16.gmra.mxu0 %v3728
        %v3879 = vpop.f32.mrf.mxu0
        %v3880 = vadd.f32 0.0, %v3879
        %v3881 = vpop.f32.mrf.mxu0
        %v3882 = vpop.f32.mrf.mxu0
        %v3883 = vadd.f32 0.0, %v3882
        %v3884 = vpop.f32.mrf.mxu0
        %3885 = vmatprep.mubr.bf16.mxu0 0
        %3886 = vmatmul.mubr.bf16.gmra.mxu0 %v3731
        %v3887 = vpop.f32.mrf.mxu0
        %v3888 = vadd.f32 0.0, %v3887
        %v3889 = vpop.f32.mrf.mxu0
        %v3890 = vpop.f32.mrf.mxu0
        %v3891 = vadd.f32 0.0, %v3890
        %v3892 = vpop.f32.mrf.mxu0
        %3893 = vdwg.mxu0
        %v3894 = vadd.f32 %v3412, %v3768
        %v3895 = vadd.f32 %v3413, %v3771
        %v3896 = vadd.f32 %v3414, %v3776
        %v3897 = vadd.f32 %v3415, %v3779
        %v3898 = vadd.f32 %v3416, %v3784
        %v3899 = vadd.f32 %v3417, %v3787
        %v3900 = vadd.f32 %v3418, %v3792
        %v3901 = vadd.f32 %v3419, %v3795
        %v3902 = vadd.f32 %v3420, %v3800
        %v3903 = vadd.f32 %v3421, %v3803
        %v3904 = vadd.f32 %v3422, %v3808
        %v3905 = vadd.f32 %v3423, %v3811
        %v3906 = vadd.f32 %v3424, %v3816
        %v3907 = vadd.f32 %v3425, %v3819
        %v3908 = vadd.f32 %v3426, %v3824
        %v3909 = vadd.f32 %v3427, %v3827
        %v3910 = vadd.f32 %v3428, %v3832
        %v3911 = vadd.f32 %v3429, %v3835
        %v3912 = vadd.f32 %v3430, %v3840
        %v3913 = vadd.f32 %v3431, %v3843
        %v3914 = vadd.f32 %v3432, %v3848
        %v3915 = vadd.f32 %v3433, %v3851
        %v3916 = vadd.f32 %v3434, %v3856
        %v3917 = vadd.f32 %v3435, %v3859
        %v3918 = vadd.f32 %v3436, %v3864
        %v3919 = vadd.f32 %v3437, %v3867
        %v3920 = vadd.f32 %v3438, %v3872
        %v3921 = vadd.f32 %v3439, %v3875
        %v3922 = vadd.f32 %v3440, %v3880
        %v3923 = vadd.f32 %v3441, %v3883
        %v3924 = vadd.f32 %v3442, %v3888
        %v3925 = vadd.f32 %v3443, %v3891
        %s3926 = sadd.s32 %s844, 2
        %s3927 = smul.u32 %s3926, 3
        %s3928 = smul.addr %s3927, 4
        %s3929 = scalar_lea.vmem [#allocation2], %s3928
        %v3930 = vld [vmem:[%s3929] sm:$0xf]
        %v3931 = vld [vmem:[%s3929 + $0x4] sm:$0xf]
        %v3932 = vld [vmem:[%s3929 + $0xc] sm:$0xf]
        %v3933 = vld [vmem:[%s3929 + $0x10] sm:$0xf]
        %v3934 = vld [vmem:[%s3929 + $0x18] sm:$0xf]
        %v3935 = vld [vmem:[%s3929 + $0x1c] sm:$0xf]
        %v3936 = vld [vmem:[%s3929 + $0x24] sm:$0xf]
        %v3937 = vld [vmem:[%s3929 + $0x28] sm:$0xf]
        %v3938 = vld [vmem:[%s3929 + $0x30] sm:$0xf]
        %v3939 = vld [vmem:[%s3929 + $0x34] sm:$0xf]
        %v3940 = vld [vmem:[%s3929 + $0x3c] sm:$0xf]
        %v3941 = vld [vmem:[%s3929 + $0x40] sm:$0xf]
        %v3942 = vld [vmem:[%s3929 + $0x48] sm:$0xf]
        %v3943 = vld [vmem:[%s3929 + $0x4c] sm:$0xf]
        %v3944 = vld [vmem:[%s3929 + $0x54] sm:$0xf]
        %v3945 = vld [vmem:[%s3929 + $0x58] sm:$0xf]
        %v3946 = vld [vmem:[%s3929 + $0x60] sm:$0xf]
        %v3947 = vld [vmem:[%s3929 + $0x64] sm:$0xf]
        %v3948 = vld [vmem:[%s3929 + $0x6c] sm:$0xf]
        %v3949 = vld [vmem:[%s3929 + $0x70] sm:$0xf]
        %v3950 = vld [vmem:[%s3929 + $0x78] sm:$0xf]
        %v3951 = vld [vmem:[%s3929 + $0x7c] sm:$0xf]
        %v3952 = vld [vmem:[%s3929 + $0x84] sm:$0xf]
        %v3953 = vld [vmem:[%s3929 + $0x88] sm:$0xf]
        %v3954 = vld [vmem:[%s3929 + $0x90] sm:$0xf]
        %v3955 = vld [vmem:[%s3929 + $0x94] sm:$0xf]
        %v3956 = vld [vmem:[%s3929 + $0x9c] sm:$0xf]
        %v3957 = vld [vmem:[%s3929 + $0xa0] sm:$0xf]
        %v3958 = vld [vmem:[%s3929 + $0xa8] sm:$0xf]
        %v3959 = vld [vmem:[%s3929 + $0xac] sm:$0xf]
        %v3960 = vld [vmem:[%s3929 + $0xb4] sm:$0xf]
        %v3961 = vld [vmem:[%s3929 + $0xb8] sm:$0xf]
        %s3962 = scalar_lea.vmem [#allocation6], 96
        %v3963 = vld [vmem:[%s3962] sm:$0xf]
        %v3964 = vld [vmem:[%s3962 + $0x4] sm:$0xf]
        %v3965 = vld [vmem:[%s3962 + $0x8] sm:$0xf]
        %v3966 = vld [vmem:[%s3962 + $0xc] sm:$0xf]
        %v3999 = vunpack.c.l.b16 %v3930
        %v4000 = vunpack.c.l.b16 %v3931
        %v4001 = vunpack.c.l.b16 %v3932
        %v4002 = vunpack.c.l.b16 %v3933
        %v4003 = vunpack.c.l.b16 %v3934
        %v4004 = vunpack.c.l.b16 %v3935
        %v4005 = vunpack.c.l.b16 %v3936
        %v4006 = vunpack.c.l.b16 %v3937
        %v4007 = vunpack.c.l.b16 %v3938
        %v4008 = vunpack.c.l.b16 %v3939
        %v4009 = vunpack.c.l.b16 %v3940
        %v4010 = vunpack.c.l.b16 %v3941
        %v4011 = vunpack.c.l.b16 %v3942
        %v4012 = vunpack.c.l.b16 %v3943
        %v4013 = vunpack.c.l.b16 %v3944
        %v4014 = vunpack.c.l.b16 %v3945
        %v4015 = vunpack.c.l.b16 %v3946
        %v4016 = vunpack.c.l.b16 %v3947
        %v4017 = vunpack.c.l.b16 %v3948
        %v4018 = vunpack.c.l.b16 %v3949
        %v4019 = vunpack.c.l.b16 %v3950
        %v4020 = vunpack.c.l.b16 %v3951
        %v4021 = vunpack.c.l.b16 %v3952
        %v4022 = vunpack.c.l.b16 %v3953
        %v4023 = vunpack.c.l.b16 %v3954
        %v4024 = vunpack.c.l.b16 %v3955
        %v4025 = vunpack.c.l.b16 %v3956
        %v4026 = vunpack.c.l.b16 %v3957
        %v4027 = vunpack.c.l.b16 %v3958
        %v4028 = vunpack.c.l.b16 %v3959
        %v4029 = vunpack.c.l.b16 %v3960
        %v4030 = vunpack.c.l.b16 %v3961
        %v4031 = vpack.c.b16 %v4000, %v3999
        %v4032 = vpack.c.b16 %v4002, %v4001
        %v4033 = vpack.c.b16 %v4004, %v4003
        %v4034 = vpack.c.b16 %v4006, %v4005
        %v4035 = vpack.c.b16 %v4008, %v4007
        %v4036 = vpack.c.b16 %v4010, %v4009
        %v4037 = vpack.c.b16 %v4012, %v4011
        %v4038 = vpack.c.b16 %v4014, %v4013
        %v4039 = vpack.c.b16 %v4016, %v4015
        %v4040 = vpack.c.b16 %v4018, %v4017
        %v4041 = vpack.c.b16 %v4020, %v4019
        %v4042 = vpack.c.b16 %v4022, %v4021
        %v4043 = vpack.c.b16 %v4024, %v4023
        %v4044 = vpack.c.b16 %v4026, %v4025
        %v4045 = vpack.c.b16 %v4028, %v4027
        %v4046 = vpack.c.b16 %v4030, %v4029
        %v4051 = vunpack.c.l.b16 %v3963
        %v4052 = vunpack.c.l.b16 %v3964
        %v4053 = vunpack.c.l.b16 %v3965
        %v4054 = vunpack.c.l.b16 %v3966
        %v4055 = vpack.c.b16 %v4052, %v4051
        %v4056 = vpack.c.b16 %v4054, %v4053
        %v4060 = vsel %vm1352, %v4031, 0
        %v4063 = vsel %vm1352, %v4032, 0
        %v4066 = vsel %vm1352, %v4033, 0
        %v4069 = vsel %vm1352, %v4034, 0
        %v4072 = vsel %vm1352, %v4035, 0
        %v4075 = vsel %vm1352, %v4036, 0
        %v4078 = vsel %vm1352, %v4037, 0
        %v4081 = vsel %vm1352, %v4038, 0
        %v4084 = vsel %vm1352, %v4039, 0
        %v4087 = vsel %vm1352, %v4040, 0
        %v4090 = vsel %vm1352, %v4041, 0
        %v4093 = vsel %vm1352, %v4042, 0
        %v4096 = vsel %vm1352, %v4043, 0
        %v4099 = vsel %vm1352, %v4044, 0
        %v4102 = vsel %vm1352, %v4045, 0
        %v4105 = vsel %vm1352, %v4046, 0
        %4107 = vmatprep.subr.bf16.mxu0 0
        %4108 = vmatpush1.bf16.msra.mxu0 0
        %4109 = vmatprep.subr.bf16.mxu0 0
        %4110 = vmatpush1.bf16.msra.mxu0 0
        %4111 = vmatprep.subr.bf16.mxu0 0
        %4112 = vmatpush1.bf16.msra.mxu0 0
        %4113 = vmatprep.subr.bf16.mxu0 0
        %4114 = vmatpush1.bf16.msra.mxu0 0
        %4115 = vmatprep.subr.bf16.mxu0 0
        %4116 = vmatpush1.bf16.msra.mxu0 0
        %4117 = vmatprep.subr.bf16.mxu0 0
        %4118 = vmatpush1.bf16.msra.mxu0 0
        %4119 = vmatprep.subr.bf16.mxu0 0
        %4120 = vmatpush1.bf16.msra.mxu0 %v4056
        %4121 = vmatprep.subr.bf16.mxu0 0
        %4122 = vmatpush1.bf16.msra.mxu0 %v4055
        %4123 = vmatprep.subr.bf16.mxu0 0
        %4124 = vmatpush2.bf16.msra.mxu0 0
        %4125 = vmatprep.subr.bf16.mxu0 0
        %4126 = vmatpush2.bf16.msra.mxu0 0
        %4127 = vmatprep.subr.bf16.mxu0 0
        %4128 = vmatpush2.bf16.msra.mxu0 0
        %4129 = vmatprep.subr.bf16.mxu0 0
        %4130 = vmatpush2.bf16.msra.mxu0 0
        %4131 = vmatprep.subr.bf16.mxu0 0
        %4132 = vmatpush2.bf16.msra.mxu0 0
        %4133 = vmatprep.subr.bf16.mxu0 0
        %4134 = vmatpush2.bf16.msra.mxu0 0
        %4135 = vmatprep.subr.bf16.mxu0 0
        %4136 = vmatpush2.bf16.msra.mxu0 0
        %4137 = vmatprep.subr.bf16.mxu0 0
        %4138 = vmatpush2.bf16.msra.mxu0 0
        %4139 = vmatprep.mubr.bf16.mxu0 0
        %4140 = vmatmul.mubr.bf16.gmra.mxu0 %v4060
        %v4141 = vpop.f32.mrf.mxu0
        %v4142 = vadd.f32 0.0, %v4141
        %v4143 = vpop.f32.mrf.mxu0
        %v4144 = vpop.f32.mrf.mxu0
        %v4145 = vadd.f32 0.0, %v4144
        %v4146 = vpop.f32.mrf.mxu0
        %4147 = vmatprep.mubr.bf16.mxu0 0
        %4148 = vmatmul.mubr.bf16.gmra.mxu0 %v4063
        %v4149 = vpop.f32.mrf.mxu0
        %v4150 = vadd.f32 0.0, %v4149
        %v4151 = vpop.f32.mrf.mxu0
        %v4152 = vpop.f32.mrf.mxu0
        %v4153 = vadd.f32 0.0, %v4152
        %v4154 = vpop.f32.mrf.mxu0
        %4155 = vmatprep.mubr.bf16.mxu0 0
        %4156 = vmatmul.mubr.bf16.gmra.mxu0 %v4066
        %v4157 = vpop.f32.mrf.mxu0
        %v4158 = vadd.f32 0.0, %v4157
        %v4159 = vpop.f32.mrf.mxu0
        %v4160 = vpop.f32.mrf.mxu0
        %v4161 = vadd.f32 0.0, %v4160
        %v4162 = vpop.f32.mrf.mxu0
        %4163 = vmatprep.mubr.bf16.mxu0 0
        %4164 = vmatmul.mubr.bf16.gmra.mxu0 %v4069
        %v4165 = vpop.f32.mrf.mxu0
        %v4166 = vadd.f32 0.0, %v4165
        %v4167 = vpop.f32.mrf.mxu0
        %v4168 = vpop.f32.mrf.mxu0
        %v4169 = vadd.f32 0.0, %v4168
        %v4170 = vpop.f32.mrf.mxu0
        %4171 = vmatprep.mubr.bf16.mxu0 0
        %4172 = vmatmul.mubr.bf16.gmra.mxu0 %v4072
        %v4173 = vpop.f32.mrf.mxu0
        %v4174 = vadd.f32 0.0, %v4173
        %v4175 = vpop.f32.mrf.mxu0
        %v4176 = vpop.f32.mrf.mxu0
        %v4177 = vadd.f32 0.0, %v4176
        %v4178 = vpop.f32.mrf.mxu0
        %4179 = vmatprep.mubr.bf16.mxu0 0
        %4180 = vmatmul.mubr.bf16.gmra.mxu0 %v4075
        %v4181 = vpop.f32.mrf.mxu0
        %v4182 = vadd.f32 0.0, %v4181
        %v4183 = vpop.f32.mrf.mxu0
        %v4184 = vpop.f32.mrf.mxu0
        %v4185 = vadd.f32 0.0, %v4184
        %v4186 = vpop.f32.mrf.mxu0
        %4187 = vmatprep.mubr.bf16.mxu0 0
        %4188 = vmatmul.mubr.bf16.gmra.mxu0 %v4078
        %v4189 = vpop.f32.mrf.mxu0
        %v4190 = vadd.f32 0.0, %v4189
        %v4191 = vpop.f32.mrf.mxu0
        %v4192 = vpop.f32.mrf.mxu0
        %v4193 = vadd.f32 0.0, %v4192
        %v4194 = vpop.f32.mrf.mxu0
        %4195 = vmatprep.mubr.bf16.mxu0 0
        %4196 = vmatmul.mubr.bf16.gmra.mxu0 %v4081
        %v4197 = vpop.f32.mrf.mxu0
        %v4198 = vadd.f32 0.0, %v4197
        %v4199 = vpop.f32.mrf.mxu0
        %v4200 = vpop.f32.mrf.mxu0
        %v4201 = vadd.f32 0.0, %v4200
        %v4202 = vpop.f32.mrf.mxu0
        %4203 = vmatprep.mubr.bf16.mxu0 0
        %4204 = vmatmul.mubr.bf16.gmra.mxu0 %v4084
        %v4205 = vpop.f32.mrf.mxu0
        %v4206 = vadd.f32 0.0, %v4205
        %v4207 = vpop.f32.mrf.mxu0
        %v4208 = vpop.f32.mrf.mxu0
        %v4209 = vadd.f32 0.0, %v4208
        %v4210 = vpop.f32.mrf.mxu0
        %4211 = vmatprep.mubr.bf16.mxu0 0
        %4212 = vmatmul.mubr.bf16.gmra.mxu0 %v4087
        %v4213 = vpop.f32.mrf.mxu0
        %v4214 = vadd.f32 0.0, %v4213
        %v4215 = vpop.f32.mrf.mxu0
        %v4216 = vpop.f32.mrf.mxu0
        %v4217 = vadd.f32 0.0, %v4216
        %v4218 = vpop.f32.mrf.mxu0
        %4219 = vmatprep.mubr.bf16.mxu0 0
        %4220 = vmatmul.mubr.bf16.gmra.mxu0 %v4090
        %v4221 = vpop.f32.mrf.mxu0
        %v4222 = vadd.f32 0.0, %v4221
        %v4223 = vpop.f32.mrf.mxu0
        %v4224 = vpop.f32.mrf.mxu0
        %v4225 = vadd.f32 0.0, %v4224
        %v4226 = vpop.f32.mrf.mxu0
        %4227 = vmatprep.mubr.bf16.mxu0 0
        %4228 = vmatmul.mubr.bf16.gmra.mxu0 %v4093
        %v4229 = vpop.f32.mrf.mxu0
        %v4230 = vadd.f32 0.0, %v4229
        %v4231 = vpop.f32.mrf.mxu0
        %v4232 = vpop.f32.mrf.mxu0
        %v4233 = vadd.f32 0.0, %v4232
        %v4234 = vpop.f32.mrf.mxu0
        %4235 = vmatprep.mubr.bf16.mxu0 0
        %4236 = vmatmul.mubr.bf16.gmra.mxu0 %v4096
        %v4237 = vpop.f32.mrf.mxu0
        %v4238 = vadd.f32 0.0, %v4237
        %v4239 = vpop.f32.mrf.mxu0
        %v4240 = vpop.f32.mrf.mxu0
        %v4241 = vadd.f32 0.0, %v4240
        %v4242 = vpop.f32.mrf.mxu0
        %4243 = vmatprep.mubr.bf16.mxu0 0
        %4244 = vmatmul.mubr.bf16.gmra.mxu0 %v4099
        %v4245 = vpop.f32.mrf.mxu0
        %v4246 = vadd.f32 0.0, %v4245
        %v4247 = vpop.f32.mrf.mxu0
        %v4248 = vpop.f32.mrf.mxu0
        %v4249 = vadd.f32 0.0, %v4248
        %v4250 = vpop.f32.mrf.mxu0
        %4251 = vmatprep.mubr.bf16.mxu0 0
        %4252 = vmatmul.mubr.bf16.gmra.mxu0 %v4102
        %v4253 = vpop.f32.mrf.mxu0
        %v4254 = vadd.f32 0.0, %v4253
        %v4255 = vpop.f32.mrf.mxu0
        %v4256 = vpop.f32.mrf.mxu0
        %v4257 = vadd.f32 0.0, %v4256
        %v4258 = vpop.f32.mrf.mxu0
        %4259 = vmatprep.mubr.bf16.mxu0 0
        %4260 = vmatmul.mubr.bf16.gmra.mxu0 %v4105
        %v4261 = vpop.f32.mrf.mxu0
        %v4262 = vadd.f32 0.0, %v4261
        %v4263 = vpop.f32.mrf.mxu0
        %v4264 = vpop.f32.mrf.mxu0
        %v4265 = vadd.f32 0.0, %v4264
        %v4266 = vpop.f32.mrf.mxu0
        %4267 = vdwg.mxu0
        %v4268 = vadd.f32 %v3894, %v4142
        %v4269 = vadd.f32 %v3895, %v4145
        %v4270 = vadd.f32 %v3896, %v4150
        %v4271 = vadd.f32 %v3897, %v4153
        %v4272 = vadd.f32 %v3898, %v4158
        %v4273 = vadd.f32 %v3899, %v4161
        %v4274 = vadd.f32 %v3900, %v4166
        %v4275 = vadd.f32 %v3901, %v4169
        %v4276 = vadd.f32 %v3902, %v4174
        %v4277 = vadd.f32 %v3903, %v4177
        %v4278 = vadd.f32 %v3904, %v4182
        %v4279 = vadd.f32 %v3905, %v4185
        %v4280 = vadd.f32 %v3906, %v4190
        %v4281 = vadd.f32 %v3907, %v4193
        %v4282 = vadd.f32 %v3908, %v4198
        %v4283 = vadd.f32 %v3909, %v4201
        %v4284 = vadd.f32 %v3910, %v4206
        %v4285 = vadd.f32 %v3911, %v4209
        %v4286 = vadd.f32 %v3912, %v4214
        %v4287 = vadd.f32 %v3913, %v4217
        %v4288 = vadd.f32 %v3914, %v4222
        %v4289 = vadd.f32 %v3915, %v4225
        %v4290 = vadd.f32 %v3916, %v4230
        %v4291 = vadd.f32 %v3917, %v4233
        %v4292 = vadd.f32 %v3918, %v4238
        %v4293 = vadd.f32 %v3919, %v4241
        %v4294 = vadd.f32 %v3920, %v4246
        %v4295 = vadd.f32 %v3921, %v4249
        %v4296 = vadd.f32 %v3922, %v4254
        %v4297 = vadd.f32 %v3923, %v4257
        %v4298 = vadd.f32 %v3924, %v4262
        %v4299 = vadd.f32 %v3925, %v4265
        %v4300 = vld [vmem:[%s3929] sm:$0xf]
        %v4301 = vld [vmem:[%s3929 + $0x4] sm:$0xf]
        %v4302 = vld [vmem:[%s3929 + $0x8] sm:$0x1]
        %v4303 = vld [vmem:[%s3929 + $0xc] sm:$0xf]
        %v4304 = vld [vmem:[%s3929 + $0x10] sm:$0xf]
        %v4305 = vld [vmem:[%s3929 + $0x14] sm:$0x1]
        %v4306 = vld [vmem:[%s3929 + $0x18] sm:$0xf]
        %v4307 = vld [vmem:[%s3929 + $0x1c] sm:$0xf]
        %v4308 = vld [vmem:[%s3929 + $0x20] sm:$0x1]
        %v4309 = vld [vmem:[%s3929 + $0x24] sm:$0xf]
        %v4310 = vld [vmem:[%s3929 + $0x28] sm:$0xf]
        %v4311 = vld [vmem:[%s3929 + $0x2c] sm:$0x1]
        %v4312 = vld [vmem:[%s3929 + $0x30] sm:$0xf]
        %v4313 = vld [vmem:[%s3929 + $0x34] sm:$0xf]
        %v4314 = vld [vmem:[%s3929 + $0x38] sm:$0x1]
        %v4315 = vld [vmem:[%s3929 + $0x3c] sm:$0xf]
        %v4316 = vld [vmem:[%s3929 + $0x40] sm:$0xf]
        %v4317 = vld [vmem:[%s3929 + $0x44] sm:$0x1]
        %v4318 = vld [vmem:[%s3929 + $0x48] sm:$0xf]
        %v4319 = vld [vmem:[%s3929 + $0x4c] sm:$0xf]
        %v4320 = vld [vmem:[%s3929 + $0x50] sm:$0x1]
        %v4321 = vld [vmem:[%s3929 + $0x54] sm:$0xf]
        %v4322 = vld [vmem:[%s3929 + $0x58] sm:$0xf]
        %v4323 = vld [vmem:[%s3929 + $0x5c] sm:$0x1]
        %v4324 = vld [vmem:[%s3929 + $0x60] sm:$0xf]
        %v4325 = vld [vmem:[%s3929 + $0x64] sm:$0xf]
        %v4326 = vld [vmem:[%s3929 + $0x68] sm:$0x1]
        %v4327 = vld [vmem:[%s3929 + $0x6c] sm:$0xf]
        %v4328 = vld [vmem:[%s3929 + $0x70] sm:$0xf]
        %v4329 = vld [vmem:[%s3929 + $0x74] sm:$0x1]
        %v4330 = vld [vmem:[%s3929 + $0x78] sm:$0xf]
        %v4331 = vld [vmem:[%s3929 + $0x7c] sm:$0xf]
        %v4332 = vld [vmem:[%s3929 + $0x80] sm:$0x1]
        %v4333 = vld [vmem:[%s3929 + $0x84] sm:$0xf]
        %v4334 = vld [vmem:[%s3929 + $0x88] sm:$0xf]
        %v4335 = vld [vmem:[%s3929 + $0x8c] sm:$0x1]
        %v4336 = vld [vmem:[%s3929 + $0x90] sm:$0xf]
        %v4337 = vld [vmem:[%s3929 + $0x94] sm:$0xf]
        %v4338 = vld [vmem:[%s3929 + $0x98] sm:$0x1]
        %v4339 = vld [vmem:[%s3929 + $0x9c] sm:$0xf]
        %v4340 = vld [vmem:[%s3929 + $0xa0] sm:$0xf]
        %v4341 = vld [vmem:[%s3929 + $0xa4] sm:$0x1]
        %v4342 = vld [vmem:[%s3929 + $0xa8] sm:$0xf]
        %v4343 = vld [vmem:[%s3929 + $0xac] sm:$0xf]
        %v4344 = vld [vmem:[%s3929 + $0xb0] sm:$0x1]
        %v4345 = vld [vmem:[%s3929 + $0xb4] sm:$0xf]
        %v4346 = vld [vmem:[%s3929 + $0xb8] sm:$0xf]
        %v4347 = vld [vmem:[%s3929 + $0xbc] sm:$0x1]
        %v4349 = vshrl.u32 %v4300, 16
        %v4351 = vrot.slane %v4349, 4
        %v4352 = vshll.u32 %v4300, 16
        %v4354 = vrot.slane %v4352, 5
        %v4355 = vor.u32 %v4351, %v4354
        %v4356 = vrot.slane %v4355, 4
        %v4358 = vshll.u32 %v4301, 16
        %v4360 = vrot.slane %v4358, 5
        %v4361 = vsel %vm902, %v4356, %v4360
        %v4362 = vshrl.u32 %v4301, 16
        %v4364 = vrot.slane %v4362, 4
        %v4365 = vor.u32 %v4364, %v4360
        %v4366 = vrot.slane %v4365, 4
        %v4368 = vshll.u32 %v4302, 16
        %v4370 = vrot.slane %v4368, 5
        %v4371 = vsel %vm902, %v4366, %v4370
        %v4373 = vshrl.u32 %v4303, 16
        %v4375 = vrot.slane %v4373, 4
        %v4376 = vshll.u32 %v4303, 16
        %v4378 = vrot.slane %v4376, 5
        %v4379 = vor.u32 %v4375, %v4378
        %v4380 = vrot.slane %v4379, 4
        %v4382 = vshll.u32 %v4304, 16
        %v4384 = vrot.slane %v4382, 5
        %v4385 = vsel %vm902, %v4380, %v4384
        %v4386 = vshrl.u32 %v4304, 16
        %v4388 = vrot.slane %v4386, 4
        %v4389 = vor.u32 %v4388, %v4384
        %v4390 = vrot.slane %v4389, 4
        %v4392 = vshll.u32 %v4305, 16
        %v4394 = vrot.slane %v4392, 5
        %v4395 = vsel %vm902, %v4390, %v4394
        %v4397 = vshrl.u32 %v4306, 16
        %v4399 = vrot.slane %v4397, 4
        %v4400 = vshll.u32 %v4306, 16
        %v4402 = vrot.slane %v4400, 5
        %v4403 = vor.u32 %v4399, %v4402
        %v4404 = vrot.slane %v4403, 4
        %v4406 = vshll.u32 %v4307, 16
        %v4408 = vrot.slane %v4406, 5
        %v4409 = vsel %vm902, %v4404, %v4408
        %v4410 = vshrl.u32 %v4307, 16
        %v4412 = vrot.slane %v4410, 4
        %v4413 = vor.u32 %v4412, %v4408
        %v4414 = vrot.slane %v4413, 4
        %v4416 = vshll.u32 %v4308, 16
        %v4418 = vrot.slane %v4416, 5
        %v4419 = vsel %vm902, %v4414, %v4418
        %v4421 = vshrl.u32 %v4309, 16
        %v4423 = vrot.slane %v4421, 4
        %v4424 = vshll.u32 %v4309, 16
        %v4426 = vrot.slane %v4424, 5
        %v4427 = vor.u32 %v4423, %v4426
        %v4428 = vrot.slane %v4427, 4
        %v4430 = vshll.u32 %v4310, 16
        %v4432 = vrot.slane %v4430, 5
        %v4433 = vsel %vm902, %v4428, %v4432
        %v4434 = vshrl.u32 %v4310, 16
        %v4436 = vrot.slane %v4434, 4
        %v4437 = vor.u32 %v4436, %v4432
        %v4438 = vrot.slane %v4437, 4
        %v4440 = vshll.u32 %v4311, 16
        %v4442 = vrot.slane %v4440, 5
        %v4443 = vsel %vm902, %v4438, %v4442
        %v4445 = vshrl.u32 %v4312, 16
        %v4447 = vrot.slane %v4445, 4
        %v4448 = vshll.u32 %v4312, 16
        %v4450 = vrot.slane %v4448, 5
        %v4451 = vor.u32 %v4447, %v4450
        %v4452 = vrot.slane %v4451, 4
        %v4454 = vshll.u32 %v4313, 16
        %v4456 = vrot.slane %v4454, 5
        %v4457 = vsel %vm902, %v4452, %v4456
        %v4458 = vshrl.u32 %v4313, 16
        %v4460 = vrot.slane %v4458, 4
        %v4461 = vor.u32 %v4460, %v4456
        %v4462 = vrot.slane %v4461, 4
        %v4464 = vshll.u32 %v4314, 16
        %v4466 = vrot.slane %v4464, 5
        %v4467 = vsel %vm902, %v4462, %v4466
        %v4469 = vshrl.u32 %v4315, 16
        %v4471 = vrot.slane %v4469, 4
        %v4472 = vshll.u32 %v4315, 16
        %v4474 = vrot.slane %v4472, 5
        %v4475 = vor.u32 %v4471, %v4474
        %v4476 = vrot.slane %v4475, 4
        %v4478 = vshll.u32 %v4316, 16
        %v4480 = vrot.slane %v4478, 5
        %v4481 = vsel %vm902, %v4476, %v4480
        %v4482 = vshrl.u32 %v4316, 16
        %v4484 = vrot.slane %v4482, 4
        %v4485 = vor.u32 %v4484, %v4480
        %v4486 = vrot.slane %v4485, 4
        %v4488 = vshll.u32 %v4317, 16
        %v4490 = vrot.slane %v4488, 5
        %v4491 = vsel %vm902, %v4486, %v4490
        %v4493 = vshrl.u32 %v4318, 16
        %v4495 = vrot.slane %v4493, 4
        %v4496 = vshll.u32 %v4318, 16
        %v4498 = vrot.slane %v4496, 5
        %v4499 = vor.u32 %v4495, %v4498
        %v4500 = vrot.slane %v4499, 4
        %v4502 = vshll.u32 %v4319, 16
        %v4504 = vrot.slane %v4502, 5
        %v4505 = vsel %vm902, %v4500, %v4504
        %v4506 = vshrl.u32 %v4319, 16
        %v4508 = vrot.slane %v4506, 4
        %v4509 = vor.u32 %v4508, %v4504
        %v4510 = vrot.slane %v4509, 4
        %v4512 = vshll.u32 %v4320, 16
        %v4514 = vrot.slane %v4512, 5
        %v4515 = vsel %vm902, %v4510, %v4514
        %v4517 = vshrl.u32 %v4321, 16
        %v4519 = vrot.slane %v4517, 4
        %v4520 = vshll.u32 %v4321, 16
        %v4522 = vrot.slane %v4520, 5
        %v4523 = vor.u32 %v4519, %v4522
        %v4524 = vrot.slane %v4523, 4
        %v4526 = vshll.u32 %v4322, 16
        %v4528 = vrot.slane %v4526, 5
        %v4529 = vsel %vm902, %v4524, %v4528
        %v4530 = vshrl.u32 %v4322, 16
        %v4532 = vrot.slane %v4530, 4
        %v4533 = vor.u32 %v4532, %v4528
        %v4534 = vrot.slane %v4533, 4
        %v4536 = vshll.u32 %v4323, 16
        %v4538 = vrot.slane %v4536, 5
        %v4539 = vsel %vm902, %v4534, %v4538
        %v4541 = vshrl.u32 %v4324, 16
        %v4543 = vrot.slane %v4541, 4
        %v4544 = vshll.u32 %v4324, 16
        %v4546 = vrot.slane %v4544, 5
        %v4547 = vor.u32 %v4543, %v4546
        %v4548 = vrot.slane %v4547, 4
        %v4550 = vshll.u32 %v4325, 16
        %v4552 = vrot.slane %v4550, 5
        %v4553 = vsel %vm902, %v4548, %v4552
        %v4554 = vshrl.u32 %v4325, 16
        %v4556 = vrot.slane %v4554, 4
        %v4557 = vor.u32 %v4556, %v4552
        %v4558 = vrot.slane %v4557, 4
        %v4560 = vshll.u32 %v4326, 16
        %v4562 = vrot.slane %v4560, 5
        %v4563 = vsel %vm902, %v4558, %v4562
        %v4565 = vshrl.u32 %v4327, 16
        %v4567 = vrot.slane %v4565, 4
        %v4568 = vshll.u32 %v4327, 16
        %v4570 = vrot.slane %v4568, 5
        %v4571 = vor.u32 %v4567, %v4570
        %v4572 = vrot.slane %v4571, 4
        %v4574 = vshll.u32 %v4328, 16
        %v4576 = vrot.slane %v4574, 5
        %v4577 = vsel %vm902, %v4572, %v4576
        %v4578 = vshrl.u32 %v4328, 16
        %v4580 = vrot.slane %v4578, 4
        %v4581 = vor.u32 %v4580, %v4576
        %v4582 = vrot.slane %v4581, 4
        %v4584 = vshll.u32 %v4329, 16
        %v4586 = vrot.slane %v4584, 5
        %v4587 = vsel %vm902, %v4582, %v4586
        %v4589 = vshrl.u32 %v4330, 16
        %v4591 = vrot.slane %v4589, 4
        %v4592 = vshll.u32 %v4330, 16
        %v4594 = vrot.slane %v4592, 5
        %v4595 = vor.u32 %v4591, %v4594
        %v4596 = vrot.slane %v4595, 4
        %v4598 = vshll.u32 %v4331, 16
        %v4600 = vrot.slane %v4598, 5
        %v4601 = vsel %vm902, %v4596, %v4600
        %v4602 = vshrl.u32 %v4331, 16
        %v4604 = vrot.slane %v4602, 4
        %v4605 = vor.u32 %v4604, %v4600
        %v4606 = vrot.slane %v4605, 4
        %v4608 = vshll.u32 %v4332, 16
        %v4610 = vrot.slane %v4608, 5
        %v4611 = vsel %vm902, %v4606, %v4610
        %v4613 = vshrl.u32 %v4333, 16
        %v4615 = vrot.slane %v4613, 4
        %v4616 = vshll.u32 %v4333, 16
        %v4618 = vrot.slane %v4616, 5
        %v4619 = vor.u32 %v4615, %v4618
        %v4620 = vrot.slane %v4619, 4
        %v4622 = vshll.u32 %v4334, 16
        %v4624 = vrot.slane %v4622, 5
        %v4625 = vsel %vm902, %v4620, %v4624
        %v4626 = vshrl.u32 %v4334, 16
        %v4628 = vrot.slane %v4626, 4
        %v4629 = vor.u32 %v4628, %v4624
        %v4630 = vrot.slane %v4629, 4
        %v4632 = vshll.u32 %v4335, 16
        %v4634 = vrot.slane %v4632, 5
        %v4635 = vsel %vm902, %v4630, %v4634
        %v4637 = vshrl.u32 %v4336, 16
        %v4639 = vrot.slane %v4637, 4
        %v4640 = vshll.u32 %v4336, 16
        %v4642 = vrot.slane %v4640, 5
        %v4643 = vor.u32 %v4639, %v4642
        %v4644 = vrot.slane %v4643, 4
        %v4646 = vshll.u32 %v4337, 16
        %v4648 = vrot.slane %v4646, 5
        %v4649 = vsel %vm902, %v4644, %v4648
        %v4650 = vshrl.u32 %v4337, 16
        %v4652 = vrot.slane %v4650, 4
        %v4653 = vor.u32 %v4652, %v4648
        %v4654 = vrot.slane %v4653, 4
        %v4656 = vshll.u32 %v4338, 16
        %v4658 = vrot.slane %v4656, 5
        %v4659 = vsel %vm902, %v4654, %v4658
        %v4661 = vshrl.u32 %v4339, 16
        %v4663 = vrot.slane %v4661, 4
        %v4664 = vshll.u32 %v4339, 16
        %v4666 = vrot.slane %v4664, 5
        %v4667 = vor.u32 %v4663, %v4666
        %v4668 = vrot.slane %v4667, 4
        %v4670 = vshll.u32 %v4340, 16
        %v4672 = vrot.slane %v4670, 5
        %v4673 = vsel %vm902, %v4668, %v4672
        %v4674 = vshrl.u32 %v4340, 16
        %v4676 = vrot.slane %v4674, 4
        %v4677 = vor.u32 %v4676, %v4672
        %v4678 = vrot.slane %v4677, 4
        %v4680 = vshll.u32 %v4341, 16
        %v4682 = vrot.slane %v4680, 5
        %v4683 = vsel %vm902, %v4678, %v4682
        %v4685 = vshrl.u32 %v4342, 16
        %v4687 = vrot.slane %v4685, 4
        %v4688 = vshll.u32 %v4342, 16
        %v4690 = vrot.slane %v4688, 5
        %v4691 = vor.u32 %v4687, %v4690
        %v4692 = vrot.slane %v4691, 4
        %v4694 = vshll.u32 %v4343, 16
        %v4696 = vrot.slane %v4694, 5
        %v4697 = vsel %vm902, %v4692, %v4696
        %v4698 = vshrl.u32 %v4343, 16
        %v4700 = vrot.slane %v4698, 4
        %v4701 = vor.u32 %v4700, %v4696
        %v4702 = vrot.slane %v4701, 4
        %v4704 = vshll.u32 %v4344, 16
        %v4706 = vrot.slane %v4704, 5
        %v4707 = vsel %vm902, %v4702, %v4706
        %v4709 = vshrl.u32 %v4345, 16
        %v4711 = vrot.slane %v4709, 4
        %v4712 = vshll.u32 %v4345, 16
        %v4714 = vrot.slane %v4712, 5
        %v4715 = vor.u32 %v4711, %v4714
        %v4716 = vrot.slane %v4715, 4
        %v4718 = vshll.u32 %v4346, 16
        %v4720 = vrot.slane %v4718, 5
        %v4721 = vsel %vm902, %v4716, %v4720
        %v4722 = vshrl.u32 %v4346, 16
        %v4724 = vrot.slane %v4722, 4
        %v4725 = vor.u32 %v4724, %v4720
        %v4726 = vrot.slane %v4725, 4
        %v4728 = vshll.u32 %v4347, 16
        %v4730 = vrot.slane %v4728, 5
        %v4731 = vsel %vm902, %v4726, %v4730
        %s4732 = scalar_lea.vmem [#allocation6], 112
        %v4733 = vld [vmem:[%s4732] sm:$0xf]
        %v4734 = vld [vmem:[%s4732 + $0x4] sm:$0xf]
        %v4735 = vld [vmem:[%s4732 + $0x8] sm:$0xf]
        %v4736 = vld [vmem:[%s4732 + $0xc] sm:$0xf]
        %v4737 = vunpack.c.l.b16 %v4361
        %v4738 = vunpack.c.l.b16 %v4371
        %v4739 = vunpack.c.l.b16 %v4385
        %v4740 = vunpack.c.l.b16 %v4395
        %v4741 = vunpack.c.l.b16 %v4409
        %v4742 = vunpack.c.l.b16 %v4419
        %v4743 = vunpack.c.l.b16 %v4433
        %v4744 = vunpack.c.l.b16 %v4443
        %v4745 = vunpack.c.l.b16 %v4457
        %v4746 = vunpack.c.l.b16 %v4467
        %v4747 = vunpack.c.l.b16 %v4481
        %v4748 = vunpack.c.l.b16 %v4491
        %v4749 = vunpack.c.l.b16 %v4505
        %v4750 = vunpack.c.l.b16 %v4515
        %v4751 = vunpack.c.l.b16 %v4529
        %v4752 = vunpack.c.l.b16 %v4539
        %v4753 = vunpack.c.l.b16 %v4553
        %v4754 = vunpack.c.l.b16 %v4563
        %v4755 = vunpack.c.l.b16 %v4577
        %v4756 = vunpack.c.l.b16 %v4587
        %v4757 = vunpack.c.l.b16 %v4601
        %v4758 = vunpack.c.l.b16 %v4611
        %v4759 = vunpack.c.l.b16 %v4625
        %v4760 = vunpack.c.l.b16 %v4635
        %v4761 = vunpack.c.l.b16 %v4649
        %v4762 = vunpack.c.l.b16 %v4659
        %v4763 = vunpack.c.l.b16 %v4673
        %v4764 = vunpack.c.l.b16 %v4683
        %v4765 = vunpack.c.l.b16 %v4697
        %v4766 = vunpack.c.l.b16 %v4707
        %v4767 = vunpack.c.l.b16 %v4721
        %v4768 = vunpack.c.l.b16 %v4731
        %v4769 = vpack.c.b16 %v4738, %v4737
        %v4770 = vpack.c.b16 %v4740, %v4739
        %v4771 = vpack.c.b16 %v4742, %v4741
        %v4772 = vpack.c.b16 %v4744, %v4743
        %v4773 = vpack.c.b16 %v4746, %v4745
        %v4774 = vpack.c.b16 %v4748, %v4747
        %v4775 = vpack.c.b16 %v4750, %v4749
        %v4776 = vpack.c.b16 %v4752, %v4751
        %v4777 = vpack.c.b16 %v4754, %v4753
        %v4778 = vpack.c.b16 %v4756, %v4755
        %v4779 = vpack.c.b16 %v4758, %v4757
        %v4780 = vpack.c.b16 %v4760, %v4759
        %v4781 = vpack.c.b16 %v4762, %v4761
        %v4782 = vpack.c.b16 %v4764, %v4763
        %v4783 = vpack.c.b16 %v4766, %v4765
        %v4784 = vpack.c.b16 %v4768, %v4767
        %v4789 = vunpack.c.l.b16 %v4733
        %v4790 = vunpack.c.l.b16 %v4734
        %v4791 = vunpack.c.l.b16 %v4735
        %v4792 = vunpack.c.l.b16 %v4736
        %v4793 = vpack.c.b16 %v4790, %v4789
        %v4794 = vpack.c.b16 %v4792, %v4791
        %v4798 = vsel %vm1352, %v4769, 0
        %v4801 = vsel %vm1352, %v4770, 0
        %v4804 = vsel %vm1352, %v4771, 0
        %v4807 = vsel %vm1352, %v4772, 0
        %v4810 = vsel %vm1352, %v4773, 0
        %v4813 = vsel %vm1352, %v4774, 0
        %v4816 = vsel %vm1352, %v4775, 0
        %v4819 = vsel %vm1352, %v4776, 0
        %v4822 = vsel %vm1352, %v4777, 0
        %v4825 = vsel %vm1352, %v4778, 0
        %v4828 = vsel %vm1352, %v4779, 0
        %v4831 = vsel %vm1352, %v4780, 0
        %v4834 = vsel %vm1352, %v4781, 0
        %v4837 = vsel %vm1352, %v4782, 0
        %v4840 = vsel %vm1352, %v4783, 0
        %v4843 = vsel %vm1352, %v4784, 0
        %4845 = vmatprep.subr.bf16.mxu0 0
        %4846 = vmatpush1.bf16.msra.mxu0 0
        %4847 = vmatprep.subr.bf16.mxu0 0
        %4848 = vmatpush1.bf16.msra.mxu0 0
        %4849 = vmatprep.subr.bf16.mxu0 0
        %4850 = vmatpush1.bf16.msra.mxu0 0
        %4851 = vmatprep.subr.bf16.mxu0 0
        %4852 = vmatpush1.bf16.msra.mxu0 0
        %4853 = vmatprep.subr.bf16.mxu0 0
        %4854 = vmatpush1.bf16.msra.mxu0 0
        %4855 = vmatprep.subr.bf16.mxu0 0
        %4856 = vmatpush1.bf16.msra.mxu0 0
        %4857 = vmatprep.subr.bf16.mxu0 0
        %4858 = vmatpush1.bf16.msra.mxu0 %v4794
        %4859 = vmatprep.subr.bf16.mxu0 0
        %4860 = vmatpush1.bf16.msra.mxu0 %v4793
        %4861 = vmatprep.subr.bf16.mxu0 0
        %4862 = vmatpush2.bf16.msra.mxu0 0
        %4863 = vmatprep.subr.bf16.mxu0 0
        %4864 = vmatpush2.bf16.msra.mxu0 0
        %4865 = vmatprep.subr.bf16.mxu0 0
        %4866 = vmatpush2.bf16.msra.mxu0 0
        %4867 = vmatprep.subr.bf16.mxu0 0
        %4868 = vmatpush2.bf16.msra.mxu0 0
        %4869 = vmatprep.subr.bf16.mxu0 0
        %4870 = vmatpush2.bf16.msra.mxu0 0
        %4871 = vmatprep.subr.bf16.mxu0 0
        %4872 = vmatpush2.bf16.msra.mxu0 0
        %4873 = vmatprep.subr.bf16.mxu0 0
        %4874 = vmatpush2.bf16.msra.mxu0 0
        %4875 = vmatprep.subr.bf16.mxu0 0
        %4876 = vmatpush2.bf16.msra.mxu0 0
        %4877 = vmatprep.mubr.bf16.mxu0 0
        %4878 = vmatmul.mubr.bf16.gmra.mxu0 %v4798
        %v4879 = vpop.f32.mrf.mxu0
        %v4880 = vadd.f32 0.0, %v4879
        %v4881 = vpop.f32.mrf.mxu0
        %v4882 = vpop.f32.mrf.mxu0
        %v4883 = vadd.f32 0.0, %v4882
        %v4884 = vpop.f32.mrf.mxu0
        %4885 = vmatprep.mubr.bf16.mxu0 0
        %4886 = vmatmul.mubr.bf16.gmra.mxu0 %v4801
        %v4887 = vpop.f32.mrf.mxu0
        %v4888 = vadd.f32 0.0, %v4887
        %v4889 = vpop.f32.mrf.mxu0
        %v4890 = vpop.f32.mrf.mxu0
        %v4891 = vadd.f32 0.0, %v4890
        %v4892 = vpop.f32.mrf.mxu0
        %4893 = vmatprep.mubr.bf16.mxu0 0
        %4894 = vmatmul.mubr.bf16.gmra.mxu0 %v4804
        %v4895 = vpop.f32.mrf.mxu0
        %v4896 = vadd.f32 0.0, %v4895
        %v4897 = vpop.f32.mrf.mxu0
        %v4898 = vpop.f32.mrf.mxu0
        %v4899 = vadd.f32 0.0, %v4898
        %v4900 = vpop.f32.mrf.mxu0
        %4901 = vmatprep.mubr.bf16.mxu0 0
        %4902 = vmatmul.mubr.bf16.gmra.mxu0 %v4807
        %v4903 = vpop.f32.mrf.mxu0
        %v4904 = vadd.f32 0.0, %v4903
        %v4905 = vpop.f32.mrf.mxu0
        %v4906 = vpop.f32.mrf.mxu0
        %v4907 = vadd.f32 0.0, %v4906
        %v4908 = vpop.f32.mrf.mxu0
        %4909 = vmatprep.mubr.bf16.mxu0 0
        %4910 = vmatmul.mubr.bf16.gmra.mxu0 %v4810
        %v4911 = vpop.f32.mrf.mxu0
        %v4912 = vadd.f32 0.0, %v4911
        %v4913 = vpop.f32.mrf.mxu0
        %v4914 = vpop.f32.mrf.mxu0
        %v4915 = vadd.f32 0.0, %v4914
        %v4916 = vpop.f32.mrf.mxu0
        %4917 = vmatprep.mubr.bf16.mxu0 0
        %4918 = vmatmul.mubr.bf16.gmra.mxu0 %v4813
        %v4919 = vpop.f32.mrf.mxu0
        %v4920 = vadd.f32 0.0, %v4919
        %v4921 = vpop.f32.mrf.mxu0
        %v4922 = vpop.f32.mrf.mxu0
        %v4923 = vadd.f32 0.0, %v4922
        %v4924 = vpop.f32.mrf.mxu0
        %4925 = vmatprep.mubr.bf16.mxu0 0
        %4926 = vmatmul.mubr.bf16.gmra.mxu0 %v4816
        %v4927 = vpop.f32.mrf.mxu0
        %v4928 = vadd.f32 0.0, %v4927
        %v4929 = vpop.f32.mrf.mxu0
        %v4930 = vpop.f32.mrf.mxu0
        %v4931 = vadd.f32 0.0, %v4930
        %v4932 = vpop.f32.mrf.mxu0
        %4933 = vmatprep.mubr.bf16.mxu0 0
        %4934 = vmatmul.mubr.bf16.gmra.mxu0 %v4819
        %v4935 = vpop.f32.mrf.mxu0
        %v4936 = vadd.f32 0.0, %v4935
        %v4937 = vpop.f32.mrf.mxu0
        %v4938 = vpop.f32.mrf.mxu0
        %v4939 = vadd.f32 0.0, %v4938
        %v4940 = vpop.f32.mrf.mxu0
        %4941 = vmatprep.mubr.bf16.mxu0 0
        %4942 = vmatmul.mubr.bf16.gmra.mxu0 %v4822
        %v4943 = vpop.f32.mrf.mxu0
        %v4944 = vadd.f32 0.0, %v4943
        %v4945 = vpop.f32.mrf.mxu0
        %v4946 = vpop.f32.mrf.mxu0
        %v4947 = vadd.f32 0.0, %v4946
        %v4948 = vpop.f32.mrf.mxu0
        %4949 = vmatprep.mubr.bf16.mxu0 0
        %4950 = vmatmul.mubr.bf16.gmra.mxu0 %v4825
        %v4951 = vpop.f32.mrf.mxu0
        %v4952 = vadd.f32 0.0, %v4951
        %v4953 = vpop.f32.mrf.mxu0
        %v4954 = vpop.f32.mrf.mxu0
        %v4955 = vadd.f32 0.0, %v4954
        %v4956 = vpop.f32.mrf.mxu0
        %4957 = vmatprep.mubr.bf16.mxu0 0
        %4958 = vmatmul.mubr.bf16.gmra.mxu0 %v4828
        %v4959 = vpop.f32.mrf.mxu0
        %v4960 = vadd.f32 0.0, %v4959
        %v4961 = vpop.f32.mrf.mxu0
        %v4962 = vpop.f32.mrf.mxu0
        %v4963 = vadd.f32 0.0, %v4962
        %v4964 = vpop.f32.mrf.mxu0
        %4965 = vmatprep.mubr.bf16.mxu0 0
        %4966 = vmatmul.mubr.bf16.gmra.mxu0 %v4831
        %v4967 = vpop.f32.mrf.mxu0
        %v4968 = vadd.f32 0.0, %v4967
        %v4969 = vpop.f32.mrf.mxu0
        %v4970 = vpop.f32.mrf.mxu0
        %v4971 = vadd.f32 0.0, %v4970
        %v4972 = vpop.f32.mrf.mxu0
        %4973 = vmatprep.mubr.bf16.mxu0 0
        %4974 = vmatmul.mubr.bf16.gmra.mxu0 %v4834
        %v4975 = vpop.f32.mrf.mxu0
        %v4976 = vadd.f32 0.0, %v4975
        %v4977 = vpop.f32.mrf.mxu0
        %v4978 = vpop.f32.mrf.mxu0
        %v4979 = vadd.f32 0.0, %v4978
        %v4980 = vpop.f32.mrf.mxu0
        %4981 = vmatprep.mubr.bf16.mxu0 0
        %4982 = vmatmul.mubr.bf16.gmra.mxu0 %v4837
        %v4983 = vpop.f32.mrf.mxu0
        %v4984 = vadd.f32 0.0, %v4983
        %v4985 = vpop.f32.mrf.mxu0
        %v4986 = vpop.f32.mrf.mxu0
        %v4987 = vadd.f32 0.0, %v4986
        %v4988 = vpop.f32.mrf.mxu0
        %4989 = vmatprep.mubr.bf16.mxu0 0
        %4990 = vmatmul.mubr.bf16.gmra.mxu0 %v4840
        %v4991 = vpop.f32.mrf.mxu0
        %v4992 = vadd.f32 0.0, %v4991
        %v4993 = vpop.f32.mrf.mxu0
        %v4994 = vpop.f32.mrf.mxu0
        %v4995 = vadd.f32 0.0, %v4994
        %v4996 = vpop.f32.mrf.mxu0
        %4997 = vmatprep.mubr.bf16.mxu0 0
        %4998 = vmatmul.mubr.bf16.gmra.mxu0 %v4843
        %v4999 = vpop.f32.mrf.mxu0
        %v5000 = vadd.f32 0.0, %v4999
        %v5001 = vpop.f32.mrf.mxu0
        %v5002 = vpop.f32.mrf.mxu0
        %v5003 = vadd.f32 0.0, %v5002
        %v5004 = vpop.f32.mrf.mxu0
        %5005 = vdwg.mxu0
        %v5006 = vadd.f32 %v4268, %v4880
        %v5007 = vadd.f32 %v4269, %v4883
        %v5008 = vadd.f32 %v4270, %v4888
        %v5009 = vadd.f32 %v4271, %v4891
        %v5010 = vadd.f32 %v4272, %v4896
        %v5011 = vadd.f32 %v4273, %v4899
        %v5012 = vadd.f32 %v4274, %v4904
        %v5013 = vadd.f32 %v4275, %v4907
        %v5014 = vadd.f32 %v4276, %v4912
        %v5015 = vadd.f32 %v4277, %v4915
        %v5016 = vadd.f32 %v4278, %v4920
        %v5017 = vadd.f32 %v4279, %v4923
        %v5018 = vadd.f32 %v4280, %v4928
        %v5019 = vadd.f32 %v4281, %v4931
        %v5020 = vadd.f32 %v4282, %v4936
        %v5021 = vadd.f32 %v4283, %v4939
        %v5022 = vadd.f32 %v4284, %v4944
        %v5023 = vadd.f32 %v4285, %v4947
        %v5024 = vadd.f32 %v4286, %v4952
        %v5025 = vadd.f32 %v4287, %v4955
        %v5026 = vadd.f32 %v4288, %v4960
        %v5027 = vadd.f32 %v4289, %v4963
        %v5028 = vadd.f32 %v4290, %v4968
        %v5029 = vadd.f32 %v4291, %v4971
        %v5030 = vadd.f32 %v4292, %v4976
        %v5031 = vadd.f32 %v4293, %v4979
        %v5032 = vadd.f32 %v4294, %v4984
        %v5033 = vadd.f32 %v4295, %v4987
        %v5034 = vadd.f32 %v4296, %v4992
        %v5035 = vadd.f32 %v4297, %v4995
        %v5036 = vadd.f32 %v4298, %v5000
        %v5037 = vadd.f32 %v4299, %v5003
        %v5038 = vld [vmem:[%s3929] sm:$0xe]
        %v5039 = vld [vmem:[%s3929 + $0xc] sm:$0xe]
        %v5040 = vld [vmem:[%s3929 + $0x18] sm:$0xe]
        %v5041 = vld [vmem:[%s3929 + $0x24] sm:$0xe]
        %v5042 = vld [vmem:[%s3929 + $0x30] sm:$0xe]
        %v5043 = vld [vmem:[%s3929 + $0x3c] sm:$0xe]
        %v5044 = vld [vmem:[%s3929 + $0x48] sm:$0xe]
        %v5045 = vld [vmem:[%s3929 + $0x54] sm:$0xe]
        %v5046 = vld [vmem:[%s3929 + $0x60] sm:$0xe]
        %v5047 = vld [vmem:[%s3929 + $0x6c] sm:$0xe]
        %v5048 = vld [vmem:[%s3929 + $0x78] sm:$0xe]
        %v5049 = vld [vmem:[%s3929 + $0x84] sm:$0xe]
        %v5050 = vld [vmem:[%s3929 + $0x90] sm:$0xe]
        %v5051 = vld [vmem:[%s3929 + $0x9c] sm:$0xe]
        %v5052 = vld [vmem:[%s3929 + $0xa8] sm:$0xe]
        %v5053 = vld [vmem:[%s3929 + $0xb4] sm:$0xe]
        %v5102 = vrot.slane %v5038, 5
        %v5103 = vrot.slane %v5102, 4
        %v5104 = vrot.slane %v4301, 5
        %v5105 = vsel %vm1913, %v5103, %v5104
        %v5106 = vrot.slane %v5104, 4
        %v5107 = vrot.slane %v4302, 5
        %v5108 = vsel %vm1913, %v5106, %v5107
        %v5109 = vrot.slane %v5039, 5
        %v5110 = vrot.slane %v5109, 4
        %v5111 = vrot.slane %v4304, 5
        %v5112 = vsel %vm1913, %v5110, %v5111
        %v5113 = vrot.slane %v5111, 4
        %v5114 = vrot.slane %v4305, 5
        %v5115 = vsel %vm1913, %v5113, %v5114
        %v5116 = vrot.slane %v5040, 5
        %v5117 = vrot.slane %v5116, 4
        %v5118 = vrot.slane %v4307, 5
        %v5119 = vsel %vm1913, %v5117, %v5118
        %v5120 = vrot.slane %v5118, 4
        %v5121 = vrot.slane %v4308, 5
        %v5122 = vsel %vm1913, %v5120, %v5121
        %v5123 = vrot.slane %v5041, 5
        %v5124 = vrot.slane %v5123, 4
        %v5125 = vrot.slane %v4310, 5
        %v5126 = vsel %vm1913, %v5124, %v5125
        %v5127 = vrot.slane %v5125, 4
        %v5128 = vrot.slane %v4311, 5
        %v5129 = vsel %vm1913, %v5127, %v5128
        %v5130 = vrot.slane %v5042, 5
        %v5131 = vrot.slane %v5130, 4
        %v5132 = vrot.slane %v4313, 5
        %v5133 = vsel %vm1913, %v5131, %v5132
        %v5134 = vrot.slane %v5132, 4
        %v5135 = vrot.slane %v4314, 5
        %v5136 = vsel %vm1913, %v5134, %v5135
        %v5137 = vrot.slane %v5043, 5
        %v5138 = vrot.slane %v5137, 4
        %v5139 = vrot.slane %v4316, 5
        %v5140 = vsel %vm1913, %v5138, %v5139
        %v5141 = vrot.slane %v5139, 4
        %v5142 = vrot.slane %v4317, 5
        %v5143 = vsel %vm1913, %v5141, %v5142
        %v5144 = vrot.slane %v5044, 5
        %v5145 = vrot.slane %v5144, 4
        %v5146 = vrot.slane %v4319, 5
        %v5147 = vsel %vm1913, %v5145, %v5146
        %v5148 = vrot.slane %v5146, 4
        %v5149 = vrot.slane %v4320, 5
        %v5150 = vsel %vm1913, %v5148, %v5149
        %v5151 = vrot.slane %v5045, 5
        %v5152 = vrot.slane %v5151, 4
        %v5153 = vrot.slane %v4322, 5
        %v5154 = vsel %vm1913, %v5152, %v5153
        %v5155 = vrot.slane %v5153, 4
        %v5156 = vrot.slane %v4323, 5
        %v5157 = vsel %vm1913, %v5155, %v5156
        %v5158 = vrot.slane %v5046, 5
        %v5159 = vrot.slane %v5158, 4
        %v5160 = vrot.slane %v4325, 5
        %v5161 = vsel %vm1913, %v5159, %v5160
        %v5162 = vrot.slane %v5160, 4
        %v5163 = vrot.slane %v4326, 5
        %v5164 = vsel %vm1913, %v5162, %v5163
        %v5165 = vrot.slane %v5047, 5
        %v5166 = vrot.slane %v5165, 4
        %v5167 = vrot.slane %v4328, 5
        %v5168 = vsel %vm1913, %v5166, %v5167
        %v5169 = vrot.slane %v5167, 4
        %v5170 = vrot.slane %v4329, 5
        %v5171 = vsel %vm1913, %v5169, %v5170
        %v5172 = vrot.slane %v5048, 5
        %v5173 = vrot.slane %v5172, 4
        %v5174 = vrot.slane %v4331, 5
        %v5175 = vsel %vm1913, %v5173, %v5174
        %v5176 = vrot.slane %v5174, 4
        %v5177 = vrot.slane %v4332, 5
        %v5178 = vsel %vm1913, %v5176, %v5177
        %v5179 = vrot.slane %v5049, 5
        %v5180 = vrot.slane %v5179, 4
        %v5181 = vrot.slane %v4334, 5
        %v5182 = vsel %vm1913, %v5180, %v5181
        %v5183 = vrot.slane %v5181, 4
        %v5184 = vrot.slane %v4335, 5
        %v5185 = vsel %vm1913, %v5183, %v5184
        %v5186 = vrot.slane %v5050, 5
        %v5187 = vrot.slane %v5186, 4
        %v5188 = vrot.slane %v4337, 5
        %v5189 = vsel %vm1913, %v5187, %v5188
        %v5190 = vrot.slane %v5188, 4
        %v5191 = vrot.slane %v4338, 5
        %v5192 = vsel %vm1913, %v5190, %v5191
        %v5193 = vrot.slane %v5051, 5
        %v5194 = vrot.slane %v5193, 4
        %v5195 = vrot.slane %v4340, 5
        %v5196 = vsel %vm1913, %v5194, %v5195
        %v5197 = vrot.slane %v5195, 4
        %v5198 = vrot.slane %v4341, 5
        %v5199 = vsel %vm1913, %v5197, %v5198
        %v5200 = vrot.slane %v5052, 5
        %v5201 = vrot.slane %v5200, 4
        %v5202 = vrot.slane %v4343, 5
        %v5203 = vsel %vm1913, %v5201, %v5202
        %v5204 = vrot.slane %v5202, 4
        %v5205 = vrot.slane %v4344, 5
        %v5206 = vsel %vm1913, %v5204, %v5205
        %v5207 = vrot.slane %v5053, 5
        %v5208 = vrot.slane %v5207, 4
        %v5209 = vrot.slane %v4346, 5
        %v5210 = vsel %vm1913, %v5208, %v5209
        %v5211 = vrot.slane %v5209, 4
        %v5212 = vrot.slane %v4347, 5
        %v5213 = vsel %vm1913, %v5211, %v5212
        %s5214 = scalar_lea.vmem [#allocation6], 128
        %v5215 = vld [vmem:[%s5214] sm:$0xf]
        %v5216 = vld [vmem:[%s5214 + $0x4] sm:$0xf]
        %v5217 = vld [vmem:[%s5214 + $0x8] sm:$0xf]
        %v5218 = vld [vmem:[%s5214 + $0xc] sm:$0xf]
        %v5219 = vunpack.c.l.b16 %v5105
        %v5220 = vunpack.c.l.b16 %v5108
        %v5221 = vunpack.c.l.b16 %v5112
        %v5222 = vunpack.c.l.b16 %v5115
        %v5223 = vunpack.c.l.b16 %v5119
        %v5224 = vunpack.c.l.b16 %v5122
        %v5225 = vunpack.c.l.b16 %v5126
        %v5226 = vunpack.c.l.b16 %v5129
        %v5227 = vunpack.c.l.b16 %v5133
        %v5228 = vunpack.c.l.b16 %v5136
        %v5229 = vunpack.c.l.b16 %v5140
        %v5230 = vunpack.c.l.b16 %v5143
        %v5231 = vunpack.c.l.b16 %v5147
        %v5232 = vunpack.c.l.b16 %v5150
        %v5233 = vunpack.c.l.b16 %v5154
        %v5234 = vunpack.c.l.b16 %v5157
        %v5235 = vunpack.c.l.b16 %v5161
        %v5236 = vunpack.c.l.b16 %v5164
        %v5237 = vunpack.c.l.b16 %v5168
        %v5238 = vunpack.c.l.b16 %v5171
        %v5239 = vunpack.c.l.b16 %v5175
        %v5240 = vunpack.c.l.b16 %v5178
        %v5241 = vunpack.c.l.b16 %v5182
        %v5242 = vunpack.c.l.b16 %v5185
        %v5243 = vunpack.c.l.b16 %v5189
        %v5244 = vunpack.c.l.b16 %v5192
        %v5245 = vunpack.c.l.b16 %v5196
        %v5246 = vunpack.c.l.b16 %v5199
        %v5247 = vunpack.c.l.b16 %v5203
        %v5248 = vunpack.c.l.b16 %v5206
        %v5249 = vunpack.c.l.b16 %v5210
        %v5250 = vunpack.c.l.b16 %v5213
        %v5251 = vpack.c.b16 %v5220, %v5219
        %v5252 = vpack.c.b16 %v5222, %v5221
        %v5253 = vpack.c.b16 %v5224, %v5223
        %v5254 = vpack.c.b16 %v5226, %v5225
        %v5255 = vpack.c.b16 %v5228, %v5227
        %v5256 = vpack.c.b16 %v5230, %v5229
        %v5257 = vpack.c.b16 %v5232, %v5231
        %v5258 = vpack.c.b16 %v5234, %v5233
        %v5259 = vpack.c.b16 %v5236, %v5235
        %v5260 = vpack.c.b16 %v5238, %v5237
        %v5261 = vpack.c.b16 %v5240, %v5239
        %v5262 = vpack.c.b16 %v5242, %v5241
        %v5263 = vpack.c.b16 %v5244, %v5243
        %v5264 = vpack.c.b16 %v5246, %v5245
        %v5265 = vpack.c.b16 %v5248, %v5247
        %v5266 = vpack.c.b16 %v5250, %v5249
        %v5271 = vunpack.c.l.b16 %v5215
        %v5272 = vunpack.c.l.b16 %v5216
        %v5273 = vunpack.c.l.b16 %v5217
        %v5274 = vunpack.c.l.b16 %v5218
        %v5275 = vpack.c.b16 %v5272, %v5271
        %v5276 = vpack.c.b16 %v5274, %v5273
        %v5280 = vsel %vm1352, %v5251, 0
        %v5283 = vsel %vm1352, %v5252, 0
        %v5286 = vsel %vm1352, %v5253, 0
        %v5289 = vsel %vm1352, %v5254, 0
        %v5292 = vsel %vm1352, %v5255, 0
        %v5295 = vsel %vm1352, %v5256, 0
        %v5298 = vsel %vm1352, %v5257, 0
        %v5301 = vsel %vm1352, %v5258, 0
        %v5304 = vsel %vm1352, %v5259, 0
        %v5307 = vsel %vm1352, %v5260, 0
        %v5310 = vsel %vm1352, %v5261, 0
        %v5313 = vsel %vm1352, %v5262, 0
        %v5316 = vsel %vm1352, %v5263, 0
        %v5319 = vsel %vm1352, %v5264, 0
        %v5322 = vsel %vm1352, %v5265, 0
        %v5325 = vsel %vm1352, %v5266, 0
        %5327 = vmatprep.subr.bf16.mxu0 0
        %5328 = vmatpush1.bf16.msra.mxu0 0
        %5329 = vmatprep.subr.bf16.mxu0 0
        %5330 = vmatpush1.bf16.msra.mxu0 0
        %5331 = vmatprep.subr.bf16.mxu0 0
        %5332 = vmatpush1.bf16.msra.mxu0 0
        %5333 = vmatprep.subr.bf16.mxu0 0
        %5334 = vmatpush1.bf16.msra.mxu0 0
        %5335 = vmatprep.subr.bf16.mxu0 0
        %5336 = vmatpush1.bf16.msra.mxu0 0
        %5337 = vmatprep.subr.bf16.mxu0 0
        %5338 = vmatpush1.bf16.msra.mxu0 0
        %5339 = vmatprep.subr.bf16.mxu0 0
        %5340 = vmatpush1.bf16.msra.mxu0 %v5276
        %5341 = vmatprep.subr.bf16.mxu0 0
        %5342 = vmatpush1.bf16.msra.mxu0 %v5275
        %5343 = vmatprep.subr.bf16.mxu0 0
        %5344 = vmatpush2.bf16.msra.mxu0 0
        %5345 = vmatprep.subr.bf16.mxu0 0
        %5346 = vmatpush2.bf16.msra.mxu0 0
        %5347 = vmatprep.subr.bf16.mxu0 0
        %5348 = vmatpush2.bf16.msra.mxu0 0
        %5349 = vmatprep.subr.bf16.mxu0 0
        %5350 = vmatpush2.bf16.msra.mxu0 0
        %5351 = vmatprep.subr.bf16.mxu0 0
        %5352 = vmatpush2.bf16.msra.mxu0 0
        %5353 = vmatprep.subr.bf16.mxu0 0
        %5354 = vmatpush2.bf16.msra.mxu0 0
        %5355 = vmatprep.subr.bf16.mxu0 0
        %5356 = vmatpush2.bf16.msra.mxu0 0
        %5357 = vmatprep.subr.bf16.mxu0 0
        %5358 = vmatpush2.bf16.msra.mxu0 0
        %5359 = vmatprep.mubr.bf16.mxu0 0
        %5360 = vmatmul.mubr.bf16.gmra.mxu0 %v5280
        %v5361 = vpop.f32.mrf.mxu0
        %v5362 = vadd.f32 0.0, %v5361
        %v5363 = vpop.f32.mrf.mxu0
        %v5364 = vpop.f32.mrf.mxu0
        %v5365 = vadd.f32 0.0, %v5364
        %v5366 = vpop.f32.mrf.mxu0
        %5367 = vmatprep.mubr.bf16.mxu0 0
        %5368 = vmatmul.mubr.bf16.gmra.mxu0 %v5283
        %v5369 = vpop.f32.mrf.mxu0
        %v5370 = vadd.f32 0.0, %v5369
        %v5371 = vpop.f32.mrf.mxu0
        %v5372 = vpop.f32.mrf.mxu0
        %v5373 = vadd.f32 0.0, %v5372
        %v5374 = vpop.f32.mrf.mxu0
        %5375 = vmatprep.mubr.bf16.mxu0 0
        %5376 = vmatmul.mubr.bf16.gmra.mxu0 %v5286
        %v5377 = vpop.f32.mrf.mxu0
        %v5378 = vadd.f32 0.0, %v5377
        %v5379 = vpop.f32.mrf.mxu0
        %v5380 = vpop.f32.mrf.mxu0
        %v5381 = vadd.f32 0.0, %v5380
        %v5382 = vpop.f32.mrf.mxu0
        %5383 = vmatprep.mubr.bf16.mxu0 0
        %5384 = vmatmul.mubr.bf16.gmra.mxu0 %v5289
        %v5385 = vpop.f32.mrf.mxu0
        %v5386 = vadd.f32 0.0, %v5385
        %v5387 = vpop.f32.mrf.mxu0
        %v5388 = vpop.f32.mrf.mxu0
        %v5389 = vadd.f32 0.0, %v5388
        %v5390 = vpop.f32.mrf.mxu0
        %5391 = vmatprep.mubr.bf16.mxu0 0
        %5392 = vmatmul.mubr.bf16.gmra.mxu0 %v5292
        %v5393 = vpop.f32.mrf.mxu0
        %v5394 = vadd.f32 0.0, %v5393
        %v5395 = vpop.f32.mrf.mxu0
        %v5396 = vpop.f32.mrf.mxu0
        %v5397 = vadd.f32 0.0, %v5396
        %v5398 = vpop.f32.mrf.mxu0
        %5399 = vmatprep.mubr.bf16.mxu0 0
        %5400 = vmatmul.mubr.bf16.gmra.mxu0 %v5295
        %v5401 = vpop.f32.mrf.mxu0
        %v5402 = vadd.f32 0.0, %v5401
        %v5403 = vpop.f32.mrf.mxu0
        %v5404 = vpop.f32.mrf.mxu0
        %v5405 = vadd.f32 0.0, %v5404
        %v5406 = vpop.f32.mrf.mxu0
        %5407 = vmatprep.mubr.bf16.mxu0 0
        %5408 = vmatmul.mubr.bf16.gmra.mxu0 %v5298
        %v5409 = vpop.f32.mrf.mxu0
        %v5410 = vadd.f32 0.0, %v5409
        %v5411 = vpop.f32.mrf.mxu0
        %v5412 = vpop.f32.mrf.mxu0
        %v5413 = vadd.f32 0.0, %v5412
        %v5414 = vpop.f32.mrf.mxu0
        %5415 = vmatprep.mubr.bf16.mxu0 0
        %5416 = vmatmul.mubr.bf16.gmra.mxu0 %v5301
        %v5417 = vpop.f32.mrf.mxu0
        %v5418 = vadd.f32 0.0, %v5417
        %v5419 = vpop.f32.mrf.mxu0
        %v5420 = vpop.f32.mrf.mxu0
        %v5421 = vadd.f32 0.0, %v5420
        %v5422 = vpop.f32.mrf.mxu0
        %5423 = vmatprep.mubr.bf16.mxu0 0
        %5424 = vmatmul.mubr.bf16.gmra.mxu0 %v5304
        %v5425 = vpop.f32.mrf.mxu0
        %v5426 = vadd.f32 0.0, %v5425
        %v5427 = vpop.f32.mrf.mxu0
        %v5428 = vpop.f32.mrf.mxu0
        %v5429 = vadd.f32 0.0, %v5428
        %v5430 = vpop.f32.mrf.mxu0
        %5431 = vmatprep.mubr.bf16.mxu0 0
        %5432 = vmatmul.mubr.bf16.gmra.mxu0 %v5307
        %v5433 = vpop.f32.mrf.mxu0
        %v5434 = vadd.f32 0.0, %v5433
        %v5435 = vpop.f32.mrf.mxu0
        %v5436 = vpop.f32.mrf.mxu0
        %v5437 = vadd.f32 0.0, %v5436
        %v5438 = vpop.f32.mrf.mxu0
        %5439 = vmatprep.mubr.bf16.mxu0 0
        %5440 = vmatmul.mubr.bf16.gmra.mxu0 %v5310
        %v5441 = vpop.f32.mrf.mxu0
        %v5442 = vadd.f32 0.0, %v5441
        %v5443 = vpop.f32.mrf.mxu0
        %v5444 = vpop.f32.mrf.mxu0
        %v5445 = vadd.f32 0.0, %v5444
        %v5446 = vpop.f32.mrf.mxu0
        %5447 = vmatprep.mubr.bf16.mxu0 0
        %5448 = vmatmul.mubr.bf16.gmra.mxu0 %v5313
        %v5449 = vpop.f32.mrf.mxu0
        %v5450 = vadd.f32 0.0, %v5449
        %v5451 = vpop.f32.mrf.mxu0
        %v5452 = vpop.f32.mrf.mxu0
        %v5453 = vadd.f32 0.0, %v5452
        %v5454 = vpop.f32.mrf.mxu0
        %5455 = vmatprep.mubr.bf16.mxu0 0
        %5456 = vmatmul.mubr.bf16.gmra.mxu0 %v5316
        %v5457 = vpop.f32.mrf.mxu0
        %v5458 = vadd.f32 0.0, %v5457
        %v5459 = vpop.f32.mrf.mxu0
        %v5460 = vpop.f32.mrf.mxu0
        %v5461 = vadd.f32 0.0, %v5460
        %v5462 = vpop.f32.mrf.mxu0
        %5463 = vmatprep.mubr.bf16.mxu0 0
        %5464 = vmatmul.mubr.bf16.gmra.mxu0 %v5319
        %v5465 = vpop.f32.mrf.mxu0
        %v5466 = vadd.f32 0.0, %v5465
        %v5467 = vpop.f32.mrf.mxu0
        %v5468 = vpop.f32.mrf.mxu0
        %v5469 = vadd.f32 0.0, %v5468
        %v5470 = vpop.f32.mrf.mxu0
        %5471 = vmatprep.mubr.bf16.mxu0 0
        %5472 = vmatmul.mubr.bf16.gmra.mxu0 %v5322
        %v5473 = vpop.f32.mrf.mxu0
        %v5474 = vadd.f32 0.0, %v5473
        %v5475 = vpop.f32.mrf.mxu0
        %v5476 = vpop.f32.mrf.mxu0
        %v5477 = vadd.f32 0.0, %v5476
        %v5478 = vpop.f32.mrf.mxu0
        %5479 = vmatprep.mubr.bf16.mxu0 0
        %5480 = vmatmul.mubr.bf16.gmra.mxu0 %v5325
        %v5481 = vpop.f32.mrf.mxu0
        %v5482 = vadd.f32 0.0, %v5481
        %v5483 = vpop.f32.mrf.mxu0
        %v5484 = vpop.f32.mrf.mxu0
        %v5485 = vadd.f32 0.0, %v5484
        %v5486 = vpop.f32.mrf.mxu0
        %5487 = vdwg.mxu0
        %v5488 = vadd.f32 %v5006, %v5362
        %v5489 = vadd.f32 %v5007, %v5365
        %v5490 = vadd.f32 %v5008, %v5370
        %v5491 = vadd.f32 %v5009, %v5373
        %v5492 = vadd.f32 %v5010, %v5378
        %v5493 = vadd.f32 %v5011, %v5381
        %v5494 = vadd.f32 %v5012, %v5386
        %v5495 = vadd.f32 %v5013, %v5389
        %v5496 = vadd.f32 %v5014, %v5394
        %v5497 = vadd.f32 %v5015, %v5397
        %v5498 = vadd.f32 %v5016, %v5402
        %v5499 = vadd.f32 %v5017, %v5405
        %v5500 = vadd.f32 %v5018, %v5410
        %v5501 = vadd.f32 %v5019, %v5413
        %v5502 = vadd.f32 %v5020, %v5418
        %v5503 = vadd.f32 %v5021, %v5421
        %v5504 = vadd.f32 %v5022, %v5426
        %v5505 = vadd.f32 %v5023, %v5429
        %v5506 = vadd.f32 %v5024, %v5434
        %v5507 = vadd.f32 %v5025, %v5437
        %v5508 = vadd.f32 %v5026, %v5442
        %v5509 = vadd.f32 %v5027, %v5445
        %v5510 = vadd.f32 %v5028, %v5450
        %v5511 = vadd.f32 %v5029, %v5453
        %v5512 = vadd.f32 %v5030, %v5458
        %v5513 = vadd.f32 %v5031, %v5461
        %v5514 = vadd.f32 %v5032, %v5466
        %v5515 = vadd.f32 %v5033, %v5469
        %v5516 = vadd.f32 %v5034, %v5474
        %v5517 = vadd.f32 %v5035, %v5477
        %v5518 = vadd.f32 %v5036, %v5482
        %v5519 = vadd.f32 %v5037, %v5485
        %v5520 = vld [vmem:[%s2] sm:$0x1]
        %v5522 = vlaneseq
        %v5523 = vshrl.u32 %v5522, 7
        %v5524 = vsub.s32 0, %v5523
        %v5525 = vrot.slane %v5520, %v5524
        %v5527 = vadd.f32 %v5488, %v5525
        %v5528 = vadd.f32 %v5489, %v5525
        %v5529 = vadd.f32 %v5490, %v5525
        %v5530 = vadd.f32 %v5491, %v5525
        %v5531 = vadd.f32 %v5492, %v5525
        %v5532 = vadd.f32 %v5493, %v5525
        %v5533 = vadd.f32 %v5494, %v5525
        %v5534 = vadd.f32 %v5495, %v5525
        %v5535 = vadd.f32 %v5496, %v5525
        %v5536 = vadd.f32 %v5497, %v5525
        %v5537 = vadd.f32 %v5498, %v5525
        %v5538 = vadd.f32 %v5499, %v5525
        %v5539 = vadd.f32 %v5500, %v5525
        %v5540 = vadd.f32 %v5501, %v5525
        %v5541 = vadd.f32 %v5502, %v5525
        %v5542 = vadd.f32 %v5503, %v5525
        %v5543 = vadd.f32 %v5504, %v5525
        %v5544 = vadd.f32 %v5505, %v5525
        %v5545 = vadd.f32 %v5506, %v5525
        %v5546 = vadd.f32 %v5507, %v5525
        %v5547 = vadd.f32 %v5508, %v5525
        %v5548 = vadd.f32 %v5509, %v5525
        %v5549 = vadd.f32 %v5510, %v5525
        %v5550 = vadd.f32 %v5511, %v5525
        %v5551 = vadd.f32 %v5512, %v5525
        %v5552 = vadd.f32 %v5513, %v5525
        %v5553 = vadd.f32 %v5514, %v5525
        %v5554 = vadd.f32 %v5515, %v5525
        %v5555 = vadd.f32 %v5516, %v5525
        %v5556 = vadd.f32 %v5517, %v5525
        %v5557 = vadd.f32 %v5518, %v5525
        %v5558 = vadd.f32 %v5519, %v5525
        %5559 = vxpose.xlu0.b32.start [1/16] %v5527, 128
        %5560 = vxpose.xlu0.b32.cont [2/16] %v5528, 128
        %5561 = vxpose.xlu0.b32.cont [3/16] %v5529, 128
        %5562 = vxpose.xlu0.b32.cont [4/16] %v5530, 128
        %5563 = vxpose.xlu0.b32.cont [5/16] %v5531, 128
        %5564 = vxpose.xlu0.b32.cont [6/16] %v5532, 128
        %5565 = vxpose.xlu0.b32.cont [7/16] %v5533, 128
        %5566 = vxpose.xlu0.b32.cont [8/16] %v5534, 128
        %5567 = vxpose.xlu0.b32.cont [9/16] %v5535, 128
        %5568 = vxpose.xlu0.b32.cont [10/16] %v5536, 128
        %5569 = vxpose.xlu0.b32.cont [11/16] %v5537, 128
        %5570 = vxpose.xlu0.b32.cont [12/16] %v5538, 128
        %5571 = vxpose.xlu0.b32.cont [13/16] %v5539, 128
        %5572 = vxpose.xlu0.b32.cont [14/16] %v5540, 128
        %5573 = vxpose.xlu0.b32.cont [15/16] %v5541, 128
        %5574 = vxpose.xlu0.b32.end [16/16] %v5542, 128
        %v5575 = vpop.trf.xlu0
        %v5576 = vpop.trf.xlu0
        %v5577 = vpop.trf.xlu0
        %v5578 = vpop.trf.xlu0
        %v5579 = vpop.trf.xlu0
        %v5580 = vpop.trf.xlu0
        %v5581 = vpop.trf.xlu0
        %v5582 = vpop.trf.xlu0
        %v5583 = vpop.trf.xlu0
        %v5584 = vpop.trf.xlu0
        %v5585 = vpop.trf.xlu0
        %v5586 = vpop.trf.xlu0
        %v5587 = vpop.trf.xlu0
        %v5588 = vpop.trf.xlu0
        %v5589 = vpop.trf.xlu0
        %v5590 = vpop.trf.xlu0
        %5591 = vxpose.xlu0.b32.start [1/16] %v5543, 128
        %5592 = vxpose.xlu0.b32.cont [2/16] %v5544, 128
        %5593 = vxpose.xlu0.b32.cont [3/16] %v5545, 128
        %5594 = vxpose.xlu0.b32.cont [4/16] %v5546, 128
        %5595 = vxpose.xlu0.b32.cont [5/16] %v5547, 128
        %5596 = vxpose.xlu0.b32.cont [6/16] %v5548, 128
        %5597 = vxpose.xlu0.b32.cont [7/16] %v5549, 128
        %5598 = vxpose.xlu0.b32.cont [8/16] %v5550, 128
        %5599 = vxpose.xlu0.b32.cont [9/16] %v5551, 128
        %5600 = vxpose.xlu0.b32.cont [10/16] %v5552, 128
        %5601 = vxpose.xlu0.b32.cont [11/16] %v5553, 128
        %5602 = vxpose.xlu0.b32.cont [12/16] %v5554, 128
        %5603 = vxpose.xlu0.b32.cont [13/16] %v5555, 128
        %5604 = vxpose.xlu0.b32.cont [14/16] %v5556, 128
        %5605 = vxpose.xlu0.b32.cont [15/16] %v5557, 128
        %5606 = vxpose.xlu0.b32.end [16/16] %v5558, 128
        %v5607 = vpop.trf.xlu0
        %v5608 = vpop.trf.xlu0
        %v5609 = vpop.trf.xlu0
        %v5610 = vpop.trf.xlu0
        %v5611 = vpop.trf.xlu0
        %v5612 = vpop.trf.xlu0
        %v5613 = vpop.trf.xlu0
        %v5614 = vpop.trf.xlu0
        %v5615 = vpop.trf.xlu0
        %v5616 = vpop.trf.xlu0
        %v5617 = vpop.trf.xlu0
        %v5618 = vpop.trf.xlu0
        %v5619 = vpop.trf.xlu0
        %v5620 = vpop.trf.xlu0
        %v5621 = vpop.trf.xlu0
        %v5622 = vpop.trf.xlu0
        %5623 = vst [vmem:[%s250] sm:$0xff] %v5575
        %5624 = vst [vmem:[%s250 + $0x8] sm:$0xff] %v5607
        %5625 = vst [vmem:[%s257] sm:$0xff] %v5576
        %5626 = vst [vmem:[%s257 + $0x8] sm:$0xff] %v5608
        %5627 = vst [vmem:[%s257 + $0x10] sm:$0xff] %v5577
        %5628 = vst [vmem:[%s257 + $0x18] sm:$0xff] %v5609
        %s5629 = sand.u32 %s116, 1
        %s5630 = scalar_lea.sflag [#allocation5], %s5629
        %s5631 = sand.u32 %s116, 1
        %s5632 = smul.addr %s5631, 16
        %s5633 = scalar_lea.vmem [#allocation8], %s5632
        %s5634 = sand.u32 %s144, 1
        %s5635 = scalar_lea.sflag [#allocation10], %s5634
        %s5636 = sand.u32 %s144, 1
        %s5637 = smul.addr %s5636, 32
        %s5638 = scalar_lea.vmem [#allocation9], %s5637
        // Predicated region
        $region45: #{tpu_custom_call.1} parent=31 // pred_check
          %p5639 = pneg %p126
        $region46: #{tpu_custom_call.1} parent=31 // pred_check_branch
          %5641 = sbr.rel (%p5639) target = $region48
        $region47: #{tpu_custom_call.1} parent=31 // pred_region
          %s5642 = smul.u32 2, %s31
          %s5644 = ssub.s32 256, 256
          %5645 = vsyncadd %s5630, %s5644
          %s5646 = smul.addr %s30, 2
          %s5647 = sadd.s32 %s5642, %s5646
          %s5648 = smul.addr %s5647, 128
          %s5649 = scalar_lea.hbm %s3, %s5648
          %s5651 = sshll.u32 %s5633, 4
          %s5652 = int_to_ptr.vmem [resolvable:$true] %s5651
          %5654 = dma.vmem_to_hbm [thread:$0]  %s5652, 256, %s5649, %s5630
        $region48: #{tpu_custom_call.1} parent=31 // pred_fallthru
          _
        // Predicated region
        $region49: #{tpu_custom_call.1} parent=31 // pred_check
          %p5655 = pneg %p154
        $region50: #{tpu_custom_call.1} parent=31 // pred_check_branch
          %5657 = sbr.rel (%p5655) target = $region52
        $region51: #{tpu_custom_call.1} parent=31 // pred_region
          %s5658 = smul.u32 2, %s31
          %s5660 = ssub.s32 512, 512
          %5661 = vsyncadd %s5635, %s5660
          %s5662 = smul.addr %s30, 4
          %s5663 = sadd.s32 %s5658, %s5662
          %s5664 = smul.addr %s5663, 128
          %s5665 = scalar_lea.hbm %s4, %s5664
          %s5666 = sshll.u32 %s5638, 4
          %s5667 = int_to_ptr.vmem [resolvable:$true] %s5666
          %5672 = dma.vmem_to_hbm [thread:$0]  %s5667, 512, %s5665, %s5635, 256, 256, 16
        $region52: #{tpu_custom_call.1} parent=31 // pred_fallthru
          _
      $region32: #{tpu_custom_call.1} parent=5 // pred_fallthru
        _
      %p5673 = scmp.le.s32.totalorder 2, %s21
      // Predicated region
      $region53: #{tpu_custom_call.1} parent=5 // pred_check
        %p5674 = pneg %p5673
      $region54: #{tpu_custom_call.1} parent=5 // pred_check_branch
        %5676 = sbr.rel (%p5674) target = $region56
      $region55: #{tpu_custom_call.1} parent=5 // pred_region
        %s5677 = ssub.s32 %s21, 2
        // Predicated region
        $region57: #{tpu_custom_call.1} parent=55 // pred_check
          %p5678 = pneg %p132
        $region58: #{tpu_custom_call.1} parent=55 // pred_check_branch
          %5680 = sbr.rel (%p5678) target = $region60
        $region59: #{tpu_custom_call.1} parent=55 // pred_region
          %s5681 = sand.u32 %s117, 1
          %s5682 = scalar_lea.sflag [#allocation5], %s5681
          %s5683 = sand.u32 %s117, 1
          %s5684 = smul.addr %s5683, 16
          %s5685 = scalar_lea.vmem [#allocation8], %s5684
          %5686 = dma.done %s5682, 256
        $region60: #{tpu_custom_call.1} parent=55 // pred_fallthru
          _
        // Predicated region
        $region61: #{tpu_custom_call.1} parent=55 // pred_check
          %p5687 = pneg %p160
        $region62: #{tpu_custom_call.1} parent=55 // pred_check_branch
          %5689 = sbr.rel (%p5687) target = $region64
        $region63: #{tpu_custom_call.1} parent=55 // pred_region
          %s5690 = sand.u32 %s145, 1
          %s5691 = scalar_lea.sflag [#allocation10], %s5690
          %s5692 = sand.u32 %s145, 1
          %s5693 = smul.addr %s5692, 32
          %s5694 = scalar_lea.vmem [#allocation9], %s5693
          %5695 = dma.done %s5691, 512
        $region64: #{tpu_custom_call.1} parent=55 // pred_fallthru
          _
      $region56: #{tpu_custom_call.1} parent=5 // pred_fallthru
        _
    $region6: #{tpu_custom_call.1} parent=1 // loop_footer
      %s25 = sadd.s32 1, %s21
    $region7: #{tpu_custom_call.1} parent=1 // loop_footer_branch
      %20 = sbr.rel target = $region3
    $region8: #{tpu_custom_call.1} parent=1 // loop_exit
      _
    %5696 = vsyncpa [#allocation4], 1
    %s5697 = scalar_lea.sflag [#allocation4], 1
    %5698 = vsyncpa %s5697, 1
    %5699 = vsyncpa [#allocation7], 1
    %5700 = vsyncpa [#allocation5], 1
    %s5701 = scalar_lea.sflag [#allocation5], 1
    %5702 = vsyncpa %s5701, 1
    %5703 = vsyncpa [#allocation10], 1
    %s5704 = scalar_lea.sflag [#allocation10], 1
    %5705 = vsyncpa %s5704, 1

</llo_original>
